<compile_context>
chip_gen: v7x
topology: tpu7x:2x2x1
jax: 0.10.0
libtpu: 0.0.40
codegen_flags: <defaults>
</compile_context>

<pallas_src>
import jax
import jax.numpy as jnp
from jax.experimental import pallas as pl
from jax.experimental.pallas import tpu as pltpu


def _round_up(n, m):
    return ((n + m - 1) // m) * m


# --------------------------------------------------------------------------
# Fused kernel factory (one time-chunk x one batch-block per grid step)
# --------------------------------------------------------------------------
def _make_expert_gru_kernel(TCHUNK, B_BLK, U_pad, F_pad, n_layers, unroll):
    G = 3 * U_pad

    def kernel(*refs):
        # refs = (x, [wih, whh, bhh_comb, bihn] * n_layers, hw, hb,
        #         out, h_state, act_buf, gx_buf)
        x_ref = refs[0]
        pos = 1
        layer_refs = []
        for _ in range(n_layers):
            layer_refs.append(refs[pos:pos + 4])
            pos += 4
        hw_ref = refs[pos]
        hb_ref = refs[pos + 1]
        out_ref = refs[pos + 2]
        h_state = refs[pos + 3]   # (n_layers, B_BLK, U_pad) f32 (carried across chunks)
        act_buf = refs[pos + 4]   # (TCHUNK*B_BLK, U_pad)    bf16 (chunk activations)
        gx_buf = refs[pos + 5]    # (TCHUNK*B_BLK, 3*U_pad)  f32  (hoisted projection)

        t_chunk = pl.program_id(1)

        # Reset the carried hidden state at the first time chunk of this batch block.
        @pl.when(t_chunk == 0)
        def _():
            h_state[...] = jnp.zeros_like(h_state)

        for layer_idx, (wih_ref, whh_ref, bhh_ref, bihn_ref) in enumerate(layer_refs):
            is_last = layer_idx == n_layers - 1

            if layer_idx == 0:
                src = x_ref[...].reshape(TCHUNK * B_BLK, F_pad)   # bf16, lane-dense
            else:
                src = act_buf[...]                                 # bf16

            # Hoisted input projection for the whole chunk: one big MXU dot.
            # (b_ih for r/z is folded into bhh_comb; b_ih_n is added per step.)
            gx_buf[...] = jnp.dot(src, wih_ref[...],
                                  preferred_element_type=jnp.float32)

            whh = whh_ref[...]    # (U_pad, 3*U_pad) bf16
            bhh = bhh_ref[...]    # (1, 3*U_pad)     f32  (b_hh with b_ih_r/z folded in)
            bihn = bihn_ref[...]  # (1, U_pad)       f32  (b_ih for the n gate)

            def step(t, h, _whh=whh, _bhh=bhh, _bihn=bihn, _is_last=is_last):
                row = pl.multiple_of(t * B_BLK, B_BLK)        # sublane-aligned
                gx = gx_buf[pl.ds(row, B_BLK), :]             # (B_BLK, 3*U_pad) f32
                gh = jnp.dot(h.astype(jnp.bfloat16), _whh,
                             preferred_element_type=jnp.float32) + _bhh
                # 128-lane-aligned gate slices (U_pad is a multiple of 128).
                r = jax.nn.sigmoid(gx[:, 0:U_pad] + gh[:, 0:U_pad])
                z = jax.nn.sigmoid(gx[:, U_pad:2 * U_pad] + gh[:, U_pad:2 * U_pad])
                n = jnp.tanh(gx[:, 2 * U_pad:G] + _bihn + r * gh[:, 2 * U_pad:G])
                h_new = (1.0 - z) * n + z * h
                # Fused epilogue tanh on the last layer (EUP otherwise idle here).
                stored = jnp.tanh(h_new) if _is_last else h_new
                act_buf[pl.ds(row, B_BLK), :] = stored.astype(jnp.bfloat16)
                return h_new

            h0 = h_state[layer_idx]                           # f32 carry
            h_fin = jax.lax.fori_loop(0, TCHUNK, step, h0, unroll=unroll)
            h_state[layer_idx] = h_fin

        # Final Linear over the (already tanh'd) chunk activations.
        pred = (jnp.dot(act_buf[...], hw_ref[...],
                        preferred_element_type=jnp.float32)
                + hb_ref[...])
        out_ref[...] = pred.reshape(TCHUNK, B_BLK, U_pad)

    return kernel


# --------------------------------------------------------------------------
# Parameter preparation (done once): pad + transpose + bf16-cast + bias fold
# --------------------------------------------------------------------------
def prepare_params(params, num_features):
    units = params["hidden_w"].shape[0]
    U_pad = _round_up(units, 128)
    F_pad = _round_up(num_features, 128)
    G = 3 * U_pad

    layers = []
    for i, layer in enumerate(params["gru_layers"]):
        d_in = num_features if i == 0 else units
        d_in_pad = F_pad if i == 0 else U_pad
        wih_t = jnp.zeros((d_in_pad, G), jnp.float32)
        whh_t = jnp.zeros((U_pad, G), jnp.float32)
        bhh_c = jnp.zeros((1, G), jnp.float32)
        bihn = jnp.zeros((1, U_pad), jnp.float32)
        w_ih = layer["w_ih"]   # (3U, d_in), gate order r|z|n
        w_hh = layer["w_hh"]   # (3U, U)
        b_ih = layer["b_ih"]
        b_hh = layer["b_hh"]
        for g in range(3):
            wih_t = wih_t.at[:d_in, g * U_pad:g * U_pad + units].set(
                w_ih[g * units:(g + 1) * units, :].T)
            whh_t = whh_t.at[:units, g * U_pad:g * U_pad + units].set(
                w_hh[g * units:(g + 1) * units, :].T)
            if g < 2:
                # Fold b_ih (r, z gates) into the per-step hidden bias.
                bhh_c = bhh_c.at[0, g * U_pad:g * U_pad + units].set(
                    b_hh[g * units:(g + 1) * units] + b_ih[g * units:(g + 1) * units])
            else:
                bhh_c = bhh_c.at[0, g * U_pad:g * U_pad + units].set(
                    b_hh[g * units:(g + 1) * units])
                bihn = bihn.at[0, :units].set(b_ih[g * units:(g + 1) * units])
        layers.append((wih_t.astype(jnp.bfloat16),
                       whh_t.astype(jnp.bfloat16), bhh_c, bihn))

    hw = jnp.zeros((U_pad, U_pad), jnp.float32)
    hw = hw.at[:units, :units].set(params["hidden_w"].T)
    hb = jnp.zeros((1, U_pad), jnp.float32)
    hb = hb.at[0, :units].set(params["hidden_b"])

    return {
        "layers": layers,
        "hidden_w": hw.astype(jnp.bfloat16),
        "hidden_b": hb,
        "units": units,
        "num_features": num_features,
        "U_pad": U_pad,
        "F_pad": F_pad,
    }


# --------------------------------------------------------------------------
# VMEM footprint estimate (blocks double-buffered + weights + scratch)
# --------------------------------------------------------------------------
def _estimate_vmem_bytes(TCHUNK, B_BLK, U_pad, F_pad, n_layers):
    G = 3 * U_pad
    rows = TCHUNK * B_BLK
    x_blk = rows * F_pad * 2 * 2          # bf16 input block, double buffered
    o_blk = rows * U_pad * 4 * 2          # f32 output block, double buffered
    w = 0
    for i in range(n_layers):
        d_in = F_pad if i == 0 else U_pad
        w += (d_in * G + U_pad * G) * 2 + (G + U_pad) * 4
    w += U_pad * U_pad * 2 + U_pad * 4
    w *= 2                                 # conservative: possible double buffers
    scratch = (n_layers * B_BLK * U_pad * 4
               + rows * U_pad * 2
               + rows * G * 4)
    return x_blk + o_blk + w + scratch


# --------------------------------------------------------------------------
# Wrapper
# --------------------------------------------------------------------------
def expert_gru_forward(x, prepared, *, t_chunk=32, b_block=16):
    """x: (B, T, num_features) batch_first (PyTorch convention)."""
    B, T, F = x.shape
    units = prepared["units"]
    U_pad = prepared["U_pad"]
    F_pad = prepared["F_pad"]
    n_layers = len(prepared["layers"])

    assert b_block % 16 == 0, "batch block must be a multiple of 16 (bf16 packing)"
    B_BLK = b_block
    B_pad = _round_up(max(B, B_BLK), B_BLK)
    TCHUNK = min(t_chunk, T)
    T_pad = _round_up(T, TCHUNK)

    # Time-major, padded, bf16 (halves the streamed-input DMA): (T_pad, B_pad, F_pad).
    xt = jnp.transpose(x, (1, 0, 2)).astype(jnp.float32)
    xt = jnp.pad(xt, ((0, T_pad - T), (0, B_pad - B), (0, F_pad - F)))
    xt = xt.astype(jnp.bfloat16)

    # Unroll sized by batch block (avoid vreg spills for large B_BLK).
    unroll = min(TCHUNK, 8) if B_BLK <= 16 else min(TCHUNK, 2)

    kernel = _make_expert_gru_kernel(TCHUNK, B_BLK, U_pad, F_pad, n_layers, unroll)

    args = [xt]
    in_specs = [pl.BlockSpec((TCHUNK, B_BLK, F_pad), lambda b, t: (t, b, 0))]
    for (wih, whh, bhh, bihn) in prepared["layers"]:
        args += [wih, whh, bhh, bihn]
        in_specs += [
            pl.BlockSpec(wih.shape, lambda b, t: (0, 0)),
            pl.BlockSpec(whh.shape, lambda b, t: (0, 0)),
            pl.BlockSpec(bhh.shape, lambda b, t: (0, 0)),
            pl.BlockSpec(bihn.shape, lambda b, t: (0, 0)),
        ]
    args += [prepared["hidden_w"], prepared["hidden_b"]]
    in_specs += [
        pl.BlockSpec(prepared["hidden_w"].shape, lambda b, t: (0, 0)),
        pl.BlockSpec(prepared["hidden_b"].shape, lambda b, t: (0, 0)),
    ]

    grid = (B_pad // B_BLK, T_pad // TCHUNK)

    est = _estimate_vmem_bytes(TCHUNK, B_BLK, U_pad, F_pad, n_layers)
    vmem_limit = int(min(64 * 1024 * 1024, max(est + (8 << 20), 32 * 1024 * 1024)))

    out = pl.pallas_call(
        kernel,
        grid=grid,
        out_shape=jax.ShapeDtypeStruct((T_pad, B_pad, U_pad), jnp.float32),
        in_specs=in_specs,
        out_specs=pl.BlockSpec((TCHUNK, B_BLK, U_pad), lambda b, t: (t, b, 0)),
        scratch_shapes=[
            pltpu.VMEM((n_layers, B_BLK, U_pad), jnp.float32),      # carried h
            pltpu.VMEM((TCHUNK * B_BLK, U_pad), jnp.bfloat16),      # chunk activations
            pltpu.VMEM((TCHUNK * B_BLK, 3 * U_pad), jnp.float32),   # hoisted projection
        ],
        compiler_params=pltpu.CompilerParams(
            dimension_semantics=("parallel", "arbitrary"),
            vmem_limit_bytes=vmem_limit,
        ),
    )(*args)

    out = out[:T, :B, :units]
    return jnp.transpose(out, (1, 0, 2))   # (B, T, units) batch_first


# --------------------------------------------------------------------------
# Pure-JAX f32 reference (for a loose numerical sanity check)
# --------------------------------------------------------------------------
def expert_gru_reference(x, params):
    h_seq = jnp.transpose(x, (1, 0, 2)).astype(jnp.float32)  # (T, B, F)
    B = x.shape[0]
    for layer in params["gru_layers"]:
        U = layer["w_hh"].shape[1]
        wih, whh = layer["w_ih"], layer["w_hh"]
        bih, bhh = layer["b_ih"], layer["b_hh"]

        def step(h, x_t, wih=wih, whh=whh, bih=bih, bhh=bhh, U=U):
            gx = x_t @ wih.T + bih
            gh = h @ whh.T + bhh
            r = jax.nn.sigmoid(gx[:, :U] + gh[:, :U])
            z = jax.nn.sigmoid(gx[:, U:2 * U] + gh[:, U:2 * U])
            n = jnp.tanh(gx[:, 2 * U:] + r * gh[:, 2 * U:])
            h_new = (1.0 - z) * n + z * h
            return h_new, h_new

        h0 = jnp.zeros((B, U), jnp.float32)
        _, h_seq = jax.lax.scan(step, h0, h_seq)
    y = jnp.tanh(h_seq) @ params["hidden_w"].T + params["hidden_b"]
    return jnp.transpose(y, (1, 0, 2))


# --------------------------------------------------------------------------
# Deterministic parameter construction (PyTorch-style uniform(-k, k), k=1/sqrt(U))
# --------------------------------------------------------------------------
def init_params(key, units, num_features, n_layers):
    k = 1.0 / jnp.sqrt(jnp.float32(units))
    layers = []
    for l in range(n_layers):
        d_in = num_features if l == 0 else units
        key, k1, k2, k3, k4 = jax.random.split(key, 5)
        layers.append({
            "w_ih": jax.random.uniform(k1, (3 * units, d_in), jnp.float32, -k, k),
            "w_hh": jax.random.uniform(k2, (3 * units, units), jnp.float32, -k, k),
            "b_ih": jax.random.uniform(k3, (3 * units,), jnp.float32, -k, k),
            "b_hh": jax.random.uniform(k4, (3 * units,), jnp.float32, -k, k),
        })
    key, k5, k6 = jax.random.split(key, 3)
    return {
        "gru_layers": layers,
        "hidden_w": jax.random.uniform(k5, (units, units), jnp.float32, -k, k),
        "hidden_b": jax.random.uniform(k6, (units,), jnp.float32, -k, k),
    }


if __name__ == "__main__":
    # Small shapes consistent with Expert_GRU(units, seqlen, num_features, n_layers)
    units, seqlen, num_features, n_layers = 32, 8, 4, 2
    batch = 2

    root = jax.random.PRNGKey(0)
    k_x, k_p = jax.random.split(root)
    x = jax.random.normal(k_x, (batch, seqlen, num_features), jnp.float32)
    params = init_params(k_p, units, num_features, n_layers)

    prepared = prepare_params(params, num_features)   # pad/transpose/bf16/bias-fold once
    out = expert_gru_forward(x, prepared)
    out = jax.block_until_ready(out)

    assert out.shape == (batch, seqlen, units), out.shape
    assert jnp.all(jnp.isfinite(out))

    # Loose tolerance: MXU operands and inter-layer activations are bf16 by design.
    ref = expert_gru_reference(x, params)
    max_diff = float(jnp.max(jnp.abs(out - ref)))
    assert max_diff < 1e-1, f"max abs diff vs reference: {max_diff}"

    print("KERNEL_OK")
</pallas_src>

<mosaic_0001>
module attributes {stable_mosaic.version = 11 : i64} {
  func.func @kernel(%arg0: i32, %arg1: i32, %arg2: memref<8x16x128xbf16, #tpu.memory_space<vmem>>, %arg3: memref<128x384xbf16, #tpu.memory_space<vmem>>, %arg4: memref<128x384xbf16, #tpu.memory_space<vmem>>, %arg5: memref<1x384xf32, #tpu.memory_space<vmem>>, %arg6: memref<1x128xf32, #tpu.memory_space<vmem>>, %arg7: memref<128x384xbf16, #tpu.memory_space<vmem>>, %arg8: memref<128x384xbf16, #tpu.memory_space<vmem>>, %arg9: memref<1x384xf32, #tpu.memory_space<vmem>>, %arg10: memref<1x128xf32, #tpu.memory_space<vmem>>, %arg11: memref<128x128xbf16, #tpu.memory_space<vmem>>, %arg12: memref<1x128xf32, #tpu.memory_space<vmem>>, %arg13: memref<8x16x128xf32, #tpu.memory_space<vmem>>, %arg14: memref<2x16x128xf32, #tpu.memory_space<vmem>>, %arg15: memref<128x128xbf16, #tpu.memory_space<vmem>>, %arg16: memref<128x384xf32, #tpu.memory_space<vmem>>) attributes {dimension_semantics = [#tpu.dimension_semantics<parallel>, #tpu.dimension_semantics<arbitrary>], iteration_bounds = array<i64: 1, 1>, scalar_prefetch = 0 : i64, scratch_operands = 3 : i64, tpu.core_type = #tpu.core_type<tc>, window_params = [{transform_indices = @transform_0, window_bounds = array<i64: 8, 16, 128>}, {pipeline_mode = #tpu.pipeline_mode<synchronous>, transform_indices = @transform_1, window_bounds = array<i64: 128, 384>}, {pipeline_mode = #tpu.pipeline_mode<synchronous>, transform_indices = @transform_2, window_bounds = array<i64: 128, 384>}, {pipeline_mode = #tpu.pipeline_mode<synchronous>, transform_indices = @transform_3, window_bounds = array<i64: 1, 384>}, {pipeline_mode = #tpu.pipeline_mode<synchronous>, transform_indices = @transform_4, window_bounds = array<i64: 1, 128>}, {pipeline_mode = #tpu.pipeline_mode<synchronous>, transform_indices = @transform_5, window_bounds = array<i64: 128, 384>}, {pipeline_mode = #tpu.pipeline_mode<synchronous>, transform_indices = @transform_6, window_bounds = array<i64: 128, 384>}, {pipeline_mode = #tpu.pipeline_mode<synchronous>, transform_indices = @transform_7, window_bounds = array<i64: 1, 384>}, {pipeline_mode = #tpu.pipeline_mode<synchronous>, transform_indices = @transform_8, window_bounds = array<i64: 1, 128>}, {pipeline_mode = #tpu.pipeline_mode<synchronous>, transform_indices = @transform_9, window_bounds = array<i64: 128, 128>}, {pipeline_mode = #tpu.pipeline_mode<synchronous>, transform_indices = @transform_10, window_bounds = array<i64: 1, 128>}, {transform_indices = @transform_11, window_bounds = array<i64: 8, 16, 128>}]} {
    %c0_i32 = arith.constant 0 : i32
    %0 = arith.cmpi eq, %arg1, %c0_i32 : i32
    %1 = arith.extui %0 : i1 to i32
    %c0_i32_0 = arith.constant 0 : i32
    %2 = arith.cmpi ne, %1, %c0_i32_0 : i32
    scf.if %2 {
      %cst_168 = arith.constant 0.000000e+00 : f32
      %668 = vector.broadcast %cst_168 : f32 to vector<2x16x128xf32>
      %c0_169 = arith.constant 0 : index
      %c0_170 = arith.constant 0 : index
      %c0_171 = arith.constant 0 : index
      %669 = vector.load %arg14[%c0_169, %c0_170, %c0_171] : memref<2x16x128xf32, #tpu.memory_space<vmem>>, vector<2x16x128xf32>
      tpu.vector_store %arg14[%c0_169, %c0_170, %c0_171], %668 {strides = array<i32>} : memref<2x16x128xf32, #tpu.memory_space<vmem>>, vector<2x16x128xf32>,
    } else {
    }
    %c0 = arith.constant 0 : index
    %c0_1 = arith.constant 0 : index
    %c0_2 = arith.constant 0 : index
    %3 = vector.load %arg2[%c0, %c0_1, %c0_2] : memref<8x16x128xbf16, #tpu.memory_space<vmem>>, vector<8x16x128xbf16>
    %4 = vector.shape_cast %3 : vector<8x16x128xbf16> to vector<128x128xbf16>
    %c0_3 = arith.constant 0 : index
    %c0_4 = arith.constant 0 : index
    %5 = vector.load %arg3[%c0_3, %c0_4] : memref<128x384xbf16, #tpu.memory_space<vmem>>, vector<128x384xbf16>
    %cst = arith.constant dense<0.000000e+00> : vector<128x384xf32>
    %6 = tpu.matmul %4, %5, %cst {dimension_numbers = #tpu.dot_dimension_numbers<[1], [0], [0], [1], [0, 0, 1, 1], [], []>} : vector<128x128xbf16>, vector<128x384xbf16>, vector<128x384xf32> -> vector<128x384xf32>
    %c0_5 = arith.constant 0 : index
    %c0_6 = arith.constant 0 : index
    %7 = vector.load %arg16[%c0_5, %c0_6] : memref<128x384xf32, #tpu.memory_space<vmem>>, vector<128x384xf32>
    tpu.vector_store %arg16[%c0_5, %c0_6], %6 {strides = array<i32>} : memref<128x384xf32, #tpu.memory_space<vmem>>, vector<128x384xf32>,
    %c0_7 = arith.constant 0 : index
    %c0_8 = arith.constant 0 : index
    %8 = vector.load %arg4[%c0_7, %c0_8] : memref<128x384xbf16, #tpu.memory_space<vmem>>, vector<128x384xbf16>
    %c0_9 = arith.constant 0 : index
    %c0_10 = arith.constant 0 : index
    %9 = vector.load %arg5[%c0_9, %c0_10] : memref<1x384xf32, #tpu.memory_space<vmem>>, vector<1x384xf32>
    %c0_11 = arith.constant 0 : index
    %c0_12 = arith.constant 0 : index
    %10 = vector.load %arg6[%c0_11, %c0_12] : memref<1x128xf32, #tpu.memory_space<vmem>>, vector<1x128xf32>
    %c0_13 = arith.constant 0 : index
    %c0_14 = arith.constant 0 : index
    %c0_15 = arith.constant 0 : index
    %11 = vector.load %arg14[%c0_13, %c0_14, %c0_15] : memref<2x16x128xf32, #tpu.memory_space<vmem>>, vector<1x16x128xf32>
    %12 = vector.shape_cast %11 : vector<1x16x128xf32> to vector<16x128xf32>
    %c0_i32_16 = arith.constant 0 : i32
    %c16_i32 = arith.constant 16 : i32
    %13 = arith.muli %c0_i32_16, %c16_i32 : i32
    %14 = tpu.assume_multiple %13, 16 : i32
    %15 = arith.index_cast %14 : i32 to index
    %c0_17 = arith.constant 0 : index
    %16 = vector.load %arg16[%15, %c0_17] : memref<128x384xf32, #tpu.memory_space<vmem>>, vector<16x384xf32>
    %17 = arith.truncf %12 : vector<16x128xf32> to vector<16x128xbf16>
    %cst_18 = arith.constant dense<0.000000e+00> : vector<16x384xf32>
    %18 = tpu.matmul %17, %8, %cst_18 {dimension_numbers = #tpu.dot_dimension_numbers<[1], [0], [0], [1], [0, 0, 1, 1], [], []>} : vector<16x128xbf16>, vector<128x384xbf16>, vector<16x384xf32> -> vector<16x384xf32>
    %19 = vector.broadcast %9 : vector<1x384xf32> to vector<16x384xf32>
    %20 = arith.addf %18, %19 : vector<16x384xf32>
    %21 = vector.extract_strided_slice %16 {offsets = [0, 0], sizes = [16, 128], strides = [1, 1]} : vector<16x384xf32> to vector<16x128xf32>
    %22 = vector.extract_strided_slice %20 {offsets = [0, 0], sizes = [16, 128], strides = [1, 1]} : vector<16x384xf32> to vector<16x128xf32>
    %23 = arith.addf %21, %22 : vector<16x128xf32>
    %24 = arith.negf %23 : vector<16x128xf32>
    %25 = math.exp %24 : vector<16x128xf32>
    %cst_19 = arith.constant 1.000000e+00 : f32
    %26 = vector.broadcast %cst_19 : f32 to vector<16x128xf32>
    %27 = arith.addf %26, %25 : vector<16x128xf32>
    %28 = arith.divf %26, %27 : vector<16x128xf32>
    %29 = vector.extract_strided_slice %16 {offsets = [0, 128], sizes = [16, 128], strides = [1, 1]} : vector<16x384xf32> to vector<16x128xf32>
    %30 = vector.extract_strided_slice %20 {offsets = [0, 128], sizes = [16, 128], strides = [1, 1]} : vector<16x384xf32> to vector<16x128xf32>
    %31 = arith.addf %29, %30 : vector<16x128xf32>
    %32 = arith.negf %31 : vector<16x128xf32>
    %33 = math.exp %32 : vector<16x128xf32>
    %cst_20 = arith.constant 1.000000e+00 : f32
    %34 = vector.broadcast %cst_20 : f32 to vector<16x128xf32>
    %35 = arith.addf %34, %33 : vector<16x128xf32>
    %36 = arith.divf %34, %35 : vector<16x128xf32>
    %37 = vector.extract_strided_slice %16 {offsets = [0, 256], sizes = [16, 128], strides = [1, 1]} : vector<16x384xf32> to vector<16x128xf32>
    %38 = vector.broadcast %10 : vector<1x128xf32> to vector<16x128xf32>
    %39 = arith.addf %37, %38 : vector<16x128xf32>
    %40 = vector.extract_strided_slice %20 {offsets = [0, 256], sizes = [16, 128], strides = [1, 1]} : vector<16x384xf32> to vector<16x128xf32>
    %41 = arith.mulf %28, %40 : vector<16x128xf32>
    %42 = arith.addf %39, %41 : vector<16x128xf32>
    %43 = math.tanh %42 : vector<16x128xf32>
    %cst_21 = arith.constant 1.000000e+00 : f32
    %44 = vector.broadcast %cst_21 : f32 to vector<16x128xf32>
    %45 = arith.subf %44, %36 : vector<16x128xf32>
    %46 = arith.mulf %45, %43 : vector<16x128xf32>
    %47 = arith.mulf %36, %12 : vector<16x128xf32>
    %48 = arith.addf %46, %47 : vector<16x128xf32>
    %49 = arith.truncf %48 : vector<16x128xf32> to vector<16x128xbf16>
    %50 = arith.index_cast %14 : i32 to index
    %c0_22 = arith.constant 0 : index
    %51 = vector.load %arg15[%50, %c0_22] : memref<128x128xbf16, #tpu.memory_space<vmem>>, vector<16x128xbf16>
    tpu.vector_store %arg15[%50, %c0_22], %49 {strides = array<i32>} : memref<128x128xbf16, #tpu.memory_space<vmem>>, vector<16x128xbf16>,
    %c1_i32 = arith.constant 1 : i32
    %c16_i32_23 = arith.constant 16 : i32
    %52 = arith.muli %c1_i32, %c16_i32_23 : i32
    %53 = tpu.assume_multiple %52, 16 : i32
    %54 = arith.index_cast %53 : i32 to index
    %c0_24 = arith.constant 0 : index
    %55 = vector.load %arg16[%54, %c0_24] : memref<128x384xf32, #tpu.memory_space<vmem>>, vector<16x384xf32>
    %56 = arith.truncf %48 : vector<16x128xf32> to vector<16x128xbf16>
    %cst_25 = arith.constant dense<0.000000e+00> : vector<16x384xf32>
    %57 = tpu.matmul %56, %8, %cst_25 {dimension_numbers = #tpu.dot_dimension_numbers<[1], [0], [0], [1], [0, 0, 1, 1], [], []>} : vector<16x128xbf16>, vector<128x384xbf16>, vector<16x384xf32> -> vector<16x384xf32>
    %58 = vector.broadcast %9 : vector<1x384xf32> to vector<16x384xf32>
    %59 = arith.addf %57, %58 : vector<16x384xf32>
    %60 = vector.extract_strided_slice %55 {offsets = [0, 0], sizes = [16, 128], strides = [1, 1]} : vector<16x384xf32> to vector<16x128xf32>
    %61 = vector.extract_strided_slice %59 {offsets = [0, 0], sizes = [16, 128], strides = [1, 1]} : vector<16x384xf32> to vector<16x128xf32>
    %62 = arith.addf %60, %61 : vector<16x128xf32>
    %63 = arith.negf %62 : vector<16x128xf32>
    %64 = math.exp %63 : vector<16x128xf32>
    %cst_26 = arith.constant 1.000000e+00 : f32
    %65 = vector.broadcast %cst_26 : f32 to vector<16x128xf32>
    %66 = arith.addf %65, %64 : vector<16x128xf32>
    %67 = arith.divf %65, %66 : vector<16x128xf32>
    %68 = vector.extract_strided_slice %55 {offsets = [0, 128], sizes = [16, 128], strides = [1, 1]} : vector<16x384xf32> to vector<16x128xf32>
    %69 = vector.extract_strided_slice %59 {offsets = [0, 128], sizes = [16, 128], strides = [1, 1]} : vector<16x384xf32> to vector<16x128xf32>
    %70 = arith.addf %68, %69 : vector<16x128xf32>
    %71 = arith.negf %70 : vector<16x128xf32>
    %72 = math.exp %71 : vector<16x128xf32>
    %cst_27 = arith.constant 1.000000e+00 : f32
    %73 = vector.broadcast %cst_27 : f32 to vector<16x128xf32>
    %74 = arith.addf %73, %72 : vector<16x128xf32>
    %75 = arith.divf %73, %74 : vector<16x128xf32>
    %76 = vector.extract_strided_slice %55 {offsets = [0, 256], sizes = [16, 128], strides = [1, 1]} : vector<16x384xf32> to vector<16x128xf32>
    %77 = vector.broadcast %10 : vector<1x128xf32> to vector<16x128xf32>
    %78 = arith.addf %76, %77 : vector<16x128xf32>
    %79 = vector.extract_strided_slice %59 {offsets = [0, 256], sizes = [16, 128], strides = [1, 1]} : vector<16x384xf32> to vector<16x128xf32>
    %80 = arith.mulf %67, %79 : vector<16x128xf32>
    %81 = arith.addf %78, %80 : vector<16x128xf32>
    %82 = math.tanh %81 : vector<16x128xf32>
    %cst_28 = arith.constant 1.000000e+00 : f32
    %83 = vector.broadcast %cst_28 : f32 to vector<16x128xf32>
    %84 = arith.subf %83, %75 : vector<16x128xf32>
    %85 = arith.mulf %84, %82 : vector<16x128xf32>
    %86 = arith.mulf %75, %48 : vector<16x128xf32>
    %87 = arith.addf %85, %86 : vector<16x128xf32>
    %88 = arith.truncf %87 : vector<16x128xf32> to vector<16x128xbf16>
    %89 = arith.index_cast %53 : i32 to index
    %c0_29 = arith.constant 0 : index
    %90 = vector.load %arg15[%89, %c0_29] : memref<128x128xbf16, #tpu.memory_space<vmem>>, vector<16x128xbf16>
    tpu.vector_store %arg15[%89, %c0_29], %88 {strides = array<i32>} : memref<128x128xbf16, #tpu.memory_space<vmem>>, vector<16x128xbf16>,
    %c2_i32 = arith.constant 2 : i32
    %c16_i32_30 = arith.constant 16 : i32
    %91 = arith.muli %c2_i32, %c16_i32_30 : i32
    %92 = tpu.assume_multiple %91, 16 : i32
    %93 = arith.index_cast %92 : i32 to index
    %c0_31 = arith.constant 0 : index
    %94 = vector.load %arg16[%93, %c0_31] : memref<128x384xf32, #tpu.memory_space<vmem>>, vector<16x384xf32>
    %95 = arith.truncf %87 : vector<16x128xf32> to vector<16x128xbf16>
    %cst_32 = arith.constant dense<0.000000e+00> : vector<16x384xf32>
    %96 = tpu.matmul %95, %8, %cst_32 {dimension_numbers = #tpu.dot_dimension_numbers<[1], [0], [0], [1], [0, 0, 1, 1], [], []>} : vector<16x128xbf16>, vector<128x384xbf16>, vector<16x384xf32> -> vector<16x384xf32>
    %97 = vector.broadcast %9 : vector<1x384xf32> to vector<16x384xf32>
    %98 = arith.addf %96, %97 : vector<16x384xf32>
    %99 = vector.extract_strided_slice %94 {offsets = [0, 0], sizes = [16, 128], strides = [1, 1]} : vector<16x384xf32> to vector<16x128xf32>
    %100 = vector.extract_strided_slice %98 {offsets = [0, 0], sizes = [16, 128], strides = [1, 1]} : vector<16x384xf32> to vector<16x128xf32>
    %101 = arith.addf %99, %100 : vector<16x128xf32>
    %102 = arith.negf %101 : vector<16x128xf32>
    %103 = math.exp %102 : vector<16x128xf32>
    %cst_33 = arith.constant 1.000000e+00 : f32
    %104 = vector.broadcast %cst_33 : f32 to vector<16x128xf32>
    %105 = arith.addf %104, %103 : vector<16x128xf32>
    %106 = arith.divf %104, %105 : vector<16x128xf32>
    %107 = vector.extract_strided_slice %94 {offsets = [0, 128], sizes = [16, 128], strides = [1, 1]} : vector<16x384xf32> to vector<16x128xf32>
    %108 = vector.extract_strided_slice %98 {offsets = [0, 128], sizes = [16, 128], strides = [1, 1]} : vector<16x384xf32> to vector<16x128xf32>
    %109 = arith.addf %107, %108 : vector<16x128xf32>
    %110 = arith.negf %109 : vector<16x128xf32>
    %111 = math.exp %110 : vector<16x128xf32>
    %cst_34 = arith.constant 1.000000e+00 : f32
    %112 = vector.broadcast %cst_34 : f32 to vector<16x128xf32>
    %113 = arith.addf %112, %111 : vector<16x128xf32>
    %114 = arith.divf %112, %113 : vector<16x128xf32>
    %115 = vector.extract_strided_slice %94 {offsets = [0, 256], sizes = [16, 128], strides = [1, 1]} : vector<16x384xf32> to vector<16x128xf32>
    %116 = vector.broadcast %10 : vector<1x128xf32> to vector<16x128xf32>
    %117 = arith.addf %115, %116 : vector<16x128xf32>
    %118 = vector.extract_strided_slice %98 {offsets = [0, 256], sizes = [16, 128], strides = [1, 1]} : vector<16x384xf32> to vector<16x128xf32>
    %119 = arith.mulf %106, %118 : vector<16x128xf32>
    %120 = arith.addf %117, %119 : vector<16x128xf32>
    %121 = math.tanh %120 : vector<16x128xf32>
    %cst_35 = arith.constant 1.000000e+00 : f32
    %122 = vector.broadcast %cst_35 : f32 to vector<16x128xf32>
    %123 = arith.subf %122, %114 : vector<16x128xf32>
    %124 = arith.mulf %123, %121 : vector<16x128xf32>
    %125 = arith.mulf %114, %87 : vector<16x128xf32>
    %126 = arith.addf %124, %125 : vector<16x128xf32>
    %127 = arith.truncf %126 : vector<16x128xf32> to vector<16x128xbf16>
    %128 = arith.index_cast %92 : i32 to index
    %c0_36 = arith.constant 0 : index
    %129 = vector.load %arg15[%128, %c0_36] : memref<128x128xbf16, #tpu.memory_space<vmem>>, vector<16x128xbf16>
    tpu.vector_store %arg15[%128, %c0_36], %127 {strides = array<i32>} : memref<128x128xbf16, #tpu.memory_space<vmem>>, vector<16x128xbf16>,
    %c3_i32 = arith.constant 3 : i32
    %c16_i32_37 = arith.constant 16 : i32
    %130 = arith.muli %c3_i32, %c16_i32_37 : i32
    %131 = tpu.assume_multiple %130, 16 : i32
    %132 = arith.index_cast %131 : i32 to index
    %c0_38 = arith.constant 0 : index
    %133 = vector.load %arg16[%132, %c0_38] : memref<128x384xf32, #tpu.memory_space<vmem>>, vector<16x384xf32>
    %134 = arith.truncf %126 : vector<16x128xf32> to vector<16x128xbf16>
    %cst_39 = arith.constant dense<0.000000e+00> : vector<16x384xf32>
    %135 = tpu.matmul %134, %8, %cst_39 {dimension_numbers = #tpu.dot_dimension_numbers<[1], [0], [0], [1], [0, 0, 1, 1], [], []>} : vector<16x128xbf16>, vector<128x384xbf16>, vector<16x384xf32> -> vector<16x384xf32>
    %136 = vector.broadcast %9 : vector<1x384xf32> to vector<16x384xf32>
    %137 = arith.addf %135, %136 : vector<16x384xf32>
    %138 = vector.extract_strided_slice %133 {offsets = [0, 0], sizes = [16, 128], strides = [1, 1]} : vector<16x384xf32> to vector<16x128xf32>
    %139 = vector.extract_strided_slice %137 {offsets = [0, 0], sizes = [16, 128], strides = [1, 1]} : vector<16x384xf32> to vector<16x128xf32>
    %140 = arith.addf %138, %139 : vector<16x128xf32>
    %141 = arith.negf %140 : vector<16x128xf32>
    %142 = math.exp %141 : vector<16x128xf32>
    %cst_40 = arith.constant 1.000000e+00 : f32
    %143 = vector.broadcast %cst_40 : f32 to vector<16x128xf32>
    %144 = arith.addf %143, %142 : vector<16x128xf32>
    %145 = arith.divf %143, %144 : vector<16x128xf32>
    %146 = vector.extract_strided_slice %133 {offsets = [0, 128], sizes = [16, 128], strides = [1, 1]} : vector<16x384xf32> to vector<16x128xf32>
    %147 = vector.extract_strided_slice %137 {offsets = [0, 128], sizes = [16, 128], strides = [1, 1]} : vector<16x384xf32> to vector<16x128xf32>
    %148 = arith.addf %146, %147 : vector<16x128xf32>
    %149 = arith.negf %148 : vector<16x128xf32>
    %150 = math.exp %149 : vector<16x128xf32>
    %cst_41 = arith.constant 1.000000e+00 : f32
    %151 = vector.broadcast %cst_41 : f32 to vector<16x128xf32>
    %152 = arith.addf %151, %150 : vector<16x128xf32>
    %153 = arith.divf %151, %152 : vector<16x128xf32>
    %154 = vector.extract_strided_slice %133 {offsets = [0, 256], sizes = [16, 128], strides = [1, 1]} : vector<16x384xf32> to vector<16x128xf32>
    %155 = vector.broadcast %10 : vector<1x128xf32> to vector<16x128xf32>
    %156 = arith.addf %154, %155 : vector<16x128xf32>
    %157 = vector.extract_strided_slice %137 {offsets = [0, 256], sizes = [16, 128], strides = [1, 1]} : vector<16x384xf32> to vector<16x128xf32>
    %158 = arith.mulf %145, %157 : vector<16x128xf32>
    %159 = arith.addf %156, %158 : vector<16x128xf32>
    %160 = math.tanh %159 : vector<16x128xf32>
    %cst_42 = arith.constant 1.000000e+00 : f32
    %161 = vector.broadcast %cst_42 : f32 to vector<16x128xf32>
    %162 = arith.subf %161, %153 : vector<16x128xf32>
    %163 = arith.mulf %162, %160 : vector<16x128xf32>
    %164 = arith.mulf %153, %126 : vector<16x128xf32>
    %165 = arith.addf %163, %164 : vector<16x128xf32>
    %166 = arith.truncf %165 : vector<16x128xf32> to vector<16x128xbf16>
    %167 = arith.index_cast %131 : i32 to index
    %c0_43 = arith.constant 0 : index
    %168 = vector.load %arg15[%167, %c0_43] : memref<128x128xbf16, #tpu.memory_space<vmem>>, vector<16x128xbf16>
    tpu.vector_store %arg15[%167, %c0_43], %166 {strides = array<i32>} : memref<128x128xbf16, #tpu.memory_space<vmem>>, vector<16x128xbf16>,
    %c4_i32 = arith.constant 4 : i32
    %c16_i32_44 = arith.constant 16 : i32
    %169 = arith.muli %c4_i32, %c16_i32_44 : i32
    %170 = tpu.assume_multiple %169, 16 : i32
    %171 = arith.index_cast %170 : i32 to index
    %c0_45 = arith.constant 0 : index
    %172 = vector.load %arg16[%171, %c0_45] : memref<128x384xf32, #tpu.memory_space<vmem>>, vector<16x384xf32>
    %173 = arith.truncf %165 : vector<16x128xf32> to vector<16x128xbf16>
    %cst_46 = arith.constant dense<0.000000e+00> : vector<16x384xf32>
    %174 = tpu.matmul %173, %8, %cst_46 {dimension_numbers = #tpu.dot_dimension_numbers<[1], [0], [0], [1], [0, 0, 1, 1], [], []>} : vector<16x128xbf16>, vector<128x384xbf16>, vector<16x384xf32> -> vector<16x384xf32>
    %175 = vector.broadcast %9 : vector<1x384xf32> to vector<16x384xf32>
    %176 = arith.addf %174, %175 : vector<16x384xf32>
    %177 = vector.extract_strided_slice %172 {offsets = [0, 0], sizes = [16, 128], strides = [1, 1]} : vector<16x384xf32> to vector<16x128xf32>
    %178 = vector.extract_strided_slice %176 {offsets = [0, 0], sizes = [16, 128], strides = [1, 1]} : vector<16x384xf32> to vector<16x128xf32>
    %179 = arith.addf %177, %178 : vector<16x128xf32>
    %180 = arith.negf %179 : vector<16x128xf32>
    %181 = math.exp %180 : vector<16x128xf32>
    %cst_47 = arith.constant 1.000000e+00 : f32
    %182 = vector.broadcast %cst_47 : f32 to vector<16x128xf32>
    %183 = arith.addf %182, %181 : vector<16x128xf32>
    %184 = arith.divf %182, %183 : vector<16x128xf32>
    %185 = vector.extract_strided_slice %172 {offsets = [0, 128], sizes = [16, 128], strides = [1, 1]} : vector<16x384xf32> to vector<16x128xf32>
    %186 = vector.extract_strided_slice %176 {offsets = [0, 128], sizes = [16, 128], strides = [1, 1]} : vector<16x384xf32> to vector<16x128xf32>
    %187 = arith.addf %185, %186 : vector<16x128xf32>
    %188 = arith.negf %187 : vector<16x128xf32>
    %189 = math.exp %188 : vector<16x128xf32>
    %cst_48 = arith.constant 1.000000e+00 : f32
    %190 = vector.broadcast %cst_48 : f32 to vector<16x128xf32>
    %191 = arith.addf %190, %189 : vector<16x128xf32>
    %192 = arith.divf %190, %191 : vector<16x128xf32>
    %193 = vector.extract_strided_slice %172 {offsets = [0, 256], sizes = [16, 128], strides = [1, 1]} : vector<16x384xf32> to vector<16x128xf32>
    %194 = vector.broadcast %10 : vector<1x128xf32> to vector<16x128xf32>
    %195 = arith.addf %193, %194 : vector<16x128xf32>
    %196 = vector.extract_strided_slice %176 {offsets = [0, 256], sizes = [16, 128], strides = [1, 1]} : vector<16x384xf32> to vector<16x128xf32>
    %197 = arith.mulf %184, %196 : vector<16x128xf32>
    %198 = arith.addf %195, %197 : vector<16x128xf32>
    %199 = math.tanh %198 : vector<16x128xf32>
    %cst_49 = arith.constant 1.000000e+00 : f32
    %200 = vector.broadcast %cst_49 : f32 to vector<16x128xf32>
    %201 = arith.subf %200, %192 : vector<16x128xf32>
    %202 = arith.mulf %201, %199 : vector<16x128xf32>
    %203 = arith.mulf %192, %165 : vector<16x128xf32>
    %204 = arith.addf %202, %203 : vector<16x128xf32>
    %205 = arith.truncf %204 : vector<16x128xf32> to vector<16x128xbf16>
    %206 = arith.index_cast %170 : i32 to index
    %c0_50 = arith.constant 0 : index
    %207 = vector.load %arg15[%206, %c0_50] : memref<128x128xbf16, #tpu.memory_space<vmem>>, vector<16x128xbf16>
    tpu.vector_store %arg15[%206, %c0_50], %205 {strides = array<i32>} : memref<128x128xbf16, #tpu.memory_space<vmem>>, vector<16x128xbf16>,
    %c5_i32 = arith.constant 5 : i32
    %c16_i32_51 = arith.constant 16 : i32
    %208 = arith.muli %c5_i32, %c16_i32_51 : i32
    %209 = tpu.assume_multiple %208, 16 : i32
    %210 = arith.index_cast %209 : i32 to index
    %c0_52 = arith.constant 0 : index
    %211 = vector.load %arg16[%210, %c0_52] : memref<128x384xf32, #tpu.memory_space<vmem>>, vector<16x384xf32>
    %212 = arith.truncf %204 : vector<16x128xf32> to vector<16x128xbf16>
    %cst_53 = arith.constant dense<0.000000e+00> : vector<16x384xf32>
    %213 = tpu.matmul %212, %8, %cst_53 {dimension_numbers = #tpu.dot_dimension_numbers<[1], [0], [0], [1], [0, 0, 1, 1], [], []>} : vector<16x128xbf16>, vector<128x384xbf16>, vector<16x384xf32> -> vector<16x384xf32>
    %214 = vector.broadcast %9 : vector<1x384xf32> to vector<16x384xf32>
    %215 = arith.addf %213, %214 : vector<16x384xf32>
    %216 = vector.extract_strided_slice %211 {offsets = [0, 0], sizes = [16, 128], strides = [1, 1]} : vector<16x384xf32> to vector<16x128xf32>
    %217 = vector.extract_strided_slice %215 {offsets = [0, 0], sizes = [16, 128], strides = [1, 1]} : vector<16x384xf32> to vector<16x128xf32>
    %218 = arith.addf %216, %217 : vector<16x128xf32>
    %219 = arith.negf %218 : vector<16x128xf32>
    %220 = math.exp %219 : vector<16x128xf32>
    %cst_54 = arith.constant 1.000000e+00 : f32
    %221 = vector.broadcast %cst_54 : f32 to vector<16x128xf32>
    %222 = arith.addf %221, %220 : vector<16x128xf32>
    %223 = arith.divf %221, %222 : vector<16x128xf32>
    %224 = vector.extract_strided_slice %211 {offsets = [0, 128], sizes = [16, 128], strides = [1, 1]} : vector<16x384xf32> to vector<16x128xf32>
    %225 = vector.extract_strided_slice %215 {offsets = [0, 128], sizes = [16, 128], strides = [1, 1]} : vector<16x384xf32> to vector<16x128xf32>
    %226 = arith.addf %224, %225 : vector<16x128xf32>
    %227 = arith.negf %226 : vector<16x128xf32>
    %228 = math.exp %227 : vector<16x128xf32>
    %cst_55 = arith.constant 1.000000e+00 : f32
    %229 = vector.broadcast %cst_55 : f32 to vector<16x128xf32>
    %230 = arith.addf %229, %228 : vector<16x128xf32>
    %231 = arith.divf %229, %230 : vector<16x128xf32>
    %232 = vector.extract_strided_slice %211 {offsets = [0, 256], sizes = [16, 128], strides = [1, 1]} : vector<16x384xf32> to vector<16x128xf32>
    %233 = vector.broadcast %10 : vector<1x128xf32> to vector<16x128xf32>
    %234 = arith.addf %232, %233 : vector<16x128xf32>
    %235 = vector.extract_strided_slice %215 {offsets = [0, 256], sizes = [16, 128], strides = [1, 1]} : vector<16x384xf32> to vector<16x128xf32>
    %236 = arith.mulf %223, %235 : vector<16x128xf32>
    %237 = arith.addf %234, %236 : vector<16x128xf32>
    %238 = math.tanh %237 : vector<16x128xf32>
    %cst_56 = arith.constant 1.000000e+00 : f32
    %239 = vector.broadcast %cst_56 : f32 to vector<16x128xf32>
    %240 = arith.subf %239, %231 : vector<16x128xf32>
    %241 = arith.mulf %240, %238 : vector<16x128xf32>
    %242 = arith.mulf %231, %204 : vector<16x128xf32>
    %243 = arith.addf %241, %242 : vector<16x128xf32>
    %244 = arith.truncf %243 : vector<16x128xf32> to vector<16x128xbf16>
    %245 = arith.index_cast %209 : i32 to index
    %c0_57 = arith.constant 0 : index
    %246 = vector.load %arg15[%245, %c0_57] : memref<128x128xbf16, #tpu.memory_space<vmem>>, vector<16x128xbf16>
    tpu.vector_store %arg15[%245, %c0_57], %244 {strides = array<i32>} : memref<128x128xbf16, #tpu.memory_space<vmem>>, vector<16x128xbf16>,
    %c6_i32 = arith.constant 6 : i32
    %c16_i32_58 = arith.constant 16 : i32
    %247 = arith.muli %c6_i32, %c16_i32_58 : i32
    %248 = tpu.assume_multiple %247, 16 : i32
    %249 = arith.index_cast %248 : i32 to index
    %c0_59 = arith.constant 0 : index
    %250 = vector.load %arg16[%249, %c0_59] : memref<128x384xf32, #tpu.memory_space<vmem>>, vector<16x384xf32>
    %251 = arith.truncf %243 : vector<16x128xf32> to vector<16x128xbf16>
    %cst_60 = arith.constant dense<0.000000e+00> : vector<16x384xf32>
    %252 = tpu.matmul %251, %8, %cst_60 {dimension_numbers = #tpu.dot_dimension_numbers<[1], [0], [0], [1], [0, 0, 1, 1], [], []>} : vector<16x128xbf16>, vector<128x384xbf16>, vector<16x384xf32> -> vector<16x384xf32>
    %253 = vector.broadcast %9 : vector<1x384xf32> to vector<16x384xf32>
    %254 = arith.addf %252, %253 : vector<16x384xf32>
    %255 = vector.extract_strided_slice %250 {offsets = [0, 0], sizes = [16, 128], strides = [1, 1]} : vector<16x384xf32> to vector<16x128xf32>
    %256 = vector.extract_strided_slice %254 {offsets = [0, 0], sizes = [16, 128], strides = [1, 1]} : vector<16x384xf32> to vector<16x128xf32>
    %257 = arith.addf %255, %256 : vector<16x128xf32>
    %258 = arith.negf %257 : vector<16x128xf32>
    %259 = math.exp %258 : vector<16x128xf32>
    %cst_61 = arith.constant 1.000000e+00 : f32
    %260 = vector.broadcast %cst_61 : f32 to vector<16x128xf32>
    %261 = arith.addf %260, %259 : vector<16x128xf32>
    %262 = arith.divf %260, %261 : vector<16x128xf32>
    %263 = vector.extract_strided_slice %250 {offsets = [0, 128], sizes = [16, 128], strides = [1, 1]} : vector<16x384xf32> to vector<16x128xf32>
    %264 = vector.extract_strided_slice %254 {offsets = [0, 128], sizes = [16, 128], strides = [1, 1]} : vector<16x384xf32> to vector<16x128xf32>
    %265 = arith.addf %263, %264 : vector<16x128xf32>
    %266 = arith.negf %265 : vector<16x128xf32>
    %267 = math.exp %266 : vector<16x128xf32>
    %cst_62 = arith.constant 1.000000e+00 : f32
    %268 = vector.broadcast %cst_62 : f32 to vector<16x128xf32>
    %269 = arith.addf %268, %267 : vector<16x128xf32>
    %270 = arith.divf %268, %269 : vector<16x128xf32>
    %271 = vector.extract_strided_slice %250 {offsets = [0, 256], sizes = [16, 128], strides = [1, 1]} : vector<16x384xf32> to vector<16x128xf32>
    %272 = vector.broadcast %10 : vector<1x128xf32> to vector<16x128xf32>
    %273 = arith.addf %271, %272 : vector<16x128xf32>
    %274 = vector.extract_strided_slice %254 {offsets = [0, 256], sizes = [16, 128], strides = [1, 1]} : vector<16x384xf32> to vector<16x128xf32>
    %275 = arith.mulf %262, %274 : vector<16x128xf32>
    %276 = arith.addf %273, %275 : vector<16x128xf32>
    %277 = math.tanh %276 : vector<16x128xf32>
    %cst_63 = arith.constant 1.000000e+00 : f32
    %278 = vector.broadcast %cst_63 : f32 to vector<16x128xf32>
    %279 = arith.subf %278, %270 : vector<16x128xf32>
    %280 = arith.mulf %279, %277 : vector<16x128xf32>
    %281 = arith.mulf %270, %243 : vector<16x128xf32>
    %282 = arith.addf %280, %281 : vector<16x128xf32>
    %283 = arith.truncf %282 : vector<16x128xf32> to vector<16x128xbf16>
    %284 = arith.index_cast %248 : i32 to index
    %c0_64 = arith.constant 0 : index
    %285 = vector.load %arg15[%284, %c0_64] : memref<128x128xbf16, #tpu.memory_space<vmem>>, vector<16x128xbf16>
    tpu.vector_store %arg15[%284, %c0_64], %283 {strides = array<i32>} : memref<128x128xbf16, #tpu.memory_space<vmem>>, vector<16x128xbf16>,
    %c7_i32 = arith.constant 7 : i32
    %c16_i32_65 = arith.constant 16 : i32
    %286 = arith.muli %c7_i32, %c16_i32_65 : i32
    %287 = tpu.assume_multiple %286, 16 : i32
    %288 = arith.index_cast %287 : i32 to index
    %c0_66 = arith.constant 0 : index
    %289 = vector.load %arg16[%288, %c0_66] : memref<128x384xf32, #tpu.memory_space<vmem>>, vector<16x384xf32>
    %290 = arith.truncf %282 : vector<16x128xf32> to vector<16x128xbf16>
    %cst_67 = arith.constant dense<0.000000e+00> : vector<16x384xf32>
    %291 = tpu.matmul %290, %8, %cst_67 {dimension_numbers = #tpu.dot_dimension_numbers<[1], [0], [0], [1], [0, 0, 1, 1], [], []>} : vector<16x128xbf16>, vector<128x384xbf16>, vector<16x384xf32> -> vector<16x384xf32>
    %292 = vector.broadcast %9 : vector<1x384xf32> to vector<16x384xf32>
    %293 = arith.addf %291, %292 : vector<16x384xf32>
    %294 = vector.extract_strided_slice %289 {offsets = [0, 0], sizes = [16, 128], strides = [1, 1]} : vector<16x384xf32> to vector<16x128xf32>
    %295 = vector.extract_strided_slice %293 {offsets = [0, 0], sizes = [16, 128], strides = [1, 1]} : vector<16x384xf32> to vector<16x128xf32>
    %296 = arith.addf %294, %295 : vector<16x128xf32>
    %297 = arith.negf %296 : vector<16x128xf32>
    %298 = math.exp %297 : vector<16x128xf32>
    %cst_68 = arith.constant 1.000000e+00 : f32
    %299 = vector.broadcast %cst_68 : f32 to vector<16x128xf32>
    %300 = arith.addf %299, %298 : vector<16x128xf32>
    %301 = arith.divf %299, %300 : vector<16x128xf32>
    %302 = vector.extract_strided_slice %289 {offsets = [0, 128], sizes = [16, 128], strides = [1, 1]} : vector<16x384xf32> to vector<16x128xf32>
    %303 = vector.extract_strided_slice %293 {offsets = [0, 128], sizes = [16, 128], strides = [1, 1]} : vector<16x384xf32> to vector<16x128xf32>
    %304 = arith.addf %302, %303 : vector<16x128xf32>
    %305 = arith.negf %304 : vector<16x128xf32>
    %306 = math.exp %305 : vector<16x128xf32>
    %cst_69 = arith.constant 1.000000e+00 : f32
    %307 = vector.broadcast %cst_69 : f32 to vector<16x128xf32>
    %308 = arith.addf %307, %306 : vector<16x128xf32>
    %309 = arith.divf %307, %308 : vector<16x128xf32>
    %310 = vector.extract_strided_slice %289 {offsets = [0, 256], sizes = [16, 128], strides = [1, 1]} : vector<16x384xf32> to vector<16x128xf32>
    %311 = vector.broadcast %10 : vector<1x128xf32> to vector<16x128xf32>
    %312 = arith.addf %310, %311 : vector<16x128xf32>
    %313 = vector.extract_strided_slice %293 {offsets = [0, 256], sizes = [16, 128], strides = [1, 1]} : vector<16x384xf32> to vector<16x128xf32>
    %314 = arith.mulf %301, %313 : vector<16x128xf32>
    %315 = arith.addf %312, %314 : vector<16x128xf32>
    %316 = math.tanh %315 : vector<16x128xf32>
    %cst_70 = arith.constant 1.000000e+00 : f32
    %317 = vector.broadcast %cst_70 : f32 to vector<16x128xf32>
    %318 = arith.subf %317, %309 : vector<16x128xf32>
    %319 = arith.mulf %318, %316 : vector<16x128xf32>
    %320 = arith.mulf %309, %282 : vector<16x128xf32>
    %321 = arith.addf %319, %320 : vector<16x128xf32>
    %322 = arith.truncf %321 : vector<16x128xf32> to vector<16x128xbf16>
    %323 = arith.index_cast %287 : i32 to index
    %c0_71 = arith.constant 0 : index
    %324 = vector.load %arg15[%323, %c0_71] : memref<128x128xbf16, #tpu.memory_space<vmem>>, vector<16x128xbf16>
    tpu.vector_store %arg15[%323, %c0_71], %322 {strides = array<i32>} : memref<128x128xbf16, #tpu.memory_space<vmem>>, vector<16x128xbf16>,
    %c8_i32 = arith.constant 8 : i32
    %c0_72 = arith.constant 0 : index
    %c0_73 = arith.constant 0 : index
    %c0_74 = arith.constant 0 : index
    %325 = vector.load %arg14[%c0_72, %c0_73, %c0_74] : memref<2x16x128xf32, #tpu.memory_space<vmem>>, vector<1x16x128xf32>
    %326 = vector.shape_cast %325 : vector<1x16x128xf32> to vector<16x128xf32>
    %327 = vector.shape_cast %321 : vector<16x128xf32> to vector<1x16x128xf32>
    tpu.vector_store %arg14[%c0_72, %c0_73, %c0_74], %327 {strides = array<i32>} : memref<2x16x128xf32, #tpu.memory_space<vmem>>, vector<1x16x128xf32>,
    %c0_75 = arith.constant 0 : index
    %c0_76 = arith.constant 0 : index
    %328 = vector.load %arg15[%c0_75, %c0_76] : memref<128x128xbf16, #tpu.memory_space<vmem>>, vector<128x128xbf16>
    %c0_77 = arith.constant 0 : index
    %c0_78 = arith.constant 0 : index
    %329 = vector.load %arg7[%c0_77, %c0_78] : memref<128x384xbf16, #tpu.memory_space<vmem>>, vector<128x384xbf16>
    %cst_79 = arith.constant dense<0.000000e+00> : vector<128x384xf32>
    %330 = tpu.matmul %328, %329, %cst_79 {dimension_numbers = #tpu.dot_dimension_numbers<[1], [0], [0], [1], [0, 0, 1, 1], [], []>} : vector<128x128xbf16>, vector<128x384xbf16>, vector<128x384xf32> -> vector<128x384xf32>
    %c0_80 = arith.constant 0 : index
    %c0_81 = arith.constant 0 : index
    %331 = vector.load %arg16[%c0_80, %c0_81] : memref<128x384xf32, #tpu.memory_space<vmem>>, vector<128x384xf32>
    tpu.vector_store %arg16[%c0_80, %c0_81], %330 {strides = array<i32>} : memref<128x384xf32, #tpu.memory_space<vmem>>, vector<128x384xf32>,
    %c0_82 = arith.constant 0 : index
    %c0_83 = arith.constant 0 : index
    %332 = vector.load %arg8[%c0_82, %c0_83] : memref<128x384xbf16, #tpu.memory_space<vmem>>, vector<128x384xbf16>
    %c0_84 = arith.constant 0 : index
    %c0_85 = arith.constant 0 : index
    %333 = vector.load %arg9[%c0_84, %c0_85] : memref<1x384xf32, #tpu.memory_space<vmem>>, vector<1x384xf32>
    %c0_86 = arith.constant 0 : index
    %c0_87 = arith.constant 0 : index
    %334 = vector.load %arg10[%c0_86, %c0_87] : memref<1x128xf32, #tpu.memory_space<vmem>>, vector<1x128xf32>
    %c1 = arith.constant 1 : index
    %c0_88 = arith.constant 0 : index
    %c0_89 = arith.constant 0 : index
    %335 = vector.load %arg14[%c1, %c0_88, %c0_89] : memref<2x16x128xf32, #tpu.memory_space<vmem>>, vector<1x16x128xf32>
    %336 = vector.shape_cast %335 : vector<1x16x128xf32> to vector<16x128xf32>
    %c0_i32_90 = arith.constant 0 : i32
    %c16_i32_91 = arith.constant 16 : i32
    %337 = arith.muli %c0_i32_90, %c16_i32_91 : i32
    %338 = tpu.assume_multiple %337, 16 : i32
    %339 = arith.index_cast %338 : i32 to index
    %c0_92 = arith.constant 0 : index
    %340 = vector.load %arg16[%339, %c0_92] : memref<128x384xf32, #tpu.memory_space<vmem>>, vector<16x384xf32>
    %341 = arith.truncf %336 : vector<16x128xf32> to vector<16x128xbf16>
    %cst_93 = arith.constant dense<0.000000e+00> : vector<16x384xf32>
    %342 = tpu.matmul %341, %332, %cst_93 {dimension_numbers = #tpu.dot_dimension_numbers<[1], [0], [0], [1], [0, 0, 1, 1], [], []>} : vector<16x128xbf16>, vector<128x384xbf16>, vector<16x384xf32> -> vector<16x384xf32>
    %343 = vector.broadcast %333 : vector<1x384xf32> to vector<16x384xf32>
    %344 = arith.addf %342, %343 : vector<16x384xf32>
    %345 = vector.extract_strided_slice %340 {offsets = [0, 0], sizes = [16, 128], strides = [1, 1]} : vector<16x384xf32> to vector<16x128xf32>
    %346 = vector.extract_strided_slice %344 {offsets = [0, 0], sizes = [16, 128], strides = [1, 1]} : vector<16x384xf32> to vector<16x128xf32>
    %347 = arith.addf %345, %346 : vector<16x128xf32>
    %348 = arith.negf %347 : vector<16x128xf32>
    %349 = math.exp %348 : vector<16x128xf32>
    %cst_94 = arith.constant 1.000000e+00 : f32
    %350 = vector.broadcast %cst_94 : f32 to vector<16x128xf32>
    %351 = arith.addf %350, %349 : vector<16x128xf32>
    %352 = arith.divf %350, %351 : vector<16x128xf32>
    %353 = vector.extract_strided_slice %340 {offsets = [0, 128], sizes = [16, 128], strides = [1, 1]} : vector<16x384xf32> to vector<16x128xf32>
    %354 = vector.extract_strided_slice %344 {offsets = [0, 128], sizes = [16, 128], strides = [1, 1]} : vector<16x384xf32> to vector<16x128xf32>
    %355 = arith.addf %353, %354 : vector<16x128xf32>
    %356 = arith.negf %355 : vector<16x128xf32>
    %357 = math.exp %356 : vector<16x128xf32>
    %cst_95 = arith.constant 1.000000e+00 : f32
    %358 = vector.broadcast %cst_95 : f32 to vector<16x128xf32>
    %359 = arith.addf %358, %357 : vector<16x128xf32>
    %360 = arith.divf %358, %359 : vector<16x128xf32>
    %361 = vector.extract_strided_slice %340 {offsets = [0, 256], sizes = [16, 128], strides = [1, 1]} : vector<16x384xf32> to vector<16x128xf32>
    %362 = vector.broadcast %334 : vector<1x128xf32> to vector<16x128xf32>
    %363 = arith.addf %361, %362 : vector<16x128xf32>
    %364 = vector.extract_strided_slice %344 {offsets = [0, 256], sizes = [16, 128], strides = [1, 1]} : vector<16x384xf32> to vector<16x128xf32>
    %365 = arith.mulf %352, %364 : vector<16x128xf32>
    %366 = arith.addf %363, %365 : vector<16x128xf32>
    %367 = math.tanh %366 : vector<16x128xf32>
    %cst_96 = arith.constant 1.000000e+00 : f32
    %368 = vector.broadcast %cst_96 : f32 to vector<16x128xf32>
    %369 = arith.subf %368, %360 : vector<16x128xf32>
    %370 = arith.mulf %369, %367 : vector<16x128xf32>
    %371 = arith.mulf %360, %336 : vector<16x128xf32>
    %372 = arith.addf %370, %371 : vector<16x128xf32>
    %373 = math.tanh %372 : vector<16x128xf32>
    %374 = arith.truncf %373 : vector<16x128xf32> to vector<16x128xbf16>
    %375 = arith.index_cast %338 : i32 to index
    %c0_97 = arith.constant 0 : index
    %376 = vector.load %arg15[%375, %c0_97] : memref<128x128xbf16, #tpu.memory_space<vmem>>, vector<16x128xbf16>
    tpu.vector_store %arg15[%375, %c0_97], %374 {strides = array<i32>} : memref<128x128xbf16, #tpu.memory_space<vmem>>, vector<16x128xbf16>,
    %c1_i32_98 = arith.constant 1 : i32
    %c16_i32_99 = arith.constant 16 : i32
    %377 = arith.muli %c1_i32_98, %c16_i32_99 : i32
    %378 = tpu.assume_multiple %377, 16 : i32
    %379 = arith.index_cast %378 : i32 to index
    %c0_100 = arith.constant 0 : index
    %380 = vector.load %arg16[%379, %c0_100] : memref<128x384xf32, #tpu.memory_space<vmem>>, vector<16x384xf32>
    %381 = arith.truncf %372 : vector<16x128xf32> to vector<16x128xbf16>
    %cst_101 = arith.constant dense<0.000000e+00> : vector<16x384xf32>
    %382 = tpu.matmul %381, %332, %cst_101 {dimension_numbers = #tpu.dot_dimension_numbers<[1], [0], [0], [1], [0, 0, 1, 1], [], []>} : vector<16x128xbf16>, vector<128x384xbf16>, vector<16x384xf32> -> vector<16x384xf32>
    %383 = vector.broadcast %333 : vector<1x384xf32> to vector<16x384xf32>
    %384 = arith.addf %382, %383 : vector<16x384xf32>
    %385 = vector.extract_strided_slice %380 {offsets = [0, 0], sizes = [16, 128], strides = [1, 1]} : vector<16x384xf32> to vector<16x128xf32>
    %386 = vector.extract_strided_slice %384 {offsets = [0, 0], sizes = [16, 128], strides = [1, 1]} : vector<16x384xf32> to vector<16x128xf32>
    %387 = arith.addf %385, %386 : vector<16x128xf32>
    %388 = arith.negf %387 : vector<16x128xf32>
    %389 = math.exp %388 : vector<16x128xf32>
    %cst_102 = arith.constant 1.000000e+00 : f32
    %390 = vector.broadcast %cst_102 : f32 to vector<16x128xf32>
    %391 = arith.addf %390, %389 : vector<16x128xf32>
    %392 = arith.divf %390, %391 : vector<16x128xf32>
    %393 = vector.extract_strided_slice %380 {offsets = [0, 128], sizes = [16, 128], strides = [1, 1]} : vector<16x384xf32> to vector<16x128xf32>
    %394 = vector.extract_strided_slice %384 {offsets = [0, 128], sizes = [16, 128], strides = [1, 1]} : vector<16x384xf32> to vector<16x128xf32>
    %395 = arith.addf %393, %394 : vector<16x128xf32>
    %396 = arith.negf %395 : vector<16x128xf32>
    %397 = math.exp %396 : vector<16x128xf32>
    %cst_103 = arith.constant 1.000000e+00 : f32
    %398 = vector.broadcast %cst_103 : f32 to vector<16x128xf32>
    %399 = arith.addf %398, %397 : vector<16x128xf32>
    %400 = arith.divf %398, %399 : vector<16x128xf32>
    %401 = vector.extract_strided_slice %380 {offsets = [0, 256], sizes = [16, 128], strides = [1, 1]} : vector<16x384xf32> to vector<16x128xf32>
    %402 = vector.broadcast %334 : vector<1x128xf32> to vector<16x128xf32>
    %403 = arith.addf %401, %402 : vector<16x128xf32>
    %404 = vector.extract_strided_slice %384 {offsets = [0, 256], sizes = [16, 128], strides = [1, 1]} : vector<16x384xf32> to vector<16x128xf32>
    %405 = arith.mulf %392, %404 : vector<16x128xf32>
    %406 = arith.addf %403, %405 : vector<16x128xf32>
    %407 = math.tanh %406 : vector<16x128xf32>
    %cst_104 = arith.constant 1.000000e+00 : f32
    %408 = vector.broadcast %cst_104 : f32 to vector<16x128xf32>
    %409 = arith.subf %408, %400 : vector<16x128xf32>
    %410 = arith.mulf %409, %407 : vector<16x128xf32>
    %411 = arith.mulf %400, %372 : vector<16x128xf32>
    %412 = arith.addf %410, %411 : vector<16x128xf32>
    %413 = math.tanh %412 : vector<16x128xf32>
    %414 = arith.truncf %413 : vector<16x128xf32> to vector<16x128xbf16>
    %415 = arith.index_cast %378 : i32 to index
    %c0_105 = arith.constant 0 : index
    %416 = vector.load %arg15[%415, %c0_105] : memref<128x128xbf16, #tpu.memory_space<vmem>>, vector<16x128xbf16>
    tpu.vector_store %arg15[%415, %c0_105], %414 {strides = array<i32>} : memref<128x128xbf16, #tpu.memory_space<vmem>>, vector<16x128xbf16>,
    %c2_i32_106 = arith.constant 2 : i32
    %c16_i32_107 = arith.constant 16 : i32
    %417 = arith.muli %c2_i32_106, %c16_i32_107 : i32
    %418 = tpu.assume_multiple %417, 16 : i32
    %419 = arith.index_cast %418 : i32 to index
    %c0_108 = arith.constant 0 : index
    %420 = vector.load %arg16[%419, %c0_108] : memref<128x384xf32, #tpu.memory_space<vmem>>, vector<16x384xf32>
    %421 = arith.truncf %412 : vector<16x128xf32> to vector<16x128xbf16>
    %cst_109 = arith.constant dense<0.000000e+00> : vector<16x384xf32>
    %422 = tpu.matmul %421, %332, %cst_109 {dimension_numbers = #tpu.dot_dimension_numbers<[1], [0], [0], [1], [0, 0, 1, 1], [], []>} : vector<16x128xbf16>, vector<128x384xbf16>, vector<16x384xf32> -> vector<16x384xf32>
    %423 = vector.broadcast %333 : vector<1x384xf32> to vector<16x384xf32>
    %424 = arith.addf %422, %423 : vector<16x384xf32>
    %425 = vector.extract_strided_slice %420 {offsets = [0, 0], sizes = [16, 128], strides = [1, 1]} : vector<16x384xf32> to vector<16x128xf32>
    %426 = vector.extract_strided_slice %424 {offsets = [0, 0], sizes = [16, 128], strides = [1, 1]} : vector<16x384xf32> to vector<16x128xf32>
    %427 = arith.addf %425, %426 : vector<16x128xf32>
    %428 = arith.negf %427 : vector<16x128xf32>
    %429 = math.exp %428 : vector<16x128xf32>
    %cst_110 = arith.constant 1.000000e+00 : f32
    %430 = vector.broadcast %cst_110 : f32 to vector<16x128xf32>
    %431 = arith.addf %430, %429 : vector<16x128xf32>
    %432 = arith.divf %430, %431 : vector<16x128xf32>
    %433 = vector.extract_strided_slice %420 {offsets = [0, 128], sizes = [16, 128], strides = [1, 1]} : vector<16x384xf32> to vector<16x128xf32>
    %434 = vector.extract_strided_slice %424 {offsets = [0, 128], sizes = [16, 128], strides = [1, 1]} : vector<16x384xf32> to vector<16x128xf32>
    %435 = arith.addf %433, %434 : vector<16x128xf32>
    %436 = arith.negf %435 : vector<16x128xf32>
    %437 = math.exp %436 : vector<16x128xf32>
    %cst_111 = arith.constant 1.000000e+00 : f32
    %438 = vector.broadcast %cst_111 : f32 to vector<16x128xf32>
    %439 = arith.addf %438, %437 : vector<16x128xf32>
    %440 = arith.divf %438, %439 : vector<16x128xf32>
    %441 = vector.extract_strided_slice %420 {offsets = [0, 256], sizes = [16, 128], strides = [1, 1]} : vector<16x384xf32> to vector<16x128xf32>
    %442 = vector.broadcast %334 : vector<1x128xf32> to vector<16x128xf32>
    %443 = arith.addf %441, %442 : vector<16x128xf32>
    %444 = vector.extract_strided_slice %424 {offsets = [0, 256], sizes = [16, 128], strides = [1, 1]} : vector<16x384xf32> to vector<16x128xf32>
    %445 = arith.mulf %432, %444 : vector<16x128xf32>
    %446 = arith.addf %443, %445 : vector<16x128xf32>
    %447 = math.tanh %446 : vector<16x128xf32>
    %cst_112 = arith.constant 1.000000e+00 : f32
    %448 = vector.broadcast %cst_112 : f32 to vector<16x128xf32>
    %449 = arith.subf %448, %440 : vector<16x128xf32>
    %450 = arith.mulf %449, %447 : vector<16x128xf32>
    %451 = arith.mulf %440, %412 : vector<16x128xf32>
    %452 = arith.addf %450, %451 : vector<16x128xf32>
    %453 = math.tanh %452 : vector<16x128xf32>
    %454 = arith.truncf %453 : vector<16x128xf32> to vector<16x128xbf16>
    %455 = arith.index_cast %418 : i32 to index
    %c0_113 = arith.constant 0 : index
    %456 = vector.load %arg15[%455, %c0_113] : memref<128x128xbf16, #tpu.memory_space<vmem>>, vector<16x128xbf16>
    tpu.vector_store %arg15[%455, %c0_113], %454 {strides = array<i32>} : memref<128x128xbf16, #tpu.memory_space<vmem>>, vector<16x128xbf16>,
    %c3_i32_114 = arith.constant 3 : i32
    %c16_i32_115 = arith.constant 16 : i32
    %457 = arith.muli %c3_i32_114, %c16_i32_115 : i32
    %458 = tpu.assume_multiple %457, 16 : i32
    %459 = arith.index_cast %458 : i32 to index
    %c0_116 = arith.constant 0 : index
    %460 = vector.load %arg16[%459, %c0_116] : memref<128x384xf32, #tpu.memory_space<vmem>>, vector<16x384xf32>
    %461 = arith.truncf %452 : vector<16x128xf32> to vector<16x128xbf16>
    %cst_117 = arith.constant dense<0.000000e+00> : vector<16x384xf32>
    %462 = tpu.matmul %461, %332, %cst_117 {dimension_numbers = #tpu.dot_dimension_numbers<[1], [0], [0], [1], [0, 0, 1, 1], [], []>} : vector<16x128xbf16>, vector<128x384xbf16>, vector<16x384xf32> -> vector<16x384xf32>
    %463 = vector.broadcast %333 : vector<1x384xf32> to vector<16x384xf32>
    %464 = arith.addf %462, %463 : vector<16x384xf32>
    %465 = vector.extract_strided_slice %460 {offsets = [0, 0], sizes = [16, 128], strides = [1, 1]} : vector<16x384xf32> to vector<16x128xf32>
    %466 = vector.extract_strided_slice %464 {offsets = [0, 0], sizes = [16, 128], strides = [1, 1]} : vector<16x384xf32> to vector<16x128xf32>
    %467 = arith.addf %465, %466 : vector<16x128xf32>
    %468 = arith.negf %467 : vector<16x128xf32>
    %469 = math.exp %468 : vector<16x128xf32>
    %cst_118 = arith.constant 1.000000e+00 : f32
    %470 = vector.broadcast %cst_118 : f32 to vector<16x128xf32>
    %471 = arith.addf %470, %469 : vector<16x128xf32>
    %472 = arith.divf %470, %471 : vector<16x128xf32>
    %473 = vector.extract_strided_slice %460 {offsets = [0, 128], sizes = [16, 128], strides = [1, 1]} : vector<16x384xf32> to vector<16x128xf32>
    %474 = vector.extract_strided_slice %464 {offsets = [0, 128], sizes = [16, 128], strides = [1, 1]} : vector<16x384xf32> to vector<16x128xf32>
    %475 = arith.addf %473, %474 : vector<16x128xf32>
    %476 = arith.negf %475 : vector<16x128xf32>
    %477 = math.exp %476 : vector<16x128xf32>
    %cst_119 = arith.constant 1.000000e+00 : f32
    %478 = vector.broadcast %cst_119 : f32 to vector<16x128xf32>
    %479 = arith.addf %478, %477 : vector<16x128xf32>
    %480 = arith.divf %478, %479 : vector<16x128xf32>
    %481 = vector.extract_strided_slice %460 {offsets = [0, 256], sizes = [16, 128], strides = [1, 1]} : vector<16x384xf32> to vector<16x128xf32>
    %482 = vector.broadcast %334 : vector<1x128xf32> to vector<16x128xf32>
    %483 = arith.addf %481, %482 : vector<16x128xf32>
    %484 = vector.extract_strided_slice %464 {offsets = [0, 256], sizes = [16, 128], strides = [1, 1]} : vector<16x384xf32> to vector<16x128xf32>
    %485 = arith.mulf %472, %484 : vector<16x128xf32>
    %486 = arith.addf %483, %485 : vector<16x128xf32>
    %487 = math.tanh %486 : vector<16x128xf32>
    %cst_120 = arith.constant 1.000000e+00 : f32
    %488 = vector.broadcast %cst_120 : f32 to vector<16x128xf32>
    %489 = arith.subf %488, %480 : vector<16x128xf32>
    %490 = arith.mulf %489, %487 : vector<16x128xf32>
    %491 = arith.mulf %480, %452 : vector<16x128xf32>
    %492 = arith.addf %490, %491 : vector<16x128xf32>
    %493 = math.tanh %492 : vector<16x128xf32>
    %494 = arith.truncf %493 : vector<16x128xf32> to vector<16x128xbf16>
    %495 = arith.index_cast %458 : i32 to index
    %c0_121 = arith.constant 0 : index
    %496 = vector.load %arg15[%495, %c0_121] : memref<128x128xbf16, #tpu.memory_space<vmem>>, vector<16x128xbf16>
    tpu.vector_store %arg15[%495, %c0_121], %494 {strides = array<i32>} : memref<128x128xbf16, #tpu.memory_space<vmem>>, vector<16x128xbf16>,
    %c4_i32_122 = arith.constant 4 : i32
    %c16_i32_123 = arith.constant 16 : i32
    %497 = arith.muli %c4_i32_122, %c16_i32_123 : i32
    %498 = tpu.assume_multiple %497, 16 : i32
    %499 = arith.index_cast %498 : i32 to index
    %c0_124 = arith.constant 0 : index
    %500 = vector.load %arg16[%499, %c0_124] : memref<128x384xf32, #tpu.memory_space<vmem>>, vector<16x384xf32>
    %501 = arith.truncf %492 : vector<16x128xf32> to vector<16x128xbf16>
    %cst_125 = arith.constant dense<0.000000e+00> : vector<16x384xf32>
    %502 = tpu.matmul %501, %332, %cst_125 {dimension_numbers = #tpu.dot_dimension_numbers<[1], [0], [0], [1], [0, 0, 1, 1], [], []>} : vector<16x128xbf16>, vector<128x384xbf16>, vector<16x384xf32> -> vector<16x384xf32>
    %503 = vector.broadcast %333 : vector<1x384xf32> to vector<16x384xf32>
    %504 = arith.addf %502, %503 : vector<16x384xf32>
    %505 = vector.extract_strided_slice %500 {offsets = [0, 0], sizes = [16, 128], strides = [1, 1]} : vector<16x384xf32> to vector<16x128xf32>
    %506 = vector.extract_strided_slice %504 {offsets = [0, 0], sizes = [16, 128], strides = [1, 1]} : vector<16x384xf32> to vector<16x128xf32>
    %507 = arith.addf %505, %506 : vector<16x128xf32>
    %508 = arith.negf %507 : vector<16x128xf32>
    %509 = math.exp %508 : vector<16x128xf32>
    %cst_126 = arith.constant 1.000000e+00 : f32
    %510 = vector.broadcast %cst_126 : f32 to vector<16x128xf32>
    %511 = arith.addf %510, %509 : vector<16x128xf32>
    %512 = arith.divf %510, %511 : vector<16x128xf32>
    %513 = vector.extract_strided_slice %500 {offsets = [0, 128], sizes = [16, 128], strides = [1, 1]} : vector<16x384xf32> to vector<16x128xf32>
    %514 = vector.extract_strided_slice %504 {offsets = [0, 128], sizes = [16, 128], strides = [1, 1]} : vector<16x384xf32> to vector<16x128xf32>
    %515 = arith.addf %513, %514 : vector<16x128xf32>
    %516 = arith.negf %515 : vector<16x128xf32>
    %517 = math.exp %516 : vector<16x128xf32>
    %cst_127 = arith.constant 1.000000e+00 : f32
    %518 = vector.broadcast %cst_127 : f32 to vector<16x128xf32>
    %519 = arith.addf %518, %517 : vector<16x128xf32>
    %520 = arith.divf %518, %519 : vector<16x128xf32>
    %521 = vector.extract_strided_slice %500 {offsets = [0, 256], sizes = [16, 128], strides = [1, 1]} : vector<16x384xf32> to vector<16x128xf32>
    %522 = vector.broadcast %334 : vector<1x128xf32> to vector<16x128xf32>
    %523 = arith.addf %521, %522 : vector<16x128xf32>
    %524 = vector.extract_strided_slice %504 {offsets = [0, 256], sizes = [16, 128], strides = [1, 1]} : vector<16x384xf32> to vector<16x128xf32>
    %525 = arith.mulf %512, %524 : vector<16x128xf32>
    %526 = arith.addf %523, %525 : vector<16x128xf32>
    %527 = math.tanh %526 : vector<16x128xf32>
    %cst_128 = arith.constant 1.000000e+00 : f32
    %528 = vector.broadcast %cst_128 : f32 to vector<16x128xf32>
    %529 = arith.subf %528, %520 : vector<16x128xf32>
    %530 = arith.mulf %529, %527 : vector<16x128xf32>
    %531 = arith.mulf %520, %492 : vector<16x128xf32>
    %532 = arith.addf %530, %531 : vector<16x128xf32>
    %533 = math.tanh %532 : vector<16x128xf32>
    %534 = arith.truncf %533 : vector<16x128xf32> to vector<16x128xbf16>
    %535 = arith.index_cast %498 : i32 to index
    %c0_129 = arith.constant 0 : index
    %536 = vector.load %arg15[%535, %c0_129] : memref<128x128xbf16, #tpu.memory_space<vmem>>, vector<16x128xbf16>
    tpu.vector_store %arg15[%535, %c0_129], %534 {strides = array<i32>} : memref<128x128xbf16, #tpu.memory_space<vmem>>, vector<16x128xbf16>,
    %c5_i32_130 = arith.constant 5 : i32
    %c16_i32_131 = arith.constant 16 : i32
    %537 = arith.muli %c5_i32_130, %c16_i32_131 : i32
    %538 = tpu.assume_multiple %537, 16 : i32
    %539 = arith.index_cast %538 : i32 to index
    %c0_132 = arith.constant 0 : index
    %540 = vector.load %arg16[%539, %c0_132] : memref<128x384xf32, #tpu.memory_space<vmem>>, vector<16x384xf32>
    %541 = arith.truncf %532 : vector<16x128xf32> to vector<16x128xbf16>
    %cst_133 = arith.constant dense<0.000000e+00> : vector<16x384xf32>
    %542 = tpu.matmul %541, %332, %cst_133 {dimension_numbers = #tpu.dot_dimension_numbers<[1], [0], [0], [1], [0, 0, 1, 1], [], []>} : vector<16x128xbf16>, vector<128x384xbf16>, vector<16x384xf32> -> vector<16x384xf32>
    %543 = vector.broadcast %333 : vector<1x384xf32> to vector<16x384xf32>
    %544 = arith.addf %542, %543 : vector<16x384xf32>
    %545 = vector.extract_strided_slice %540 {offsets = [0, 0], sizes = [16, 128], strides = [1, 1]} : vector<16x384xf32> to vector<16x128xf32>
    %546 = vector.extract_strided_slice %544 {offsets = [0, 0], sizes = [16, 128], strides = [1, 1]} : vector<16x384xf32> to vector<16x128xf32>
    %547 = arith.addf %545, %546 : vector<16x128xf32>
    %548 = arith.negf %547 : vector<16x128xf32>
    %549 = math.exp %548 : vector<16x128xf32>
    %cst_134 = arith.constant 1.000000e+00 : f32
    %550 = vector.broadcast %cst_134 : f32 to vector<16x128xf32>
    %551 = arith.addf %550, %549 : vector<16x128xf32>
    %552 = arith.divf %550, %551 : vector<16x128xf32>
    %553 = vector.extract_strided_slice %540 {offsets = [0, 128], sizes = [16, 128], strides = [1, 1]} : vector<16x384xf32> to vector<16x128xf32>
    %554 = vector.extract_strided_slice %544 {offsets = [0, 128], sizes = [16, 128], strides = [1, 1]} : vector<16x384xf32> to vector<16x128xf32>
    %555 = arith.addf %553, %554 : vector<16x128xf32>
    %556 = arith.negf %555 : vector<16x128xf32>
    %557 = math.exp %556 : vector<16x128xf32>
    %cst_135 = arith.constant 1.000000e+00 : f32
    %558 = vector.broadcast %cst_135 : f32 to vector<16x128xf32>
    %559 = arith.addf %558, %557 : vector<16x128xf32>
    %560 = arith.divf %558, %559 : vector<16x128xf32>
    %561 = vector.extract_strided_slice %540 {offsets = [0, 256], sizes = [16, 128], strides = [1, 1]} : vector<16x384xf32> to vector<16x128xf32>
    %562 = vector.broadcast %334 : vector<1x128xf32> to vector<16x128xf32>
    %563 = arith.addf %561, %562 : vector<16x128xf32>
    %564 = vector.extract_strided_slice %544 {offsets = [0, 256], sizes = [16, 128], strides = [1, 1]} : vector<16x384xf32> to vector<16x128xf32>
    %565 = arith.mulf %552, %564 : vector<16x128xf32>
    %566 = arith.addf %563, %565 : vector<16x128xf32>
    %567 = math.tanh %566 : vector<16x128xf32>
    %cst_136 = arith.constant 1.000000e+00 : f32
    %568 = vector.broadcast %cst_136 : f32 to vector<16x128xf32>
    %569 = arith.subf %568, %560 : vector<16x128xf32>
    %570 = arith.mulf %569, %567 : vector<16x128xf32>
    %571 = arith.mulf %560, %532 : vector<16x128xf32>
    %572 = arith.addf %570, %571 : vector<16x128xf32>
    %573 = math.tanh %572 : vector<16x128xf32>
    %574 = arith.truncf %573 : vector<16x128xf32> to vector<16x128xbf16>
    %575 = arith.index_cast %538 : i32 to index
    %c0_137 = arith.constant 0 : index
    %576 = vector.load %arg15[%575, %c0_137] : memref<128x128xbf16, #tpu.memory_space<vmem>>, vector<16x128xbf16>
    tpu.vector_store %arg15[%575, %c0_137], %574 {strides = array<i32>} : memref<128x128xbf16, #tpu.memory_space<vmem>>, vector<16x128xbf16>,
    %c6_i32_138 = arith.constant 6 : i32
    %c16_i32_139 = arith.constant 16 : i32
    %577 = arith.muli %c6_i32_138, %c16_i32_139 : i32
    %578 = tpu.assume_multiple %577, 16 : i32
    %579 = arith.index_cast %578 : i32 to index
    %c0_140 = arith.constant 0 : index
    %580 = vector.load %arg16[%579, %c0_140] : memref<128x384xf32, #tpu.memory_space<vmem>>, vector<16x384xf32>
    %581 = arith.truncf %572 : vector<16x128xf32> to vector<16x128xbf16>
    %cst_141 = arith.constant dense<0.000000e+00> : vector<16x384xf32>
    %582 = tpu.matmul %581, %332, %cst_141 {dimension_numbers = #tpu.dot_dimension_numbers<[1], [0], [0], [1], [0, 0, 1, 1], [], []>} : vector<16x128xbf16>, vector<128x384xbf16>, vector<16x384xf32> -> vector<16x384xf32>
    %583 = vector.broadcast %333 : vector<1x384xf32> to vector<16x384xf32>
    %584 = arith.addf %582, %583 : vector<16x384xf32>
    %585 = vector.extract_strided_slice %580 {offsets = [0, 0], sizes = [16, 128], strides = [1, 1]} : vector<16x384xf32> to vector<16x128xf32>
    %586 = vector.extract_strided_slice %584 {offsets = [0, 0], sizes = [16, 128], strides = [1, 1]} : vector<16x384xf32> to vector<16x128xf32>
    %587 = arith.addf %585, %586 : vector<16x128xf32>
    %588 = arith.negf %587 : vector<16x128xf32>
    %589 = math.exp %588 : vector<16x128xf32>
    %cst_142 = arith.constant 1.000000e+00 : f32
    %590 = vector.broadcast %cst_142 : f32 to vector<16x128xf32>
    %591 = arith.addf %590, %589 : vector<16x128xf32>
    %592 = arith.divf %590, %591 : vector<16x128xf32>
    %593 = vector.extract_strided_slice %580 {offsets = [0, 128], sizes = [16, 128], strides = [1, 1]} : vector<16x384xf32> to vector<16x128xf32>
    %594 = vector.extract_strided_slice %584 {offsets = [0, 128], sizes = [16, 128], strides = [1, 1]} : vector<16x384xf32> to vector<16x128xf32>
    %595 = arith.addf %593, %594 : vector<16x128xf32>
    %596 = arith.negf %595 : vector<16x128xf32>
    %597 = math.exp %596 : vector<16x128xf32>
    %cst_143 = arith.constant 1.000000e+00 : f32
    %598 = vector.broadcast %cst_143 : f32 to vector<16x128xf32>
    %599 = arith.addf %598, %597 : vector<16x128xf32>
    %600 = arith.divf %598, %599 : vector<16x128xf32>
    %601 = vector.extract_strided_slice %580 {offsets = [0, 256], sizes = [16, 128], strides = [1, 1]} : vector<16x384xf32> to vector<16x128xf32>
    %602 = vector.broadcast %334 : vector<1x128xf32> to vector<16x128xf32>
    %603 = arith.addf %601, %602 : vector<16x128xf32>
    %604 = vector.extract_strided_slice %584 {offsets = [0, 256], sizes = [16, 128], strides = [1, 1]} : vector<16x384xf32> to vector<16x128xf32>
    %605 = arith.mulf %592, %604 : vector<16x128xf32>
    %606 = arith.addf %603, %605 : vector<16x128xf32>
    %607 = math.tanh %606 : vector<16x128xf32>
    %cst_144 = arith.constant 1.000000e+00 : f32
    %608 = vector.broadcast %cst_144 : f32 to vector<16x128xf32>
    %609 = arith.subf %608, %600 : vector<16x128xf32>
    %610 = arith.mulf %609, %607 : vector<16x128xf32>
    %611 = arith.mulf %600, %572 : vector<16x128xf32>
    %612 = arith.addf %610, %611 : vector<16x128xf32>
    %613 = math.tanh %612 : vector<16x128xf32>
    %614 = arith.truncf %613 : vector<16x128xf32> to vector<16x128xbf16>
    %615 = arith.index_cast %578 : i32 to index
    %c0_145 = arith.constant 0 : index
    %616 = vector.load %arg15[%615, %c0_145] : memref<128x128xbf16, #tpu.memory_space<vmem>>, vector<16x128xbf16>
    tpu.vector_store %arg15[%615, %c0_145], %614 {strides = array<i32>} : memref<128x128xbf16, #tpu.memory_space<vmem>>, vector<16x128xbf16>,
    %c7_i32_146 = arith.constant 7 : i32
    %c16_i32_147 = arith.constant 16 : i32
    %617 = arith.muli %c7_i32_146, %c16_i32_147 : i32
    %618 = tpu.assume_multiple %617, 16 : i32
    %619 = arith.index_cast %618 : i32 to index
    %c0_148 = arith.constant 0 : index
    %620 = vector.load %arg16[%619, %c0_148] : memref<128x384xf32, #tpu.memory_space<vmem>>, vector<16x384xf32>
    %621 = arith.truncf %612 : vector<16x128xf32> to vector<16x128xbf16>
    %cst_149 = arith.constant dense<0.000000e+00> : vector<16x384xf32>
    %622 = tpu.matmul %621, %332, %cst_149 {dimension_numbers = #tpu.dot_dimension_numbers<[1], [0], [0], [1], [0, 0, 1, 1], [], []>} : vector<16x128xbf16>, vector<128x384xbf16>, vector<16x384xf32> -> vector<16x384xf32>
    %623 = vector.broadcast %333 : vector<1x384xf32> to vector<16x384xf32>
    %624 = arith.addf %622, %623 : vector<16x384xf32>
    %625 = vector.extract_strided_slice %620 {offsets = [0, 0], sizes = [16, 128], strides = [1, 1]} : vector<16x384xf32> to vector<16x128xf32>
    %626 = vector.extract_strided_slice %624 {offsets = [0, 0], sizes = [16, 128], strides = [1, 1]} : vector<16x384xf32> to vector<16x128xf32>
    %627 = arith.addf %625, %626 : vector<16x128xf32>
    %628 = arith.negf %627 : vector<16x128xf32>
    %629 = math.exp %628 : vector<16x128xf32>
    %cst_150 = arith.constant 1.000000e+00 : f32
    %630 = vector.broadcast %cst_150 : f32 to vector<16x128xf32>
    %631 = arith.addf %630, %629 : vector<16x128xf32>
    %632 = arith.divf %630, %631 : vector<16x128xf32>
    %633 = vector.extract_strided_slice %620 {offsets = [0, 128], sizes = [16, 128], strides = [1, 1]} : vector<16x384xf32> to vector<16x128xf32>
    %634 = vector.extract_strided_slice %624 {offsets = [0, 128], sizes = [16, 128], strides = [1, 1]} : vector<16x384xf32> to vector<16x128xf32>
    %635 = arith.addf %633, %634 : vector<16x128xf32>
    %636 = arith.negf %635 : vector<16x128xf32>
    %637 = math.exp %636 : vector<16x128xf32>
    %cst_151 = arith.constant 1.000000e+00 : f32
    %638 = vector.broadcast %cst_151 : f32 to vector<16x128xf32>
    %639 = arith.addf %638, %637 : vector<16x128xf32>
    %640 = arith.divf %638, %639 : vector<16x128xf32>
    %641 = vector.extract_strided_slice %620 {offsets = [0, 256], sizes = [16, 128], strides = [1, 1]} : vector<16x384xf32> to vector<16x128xf32>
    %642 = vector.broadcast %334 : vector<1x128xf32> to vector<16x128xf32>
    %643 = arith.addf %641, %642 : vector<16x128xf32>
    %644 = vector.extract_strided_slice %624 {offsets = [0, 256], sizes = [16, 128], strides = [1, 1]} : vector<16x384xf32> to vector<16x128xf32>
    %645 = arith.mulf %632, %644 : vector<16x128xf32>
    %646 = arith.addf %643, %645 : vector<16x128xf32>
    %647 = math.tanh %646 : vector<16x128xf32>
    %cst_152 = arith.constant 1.000000e+00 : f32
    %648 = vector.broadcast %cst_152 : f32 to vector<16x128xf32>
    %649 = arith.subf %648, %640 : vector<16x128xf32>
    %650 = arith.mulf %649, %647 : vector<16x128xf32>
    %651 = arith.mulf %640, %612 : vector<16x128xf32>
    %652 = arith.addf %650, %651 : vector<16x128xf32>
    %653 = math.tanh %652 : vector<16x128xf32>
    %654 = arith.truncf %653 : vector<16x128xf32> to vector<16x128xbf16>
    %655 = arith.index_cast %618 : i32 to index
    %c0_153 = arith.constant 0 : index
    %656 = vector.load %arg15[%655, %c0_153] : memref<128x128xbf16, #tpu.memory_space<vmem>>, vector<16x128xbf16>
    tpu.vector_store %arg15[%655, %c0_153], %654 {strides = array<i32>} : memref<128x128xbf16, #tpu.memory_space<vmem>>, vector<16x128xbf16>,
    %c8_i32_154 = arith.constant 8 : i32
    %c1_155 = arith.constant 1 : index
    %c0_156 = arith.constant 0 : index
    %c0_157 = arith.constant 0 : index
    %657 = vector.load %arg14[%c1_155, %c0_156, %c0_157] : memref<2x16x128xf32, #tpu.memory_space<vmem>>, vector<1x16x128xf32>
    %658 = vector.shape_cast %657 : vector<1x16x128xf32> to vector<16x128xf32>
    %659 = vector.shape_cast %652 : vector<16x128xf32> to vector<1x16x128xf32>
    tpu.vector_store %arg14[%c1_155, %c0_156, %c0_157], %659 {strides = array<i32>} : memref<2x16x128xf32, #tpu.memory_space<vmem>>, vector<1x16x128xf32>,
    %c0_158 = arith.constant 0 : index
    %c0_159 = arith.constant 0 : index
    %660 = vector.load %arg15[%c0_158, %c0_159] : memref<128x128xbf16, #tpu.memory_space<vmem>>, vector<128x128xbf16>
    %c0_160 = arith.constant 0 : index
    %c0_161 = arith.constant 0 : index
    %661 = vector.load %arg11[%c0_160, %c0_161] : memref<128x128xbf16, #tpu.memory_space<vmem>>, vector<128x128xbf16>
    %cst_162 = arith.constant dense<0.000000e+00> : vector<128x128xf32>
    %662 = tpu.matmul %660, %661, %cst_162 {dimension_numbers = #tpu.dot_dimension_numbers<[1], [0], [0], [1], [0, 0, 1, 1], [], []>} : vector<128x128xbf16>, vector<128x128xbf16>, vector<128x128xf32> -> vector<128x128xf32>
    %c0_163 = arith.constant 0 : index
    %c0_164 = arith.constant 0 : index
    %663 = vector.load %arg12[%c0_163, %c0_164] : memref<1x128xf32, #tpu.memory_space<vmem>>, vector<1x128xf32>
    %664 = vector.broadcast %663 : vector<1x128xf32> to vector<128x128xf32>
    %665 = arith.addf %662, %664 : vector<128x128xf32>
    %666 = vector.shape_cast %665 : vector<128x128xf32> to vector<8x16x128xf32>
    %c0_165 = arith.constant 0 : index
    %c0_166 = arith.constant 0 : index
    %c0_167 = arith.constant 0 : index
    %667 = vector.load %arg13[%c0_165, %c0_166, %c0_167] : memref<8x16x128xf32, #tpu.memory_space<vmem>>, vector<8x16x128xf32>
    tpu.vector_store %arg13[%c0_165, %c0_166, %c0_167], %666 {strides = array<i32>} : memref<8x16x128xf32, #tpu.memory_space<vmem>>, vector<8x16x128xf32>,
    return
  }
  func.func @transform_0(%arg0: i32, %arg1: i32) -> (i32, i32, i32) {
    %c0_i32 = arith.constant 0 : i32
    %c0_i32_0 = arith.constant 0 : i32
    return %arg1, %arg0, %c0_i32 : i32, i32, i32
  }
  func.func @transform_1(%arg0: i32, %arg1: i32) -> (i32, i32) {
    %c0_i32 = arith.constant 0 : i32
    %c0_i32_0 = arith.constant 0 : i32
    %c0_i32_1 = arith.constant 0 : i32
    return %c0_i32, %c0_i32_0 : i32, i32
  }
  func.func @transform_2(%arg0: i32, %arg1: i32) -> (i32, i32) {
    %c0_i32 = arith.constant 0 : i32
    %c0_i32_0 = arith.constant 0 : i32
    %c0_i32_1 = arith.constant 0 : i32
    return %c0_i32, %c0_i32_0 : i32, i32
  }
  func.func @transform_3(%arg0: i32, %arg1: i32) -> (i32, i32) {
    %c0_i32 = arith.constant 0 : i32
    %c0_i32_0 = arith.constant 0 : i32
    %c0_i32_1 = arith.constant 0 : i32
    return %c0_i32, %c0_i32_0 : i32, i32
  }
  func.func @transform_4(%arg0: i32, %arg1: i32) -> (i32, i32) {
    %c0_i32 = arith.constant 0 : i32
    %c0_i32_0 = arith.constant 0 : i32
    %c0_i32_1 = arith.constant 0 : i32
    return %c0_i32, %c0_i32_0 : i32, i32
  }
  func.func @transform_5(%arg0: i32, %arg1: i32) -> (i32, i32) {
    %c0_i32 = arith.constant 0 : i32
    %c0_i32_0 = arith.constant 0 : i32
    %c0_i32_1 = arith.constant 0 : i32
    return %c0_i32, %c0_i32_0 : i32, i32
  }
  func.func @transform_6(%arg0: i32, %arg1: i32) -> (i32, i32) {
    %c0_i32 = arith.constant 0 : i32
    %c0_i32_0 = arith.constant 0 : i32
    %c0_i32_1 = arith.constant 0 : i32
    return %c0_i32, %c0_i32_0 : i32, i32
  }
  func.func @transform_7(%arg0: i32, %arg1: i32) -> (i32, i32) {
    %c0_i32 = arith.constant 0 : i32
    %c0_i32_0 = arith.constant 0 : i32
    %c0_i32_1 = arith.constant 0 : i32
    return %c0_i32, %c0_i32_0 : i32, i32
  }
  func.func @transform_8(%arg0: i32, %arg1: i32) -> (i32, i32) {
    %c0_i32 = arith.constant 0 : i32
    %c0_i32_0 = arith.constant 0 : i32
    %c0_i32_1 = arith.constant 0 : i32
    return %c0_i32, %c0_i32_0 : i32, i32
  }
  func.func @transform_9(%arg0: i32, %arg1: i32) -> (i32, i32) {
    %c0_i32 = arith.constant 0 : i32
    %c0_i32_0 = arith.constant 0 : i32
    %c0_i32_1 = arith.constant 0 : i32
    return %c0_i32, %c0_i32_0 : i32, i32
  }
  func.func @transform_10(%arg0: i32, %arg1: i32) -> (i32, i32) {
    %c0_i32 = arith.constant 0 : i32
    %c0_i32_0 = arith.constant 0 : i32
    %c0_i32_1 = arith.constant 0 : i32
    return %c0_i32, %c0_i32_0 : i32, i32
  }
  func.func @transform_11(%arg0: i32, %arg1: i32) -> (i32, i32, i32) {
    %c0_i32 = arith.constant 0 : i32
    %c0_i32_0 = arith.constant 0 : i32
    return %arg1, %arg0, %c0_i32 : i32, i32, i32
  }
}

</mosaic_0001>

<llo_original>
// kernel: tpu_custom_call.1
$region0: #{tpu_custom_call.1}
  #allocation0 [shape = 'u32[]', space=smem, size = 0x4, offset = 0x4, fixed_abs, tag = 'smem constant byte address 0x4 - core index']
  #allocation1 [shape = 'u32[144,128]{1,0:T(1,128)}', space=vmem, size = 0x12000, scoped, tag = 'internal scratch']
  #allocation2 [shape = 'f32[2,16,128]{2,1,0:T(8,128)}', space=vmem, size = 0x4000, scoped, tag = 'scratch operand']
  #allocation3 [shape = 'bf16[128,128]{1,0:T(16,128)(2,1)}', space=vmem, size = 0x8000, scoped, tag = 'scratch operand']
  #allocation4 [shape = 'f32[128,384]{1,0:T(8,128)}', space=vmem, size = 0x30000, scoped, tag = 'scratch operand']
  %s0 = inlined_call_operand.hbm [shape: bf16[8,16,128], index: 0, kind: input, shape index: {}]
  %s1 = inlined_call_operand.hbm [shape: bf16[128,384], index: 1, kind: input, shape index: {}]
  %s2 = inlined_call_operand.hbm [shape: bf16[128,384], index: 2, kind: input, shape index: {}]
  %s3 = inlined_call_operand.vmem [shape: f32[1,384], index: 3, kind: input, shape index: {}]
  %s4 = inlined_call_operand.vmem [shape: f32[1,128], index: 4, kind: input, shape index: {}]
  %s5 = inlined_call_operand.hbm [shape: bf16[128,384], index: 5, kind: input, shape index: {}]
  %s6 = inlined_call_operand.hbm [shape: bf16[128,384], index: 6, kind: input, shape index: {}]
  %s7 = inlined_call_operand.vmem [shape: f32[1,384], index: 7, kind: input, shape index: {}]
  %s8 = inlined_call_operand.vmem [shape: f32[1,128], index: 8, kind: input, shape index: {}]
  %s9 = inlined_call_operand.hbm [shape: bf16[128,128], index: 9, kind: input, shape index: {}]
  %s10 = inlined_call_operand.vmem [shape: f32[1,128], index: 10, kind: input, shape index: {}]
  %s11 = inlined_call_operand.hbm [shape: f32[8,16,128], index: 11, kind: output, shape index: {}]
  %s12 = sld [smem:[#allocation0]]
  $region82: #{tpu_custom_call.1} parent=0
    _
  %s14 = ssub.s32 1, %s12
  %s15 = scalar_select 0, %s14, %s12
  $region1: #{tpu_custom_call.1} parent=0
    #allocation5 [shape = 'u8[32768]{0}', space=vmem, size = 0x8000, scoped, tag = 'input window, operand 0, single buffered']
    #allocation6 [shape = 's32[1]{0}', space=sflag, size = 0x4, scoped, tag = 'scoped memory for tpu_custom_call.1']
    #allocation7 [shape = 's32[1]{0}', space=sflag, size = 0x4, scoped, tag = 'scoped memory for tpu_custom_call.1']
    #allocation8 [shape = 'u8[98304]{0}', space=vmem, size = 0x18000, scoped, tag = 'input window, operand 1, single buffered']
    #allocation9 [shape = 's32[1]{0}', space=sflag, size = 0x4, scoped, tag = 'scoped memory for tpu_custom_call.1']
    #allocation10 [shape = 'u8[98304]{0}', space=vmem, size = 0x18000, scoped, tag = 'input window, operand 2, single buffered']
    #allocation11 [shape = 'u8[98304]{0}', space=vmem, size = 0x18000, scoped, tag = 'input window, operand 5, single buffered']
    #allocation12 [shape = 's32[1]{0}', space=sflag, size = 0x4, scoped, tag = 'scoped memory for tpu_custom_call.1']
    #allocation13 [shape = 'u8[98304]{0}', space=vmem, size = 0x18000, scoped, tag = 'input window, operand 6, single buffered']
    #allocation14 [shape = 'u8[32768]{0}', space=vmem, size = 0x8000, scoped, tag = 'input window, operand 9, single buffered']
    #allocation15 [shape = 's32[1]{0}', space=sflag, size = 0x4, scoped, tag = 'scoped memory for tpu_custom_call.1']
    #allocation16 [shape = 'u8[65536]{0}', space=vmem, size = 0x10000, scoped, tag = 'output window, operand 0, single buffered']
    %16 = vsyncpa [#allocation6], 0
    %17 = vsyncpa [#allocation9], 0
    %18 = vsyncpa [#allocation12], 0
    %19 = vsyncpa [#allocation15], 0
    %20 = vsyncpa [#allocation7], 0
    // Predicated region
    $region2: #{tpu_custom_call.1} parent=1 // pred_check
      _
    $region3: #{tpu_custom_call.1} parent=1 // pred_check_branch
      %22 = sbr.rel (0) target = $region5
    $region4: #{tpu_custom_call.1} parent=1 // pred_region
      %s24 = ssub.s32 1024, 1024
      %25 = vsyncadd [#allocation6], %s24
      %s26 = sshll.u32 [#allocation5], 4
      %s27 = int_to_ptr.vmem [resolvable:$true] %s26
      %32 = dma.hbm_to_vmem [thread:$0]  %s0, 1024, %s27, [#allocation6], 64, 64, 4
    $region5: #{tpu_custom_call.1} parent=1 // pred_fallthru
      _
    // Predicated region
    $region6: #{tpu_custom_call.1} parent=1 // pred_check
      _
    $region7: #{tpu_custom_call.1} parent=1 // pred_check_branch
      %34 = sbr.rel (0) target = $region9
    $region8: #{tpu_custom_call.1} parent=1 // pred_region
      %s36 = ssub.s32 3072, 3072
      %37 = vsyncadd [#allocation9], %s36
      %s38 = sshll.u32 [#allocation8], 4
      %s39 = int_to_ptr.vmem [resolvable:$true] %s38
      %44 = dma.hbm_to_vmem [thread:$0]  %s1, 3072, %s39, [#allocation9], 192, 192, 12
    $region9: #{tpu_custom_call.1} parent=1 // pred_fallthru
      _
    // Predicated region
    $region10: #{tpu_custom_call.1} parent=1 // pred_check
      _
    $region11: #{tpu_custom_call.1} parent=1 // pred_check_branch
      %46 = sbr.rel (0) target = $region13
    $region12: #{tpu_custom_call.1} parent=1 // pred_region
      %s48 = ssub.s32 3072, 3072
      %49 = vsyncadd [#allocation9], %s48
      %s50 = sshll.u32 [#allocation10], 4
      %s51 = int_to_ptr.vmem [resolvable:$true] %s50
      %56 = dma.hbm_to_vmem [thread:$0]  %s2, 3072, %s51, [#allocation9], 192, 192, 12
    $region13: #{tpu_custom_call.1} parent=1 // pred_fallthru
      _
    // Predicated region
    $region14: #{tpu_custom_call.1} parent=1 // pred_check
      _
    $region15: #{tpu_custom_call.1} parent=1 // pred_check_branch
      %58 = sbr.rel (0) target = $region17
    $region16: #{tpu_custom_call.1} parent=1 // pred_region
      _
    $region17: #{tpu_custom_call.1} parent=1 // pred_fallthru
      _
    // Predicated region
    $region18: #{tpu_custom_call.1} parent=1 // pred_check
      _
    $region19: #{tpu_custom_call.1} parent=1 // pred_check_branch
      %60 = sbr.rel (0) target = $region21
    $region20: #{tpu_custom_call.1} parent=1 // pred_region
      _
    $region21: #{tpu_custom_call.1} parent=1 // pred_fallthru
      _
    // Predicated region
    $region22: #{tpu_custom_call.1} parent=1 // pred_check
      _
    $region23: #{tpu_custom_call.1} parent=1 // pred_check_branch
      %62 = sbr.rel (0) target = $region25
    $region24: #{tpu_custom_call.1} parent=1 // pred_region
      %s64 = ssub.s32 3072, 3072
      %65 = vsyncadd [#allocation12], %s64
      %s66 = sshll.u32 [#allocation11], 4
      %s67 = int_to_ptr.vmem [resolvable:$true] %s66
      %72 = dma.hbm_to_vmem [thread:$0]  %s5, 3072, %s67, [#allocation12], 192, 192, 12
    $region25: #{tpu_custom_call.1} parent=1 // pred_fallthru
      _
    // Predicated region
    $region26: #{tpu_custom_call.1} parent=1 // pred_check
      _
    $region27: #{tpu_custom_call.1} parent=1 // pred_check_branch
      %74 = sbr.rel (0) target = $region29
    $region28: #{tpu_custom_call.1} parent=1 // pred_region
      %s76 = ssub.s32 3072, 3072
      %77 = vsyncadd [#allocation12], %s76
      %s78 = sshll.u32 [#allocation13], 4
      %s79 = int_to_ptr.vmem [resolvable:$true] %s78
      %84 = dma.hbm_to_vmem [thread:$0]  %s6, 3072, %s79, [#allocation12], 192, 192, 12
    $region29: #{tpu_custom_call.1} parent=1 // pred_fallthru
      _
    // Predicated region
    $region30: #{tpu_custom_call.1} parent=1 // pred_check
      _
    $region31: #{tpu_custom_call.1} parent=1 // pred_check_branch
      %86 = sbr.rel (0) target = $region33
    $region32: #{tpu_custom_call.1} parent=1 // pred_region
      _
    $region33: #{tpu_custom_call.1} parent=1 // pred_fallthru
      _
    // Predicated region
    $region34: #{tpu_custom_call.1} parent=1 // pred_check
      _
    $region35: #{tpu_custom_call.1} parent=1 // pred_check_branch
      %88 = sbr.rel (0) target = $region37
    $region36: #{tpu_custom_call.1} parent=1 // pred_region
      _
    $region37: #{tpu_custom_call.1} parent=1 // pred_fallthru
      _
    // Predicated region
    $region38: #{tpu_custom_call.1} parent=1 // pred_check
      _
    $region39: #{tpu_custom_call.1} parent=1 // pred_check_branch
      %90 = sbr.rel (0) target = $region41
    $region40: #{tpu_custom_call.1} parent=1 // pred_region
      %s92 = ssub.s32 1024, 1024
      %93 = vsyncadd [#allocation15], %s92
      %s94 = sshll.u32 [#allocation14], 4
      %s95 = int_to_ptr.vmem [resolvable:$true] %s94
      %100 = dma.hbm_to_vmem [thread:$0]  %s9, 1024, %s95, [#allocation15], 64, 64, 4
    $region41: #{tpu_custom_call.1} parent=1 // pred_fallthru
      _
    // Predicated region
    $region42: #{tpu_custom_call.1} parent=1 // pred_check
      _
    $region43: #{tpu_custom_call.1} parent=1 // pred_check_branch
      %102 = sbr.rel (0) target = $region45
    $region44: #{tpu_custom_call.1} parent=1 // pred_region
      _
    $region45: #{tpu_custom_call.1} parent=1 // pred_fallthru
      _
    // Predicated region
    $region46: #{tpu_custom_call.1} parent=1 // pred_check
      _
    $region47: #{tpu_custom_call.1} parent=1 // pred_check_branch
      %104 = sbr.rel (0) target = $region49
    $region48: #{tpu_custom_call.1} parent=1 // pred_region
      %105 = dma.done [#allocation6], 1024
    $region49: #{tpu_custom_call.1} parent=1 // pred_fallthru
      _
    // Predicated region
    $region50: #{tpu_custom_call.1} parent=1 // pred_check
      _
    $region51: #{tpu_custom_call.1} parent=1 // pred_check_branch
      %107 = sbr.rel (0) target = $region53
    $region52: #{tpu_custom_call.1} parent=1 // pred_region
      %108 = dma.done [#allocation9], 3072
    $region53: #{tpu_custom_call.1} parent=1 // pred_fallthru
      _
    // Predicated region
    $region54: #{tpu_custom_call.1} parent=1 // pred_check
      _
    $region55: #{tpu_custom_call.1} parent=1 // pred_check_branch
      %110 = sbr.rel (0) target = $region57
    $region56: #{tpu_custom_call.1} parent=1 // pred_region
      %111 = dma.done [#allocation9], 3072
    $region57: #{tpu_custom_call.1} parent=1 // pred_fallthru
      _
    // Predicated region
    $region58: #{tpu_custom_call.1} parent=1 // pred_check
      _
    $region59: #{tpu_custom_call.1} parent=1 // pred_check_branch
      %113 = sbr.rel (0) target = $region61
    $region60: #{tpu_custom_call.1} parent=1 // pred_region
      %114 = dma.done [#allocation12], 3072
    $region61: #{tpu_custom_call.1} parent=1 // pred_fallthru
      _
    // Predicated region
    $region62: #{tpu_custom_call.1} parent=1 // pred_check
      _
    $region63: #{tpu_custom_call.1} parent=1 // pred_check_branch
      %116 = sbr.rel (0) target = $region65
    $region64: #{tpu_custom_call.1} parent=1 // pred_region
      %117 = dma.done [#allocation12], 3072
    $region65: #{tpu_custom_call.1} parent=1 // pred_fallthru
      _
    // Predicated region
    $region66: #{tpu_custom_call.1} parent=1 // pred_check
      _
    $region67: #{tpu_custom_call.1} parent=1 // pred_check_branch
      %119 = sbr.rel (0) target = $region69
    $region68: #{tpu_custom_call.1} parent=1 // pred_region
      %120 = dma.done [#allocation15], 1024
    $region69: #{tpu_custom_call.1} parent=1 // pred_fallthru
      _
    %p122 = scmp.eq.s32.totalorder 0, 0
    // Predicated region
    $region70: #{tpu_custom_call.1} parent=1 // pred_check
      %p123 = pneg %p122
    $region71: #{tpu_custom_call.1} parent=1 // pred_check_branch
      %125 = sbr.rel (%p123) target = $region73
    $region72: #{tpu_custom_call.1} parent=1 // pred_region
      %126 = vst [vmem:[#allocation2] sm:$0xff] 0.0
      %127 = vst [vmem:[#allocation2 + $0x8] sm:$0xff] 0.0
      %128 = vst [vmem:[#allocation2 + $0x10] sm:$0xff] 0.0
      %129 = vst [vmem:[#allocation2 + $0x18] sm:$0xff] 0.0
    $region73: #{tpu_custom_call.1} parent=1 // pred_fallthru
      _
    %v130 = vld [vmem:[#allocation5] sm:$0xf]
    %v131 = vld [vmem:[#allocation5 + $0x4] sm:$0xf]
    %v132 = vld [vmem:[#allocation5 + $0x8] sm:$0xf]
    %v133 = vld [vmem:[#allocation5 + $0xc] sm:$0xf]
    %v134 = vld [vmem:[#allocation5 + $0x10] sm:$0xf]
    %v135 = vld [vmem:[#allocation5 + $0x14] sm:$0xf]
    %v136 = vld [vmem:[#allocation5 + $0x18] sm:$0xf]
    %v137 = vld [vmem:[#allocation5 + $0x1c] sm:$0xf]
    %v138 = vld [vmem:[#allocation5 + $0x20] sm:$0xf]
    %v139 = vld [vmem:[#allocation5 + $0x24] sm:$0xf]
    %v140 = vld [vmem:[#allocation5 + $0x28] sm:$0xf]
    %v141 = vld [vmem:[#allocation5 + $0x2c] sm:$0xf]
    %v142 = vld [vmem:[#allocation5 + $0x30] sm:$0xf]
    %v143 = vld [vmem:[#allocation5 + $0x34] sm:$0xf]
    %v144 = vld [vmem:[#allocation5 + $0x38] sm:$0xf]
    %v145 = vld [vmem:[#allocation5 + $0x3c] sm:$0xf]
    %v146 = vld [vmem:[#allocation8] sm:$0xff]
    %v147 = vld [vmem:[#allocation8 + $0x8] sm:$0xf]
    %v148 = vld [vmem:[#allocation8 + $0xc] sm:$0xff]
    %v149 = vld [vmem:[#allocation8 + $0x14] sm:$0xf]
    %v150 = vld [vmem:[#allocation8 + $0x18] sm:$0xff]
    %v151 = vld [vmem:[#allocation8 + $0x20] sm:$0xf]
    %v152 = vld [vmem:[#allocation8 + $0x24] sm:$0xff]
    %v153 = vld [vmem:[#allocation8 + $0x2c] sm:$0xf]
    %v154 = vld [vmem:[#allocation8 + $0x30] sm:$0xff]
    %v155 = vld [vmem:[#allocation8 + $0x38] sm:$0xf]
    %v156 = vld [vmem:[#allocation8 + $0x3c] sm:$0xff]
    %v157 = vld [vmem:[#allocation8 + $0x44] sm:$0xf]
    %v158 = vld [vmem:[#allocation8 + $0x48] sm:$0xff]
    %v159 = vld [vmem:[#allocation8 + $0x50] sm:$0xf]
    %v160 = vld [vmem:[#allocation8 + $0x54] sm:$0xff]
    %v161 = vld [vmem:[#allocation8 + $0x5c] sm:$0xf]
    %v162 = vld [vmem:[#allocation8 + $0x60] sm:$0xff]
    %v163 = vld [vmem:[#allocation8 + $0x68] sm:$0xf]
    %v164 = vld [vmem:[#allocation8 + $0x6c] sm:$0xff]
    %v165 = vld [vmem:[#allocation8 + $0x74] sm:$0xf]
    %v166 = vld [vmem:[#allocation8 + $0x78] sm:$0xff]
    %v167 = vld [vmem:[#allocation8 + $0x80] sm:$0xf]
    %v168 = vld [vmem:[#allocation8 + $0x84] sm:$0xff]
    %v169 = vld [vmem:[#allocation8 + $0x8c] sm:$0xf]
    %v170 = vld [vmem:[#allocation8 + $0x90] sm:$0xff]
    %v171 = vld [vmem:[#allocation8 + $0x98] sm:$0xf]
    %v172 = vld [vmem:[#allocation8 + $0x9c] sm:$0xff]
    %v173 = vld [vmem:[#allocation8 + $0xa4] sm:$0xf]
    %v174 = vld [vmem:[#allocation8 + $0xa8] sm:$0xff]
    %v175 = vld [vmem:[#allocation8 + $0xb0] sm:$0xf]
    %v176 = vld [vmem:[#allocation8 + $0xb4] sm:$0xff]
    %v177 = vld [vmem:[#allocation8 + $0xbc] sm:$0xf]
    %v194 = vunpack.c.l.b16 %v130
    %v195 = vunpack.c.l.b16 %v131
    %v196 = vunpack.c.l.b16 %v132
    %v197 = vunpack.c.l.b16 %v133
    %v198 = vunpack.c.l.b16 %v134
    %v199 = vunpack.c.l.b16 %v135
    %v200 = vunpack.c.l.b16 %v136
    %v201 = vunpack.c.l.b16 %v137
    %v202 = vunpack.c.l.b16 %v138
    %v203 = vunpack.c.l.b16 %v139
    %v204 = vunpack.c.l.b16 %v140
    %v205 = vunpack.c.l.b16 %v141
    %v206 = vunpack.c.l.b16 %v142
    %v207 = vunpack.c.l.b16 %v143
    %v208 = vunpack.c.l.b16 %v144
    %v209 = vunpack.c.l.b16 %v145
    %v210 = vpack.c.b16 %v195, %v194
    %v211 = vpack.c.b16 %v197, %v196
    %v212 = vpack.c.b16 %v199, %v198
    %v213 = vpack.c.b16 %v201, %v200
    %v214 = vpack.c.b16 %v203, %v202
    %v215 = vpack.c.b16 %v205, %v204
    %v216 = vpack.c.b16 %v207, %v206
    %v217 = vpack.c.b16 %v209, %v208
    %v258 = vunpack.c.l.b16 %v146
    %v259 = vunpack.c.h.b16 %v146
    %v260 = vunpack.c.l.b16 %v147
    %v261 = vunpack.c.l.b16 %v148
    %v262 = vunpack.c.h.b16 %v148
    %v263 = vunpack.c.l.b16 %v149
    %v264 = vunpack.c.l.b16 %v150
    %v265 = vunpack.c.h.b16 %v150
    %v266 = vunpack.c.l.b16 %v151
    %v267 = vunpack.c.l.b16 %v152
    %v268 = vunpack.c.h.b16 %v152
    %v269 = vunpack.c.l.b16 %v153
    %v270 = vunpack.c.l.b16 %v154
    %v271 = vunpack.c.h.b16 %v154
    %v272 = vunpack.c.l.b16 %v155
    %v273 = vunpack.c.l.b16 %v156
    %v274 = vunpack.c.h.b16 %v156
    %v275 = vunpack.c.l.b16 %v157
    %v276 = vunpack.c.l.b16 %v158
    %v277 = vunpack.c.h.b16 %v158
    %v278 = vunpack.c.l.b16 %v159
    %v279 = vunpack.c.l.b16 %v160
    %v280 = vunpack.c.h.b16 %v160
    %v281 = vunpack.c.l.b16 %v161
    %v282 = vunpack.c.l.b16 %v162
    %v283 = vunpack.c.h.b16 %v162
    %v284 = vunpack.c.l.b16 %v163
    %v285 = vunpack.c.l.b16 %v164
    %v286 = vunpack.c.h.b16 %v164
    %v287 = vunpack.c.l.b16 %v165
    %v288 = vunpack.c.l.b16 %v166
    %v289 = vunpack.c.h.b16 %v166
    %v290 = vunpack.c.l.b16 %v167
    %v291 = vunpack.c.l.b16 %v168
    %v292 = vunpack.c.h.b16 %v168
    %v293 = vunpack.c.l.b16 %v169
    %v294 = vunpack.c.l.b16 %v170
    %v295 = vunpack.c.h.b16 %v170
    %v296 = vunpack.c.l.b16 %v171
    %v297 = vunpack.c.l.b16 %v172
    %v298 = vunpack.c.h.b16 %v172
    %v299 = vunpack.c.l.b16 %v173
    %v300 = vunpack.c.l.b16 %v174
    %v301 = vunpack.c.h.b16 %v174
    %v302 = vunpack.c.l.b16 %v175
    %v303 = vunpack.c.l.b16 %v176
    %v304 = vunpack.c.h.b16 %v176
    %v305 = vunpack.c.l.b16 %v177
    %v306 = vpack.c.b16 %v261, %v258
    %v307 = vpack.c.b16 %v262, %v259
    %v308 = vpack.c.b16 %v263, %v260
    %v309 = vpack.c.b16 %v267, %v264
    %v310 = vpack.c.b16 %v268, %v265
    %v311 = vpack.c.b16 %v269, %v266
    %v312 = vpack.c.b16 %v273, %v270
    %v313 = vpack.c.b16 %v274, %v271
    %v314 = vpack.c.b16 %v275, %v272
    %v315 = vpack.c.b16 %v279, %v276
    %v316 = vpack.c.b16 %v280, %v277
    %v317 = vpack.c.b16 %v281, %v278
    %v318 = vpack.c.b16 %v285, %v282
    %v319 = vpack.c.b16 %v286, %v283
    %v320 = vpack.c.b16 %v287, %v284
    %v321 = vpack.c.b16 %v291, %v288
    %v322 = vpack.c.b16 %v292, %v289
    %v323 = vpack.c.b16 %v293, %v290
    %v324 = vpack.c.b16 %v297, %v294
    %v325 = vpack.c.b16 %v298, %v295
    %v326 = vpack.c.b16 %v299, %v296
    %v327 = vpack.c.b16 %v303, %v300
    %v328 = vpack.c.b16 %v304, %v301
    %v329 = vpack.c.b16 %v305, %v302
    %354 = vmatprep.subr.bf16.mxu0 %v307
    %355 = vmatpush1.bf16.msra.mxu0 %v306
    %356 = vmatprep.subr.bf16.mxu0 %v310
    %357 = vmatpush1.bf16.msra.mxu0 %v309
    %358 = vmatprep.subr.bf16.mxu0 %v313
    %359 = vmatpush1.bf16.msra.mxu0 %v312
    %360 = vmatprep.subr.bf16.mxu0 %v316
    %361 = vmatpush1.bf16.msra.mxu0 %v315
    %362 = vmatprep.subr.bf16.mxu0 %v319
    %363 = vmatpush1.bf16.msra.mxu0 %v318
    %364 = vmatprep.subr.bf16.mxu0 %v322
    %365 = vmatpush1.bf16.msra.mxu0 %v321
    %366 = vmatprep.subr.bf16.mxu0 %v325
    %367 = vmatpush1.bf16.msra.mxu0 %v324
    %368 = vmatprep.subr.bf16.mxu0 %v328
    %369 = vmatpush1.bf16.msra.mxu0 %v327
    %370 = vmatprep.subr.bf16.mxu0 0
    %371 = vmatpush1.bf16.msra.mxu0 0
    %372 = vmatprep.subr.bf16.mxu0 0
    %373 = vmatpush1.bf16.msra.mxu0 0
    %374 = vmatprep.subr.bf16.mxu0 0
    %375 = vmatpush1.bf16.msra.mxu0 0
    %376 = vmatprep.subr.bf16.mxu0 0
    %377 = vmatpush1.bf16.msra.mxu0 0
    %378 = vmatprep.subr.bf16.mxu0 0
    %379 = vmatpush1.bf16.msra.mxu0 0
    %380 = vmatprep.subr.bf16.mxu0 0
    %381 = vmatpush1.bf16.msra.mxu0 0
    %382 = vmatprep.subr.bf16.mxu0 0
    %383 = vmatpush1.bf16.msra.mxu0 0
    %384 = vmatprep.subr.bf16.mxu0 0
    %385 = vmatpush1.bf16.msra.mxu0 0
    %386 = vmatprep.mubr.bf16.mxu0 0
    %387 = vmatmul.mubr.bf16.gmra.mrb[0].mxu0 %v210
    %v388 = vpop.f32.mrb[0].mxu0
    %v389 = vadd.f32 0.0, %v388
    %v390 = vpop.f32.mrb[0].mxu0
    %v391 = vadd.f32 0.0, %v390
    %v392 = vpop.f32.mrb[0].mxu0
    %v393 = vadd.f32 0.0, %v392
    %v394 = vpop.f32.mrb[0].mxu0
    %v395 = vadd.f32 0.0, %v394
    %396 = vmatprep.mubr.bf16.mxu0 0
    %397 = vmatmul.mubr.bf16.gmra.mrb[0].mxu0 %v211
    %v398 = vpop.f32.mrb[0].mxu0
    %v399 = vadd.f32 0.0, %v398
    %v400 = vpop.f32.mrb[0].mxu0
    %v401 = vadd.f32 0.0, %v400
    %v402 = vpop.f32.mrb[0].mxu0
    %v403 = vadd.f32 0.0, %v402
    %v404 = vpop.f32.mrb[0].mxu0
    %v405 = vadd.f32 0.0, %v404
    %406 = vmatprep.mubr.bf16.mxu0 0
    %407 = vmatmul.mubr.bf16.gmra.mrb[0].mxu0 %v212
    %v408 = vpop.f32.mrb[0].mxu0
    %v409 = vadd.f32 0.0, %v408
    %v410 = vpop.f32.mrb[0].mxu0
    %v411 = vadd.f32 0.0, %v410
    %v412 = vpop.f32.mrb[0].mxu0
    %v413 = vadd.f32 0.0, %v412
    %v414 = vpop.f32.mrb[0].mxu0
    %v415 = vadd.f32 0.0, %v414
    %416 = vmatprep.mubr.bf16.mxu0 0
    %417 = vmatmul.mubr.bf16.gmra.mrb[0].mxu0 %v213
    %v418 = vpop.f32.mrb[0].mxu0
    %v419 = vadd.f32 0.0, %v418
    %v420 = vpop.f32.mrb[0].mxu0
    %v421 = vadd.f32 0.0, %v420
    %v422 = vpop.f32.mrb[0].mxu0
    %v423 = vadd.f32 0.0, %v422
    %v424 = vpop.f32.mrb[0].mxu0
    %v425 = vadd.f32 0.0, %v424
    %426 = vmatprep.mubr.bf16.mxu0 0
    %427 = vmatmul.mubr.bf16.gmra.mrb[0].mxu0 %v214
    %v428 = vpop.f32.mrb[0].mxu0
    %v429 = vadd.f32 0.0, %v428
    %v430 = vpop.f32.mrb[0].mxu0
    %v431 = vadd.f32 0.0, %v430
    %v432 = vpop.f32.mrb[0].mxu0
    %v433 = vadd.f32 0.0, %v432
    %v434 = vpop.f32.mrb[0].mxu0
    %v435 = vadd.f32 0.0, %v434
    %436 = vmatprep.mubr.bf16.mxu0 0
    %437 = vmatmul.mubr.bf16.gmra.mrb[0].mxu0 %v215
    %v438 = vpop.f32.mrb[0].mxu0
    %v439 = vadd.f32 0.0, %v438
    %v440 = vpop.f32.mrb[0].mxu0
    %v441 = vadd.f32 0.0, %v440
    %v442 = vpop.f32.mrb[0].mxu0
    %v443 = vadd.f32 0.0, %v442
    %v444 = vpop.f32.mrb[0].mxu0
    %v445 = vadd.f32 0.0, %v444
    %446 = vmatprep.mubr.bf16.mxu0 0
    %447 = vmatmul.mubr.bf16.gmra.mrb[0].mxu0 %v216
    %v448 = vpop.f32.mrb[0].mxu0
    %v449 = vadd.f32 0.0, %v448
    %v450 = vpop.f32.mrb[0].mxu0
    %v451 = vadd.f32 0.0, %v450
    %v452 = vpop.f32.mrb[0].mxu0
    %v453 = vadd.f32 0.0, %v452
    %v454 = vpop.f32.mrb[0].mxu0
    %v455 = vadd.f32 0.0, %v454
    %456 = vmatprep.mubr.bf16.mxu0 0
    %457 = vmatmul.mubr.bf16.gmra.mrb[0].mxu0 %v217
    %v458 = vpop.f32.mrb[0].mxu0
    %v459 = vadd.f32 0.0, %v458
    %v460 = vpop.f32.mrb[0].mxu0
    %v461 = vadd.f32 0.0, %v460
    %v462 = vpop.f32.mrb[0].mxu0
    %v463 = vadd.f32 0.0, %v462
    %v464 = vpop.f32.mrb[0].mxu0
    %v465 = vadd.f32 0.0, %v464
    %466 = vdwg.mxu0
    %467 = vmatprep.subr.bf16.mxu0 0
    %468 = vmatpush1.bf16.msra.mxu0 %v308
    %469 = vmatprep.subr.bf16.mxu0 0
    %470 = vmatpush1.bf16.msra.mxu0 %v311
    %471 = vmatprep.subr.bf16.mxu0 0
    %472 = vmatpush1.bf16.msra.mxu0 %v314
    %473 = vmatprep.subr.bf16.mxu0 0
    %474 = vmatpush1.bf16.msra.mxu0 %v317
    %475 = vmatprep.subr.bf16.mxu0 0
    %476 = vmatpush1.bf16.msra.mxu0 %v320
    %477 = vmatprep.subr.bf16.mxu0 0
    %478 = vmatpush1.bf16.msra.mxu0 %v323
    %479 = vmatprep.subr.bf16.mxu0 0
    %480 = vmatpush1.bf16.msra.mxu0 %v326
    %481 = vmatprep.subr.bf16.mxu0 0
    %482 = vmatpush1.bf16.msra.mxu0 %v329
    %483 = vmatprep.subr.bf16.mxu0 0
    %484 = vmatpush1.bf16.msra.mxu0 0
    %485 = vmatprep.subr.bf16.mxu0 0
    %486 = vmatpush1.bf16.msra.mxu0 0
    %487 = vmatprep.subr.bf16.mxu0 0
    %488 = vmatpush1.bf16.msra.mxu0 0
    %489 = vmatprep.subr.bf16.mxu0 0
    %490 = vmatpush1.bf16.msra.mxu0 0
    %491 = vmatprep.subr.bf16.mxu0 0
    %492 = vmatpush1.bf16.msra.mxu0 0
    %493 = vmatprep.subr.bf16.mxu0 0
    %494 = vmatpush1.bf16.msra.mxu0 0
    %495 = vmatprep.subr.bf16.mxu0 0
    %496 = vmatpush1.bf16.msra.mxu0 0
    %497 = vmatprep.subr.bf16.mxu0 0
    %498 = vmatpush1.bf16.msra.mxu0 0
    %499 = vmatprep.mubr.bf16.mxu0 0
    %500 = vmatmul.mubr.bf16.gmra.mrb[0].mxu0 %v210
    %v501 = vpop.f32.mrb[0].mxu0
    %v502 = vadd.f32 0.0, %v501
    %v503 = vpop.f32.mrb[0].mxu0
    %v504 = vpop.f32.mrb[0].mxu0
    %v505 = vadd.f32 0.0, %v504
    %v506 = vpop.f32.mrb[0].mxu0
    %507 = vmatprep.mubr.bf16.mxu0 0
    %508 = vmatmul.mubr.bf16.gmra.mrb[0].mxu0 %v211
    %v509 = vpop.f32.mrb[0].mxu0
    %v510 = vadd.f32 0.0, %v509
    %v511 = vpop.f32.mrb[0].mxu0
    %v512 = vpop.f32.mrb[0].mxu0
    %v513 = vadd.f32 0.0, %v512
    %v514 = vpop.f32.mrb[0].mxu0
    %515 = vmatprep.mubr.bf16.mxu0 0
    %516 = vmatmul.mubr.bf16.gmra.mrb[0].mxu0 %v212
    %v517 = vpop.f32.mrb[0].mxu0
    %v518 = vadd.f32 0.0, %v517
    %v519 = vpop.f32.mrb[0].mxu0
    %v520 = vpop.f32.mrb[0].mxu0
    %v521 = vadd.f32 0.0, %v520
    %v522 = vpop.f32.mrb[0].mxu0
    %523 = vmatprep.mubr.bf16.mxu0 0
    %524 = vmatmul.mubr.bf16.gmra.mrb[0].mxu0 %v213
    %v525 = vpop.f32.mrb[0].mxu0
    %v526 = vadd.f32 0.0, %v525
    %v527 = vpop.f32.mrb[0].mxu0
    %v528 = vpop.f32.mrb[0].mxu0
    %v529 = vadd.f32 0.0, %v528
    %v530 = vpop.f32.mrb[0].mxu0
    %531 = vmatprep.mubr.bf16.mxu0 0
    %532 = vmatmul.mubr.bf16.gmra.mrb[0].mxu0 %v214
    %v533 = vpop.f32.mrb[0].mxu0
    %v534 = vadd.f32 0.0, %v533
    %v535 = vpop.f32.mrb[0].mxu0
    %v536 = vpop.f32.mrb[0].mxu0
    %v537 = vadd.f32 0.0, %v536
    %v538 = vpop.f32.mrb[0].mxu0
    %539 = vmatprep.mubr.bf16.mxu0 0
    %540 = vmatmul.mubr.bf16.gmra.mrb[0].mxu0 %v215
    %v541 = vpop.f32.mrb[0].mxu0
    %v542 = vadd.f32 0.0, %v541
    %v543 = vpop.f32.mrb[0].mxu0
    %v544 = vpop.f32.mrb[0].mxu0
    %v545 = vadd.f32 0.0, %v544
    %v546 = vpop.f32.mrb[0].mxu0
    %547 = vmatprep.mubr.bf16.mxu0 0
    %548 = vmatmul.mubr.bf16.gmra.mrb[0].mxu0 %v216
    %v549 = vpop.f32.mrb[0].mxu0
    %v550 = vadd.f32 0.0, %v549
    %v551 = vpop.f32.mrb[0].mxu0
    %v552 = vpop.f32.mrb[0].mxu0
    %v553 = vadd.f32 0.0, %v552
    %v554 = vpop.f32.mrb[0].mxu0
    %555 = vmatprep.mubr.bf16.mxu0 0
    %556 = vmatmul.mubr.bf16.gmra.mrb[0].mxu0 %v217
    %v557 = vpop.f32.mrb[0].mxu0
    %v558 = vadd.f32 0.0, %v557
    %v559 = vpop.f32.mrb[0].mxu0
    %v560 = vpop.f32.mrb[0].mxu0
    %v561 = vadd.f32 0.0, %v560
    %v562 = vpop.f32.mrb[0].mxu0
    %563 = vdwg.mxu0
    %564 = vst [vmem:[#allocation4] sm:$0xff] %v389
    %565 = vst [vmem:[#allocation4 + $0x8] sm:$0xff] %v391
    %566 = vst [vmem:[#allocation4 + $0x10] sm:$0xff] %v502
    %567 = vst [vmem:[#allocation4 + $0x18] sm:$0xff] %v393
    %568 = vst [vmem:[#allocation4 + $0x20] sm:$0xff] %v395
    %569 = vst [vmem:[#allocation4 + $0x28] sm:$0xff] %v505
    %570 = vst [vmem:[#allocation4 + $0x30] sm:$0xff] %v399
    %571 = vst [vmem:[#allocation4 + $0x38] sm:$0xff] %v401
    %572 = vst [vmem:[#allocation4 + $0x40] sm:$0xff] %v510
    %573 = vst [vmem:[#allocation4 + $0x48] sm:$0xff] %v403
    %574 = vst [vmem:[#allocation4 + $0x50] sm:$0xff] %v405
    %575 = vst [vmem:[#allocation4 + $0x58] sm:$0xff] %v513
    %576 = vst [vmem:[#allocation4 + $0x60] sm:$0xff] %v409
    %577 = vst [vmem:[#allocation4 + $0x68] sm:$0xff] %v411
    %578 = vst [vmem:[#allocation4 + $0x70] sm:$0xff] %v518
    %579 = vst [vmem:[#allocation4 + $0x78] sm:$0xff] %v413
    %580 = vst [vmem:[#allocation4 + $0x80] sm:$0xff] %v415
    %581 = vst [vmem:[#allocation4 + $0x88] sm:$0xff] %v521
    %582 = vst [vmem:[#allocation4 + $0x90] sm:$0xff] %v419
    %583 = vst [vmem:[#allocation4 + $0x98] sm:$0xff] %v421
    %584 = vst [vmem:[#allocation4 + $0xa0] sm:$0xff] %v526
    %585 = vst [vmem:[#allocation4 + $0xa8] sm:$0xff] %v423
    %586 = vst [vmem:[#allocation4 + $0xb0] sm:$0xff] %v425
    %587 = vst [vmem:[#allocation4 + $0xb8] sm:$0xff] %v529
    %588 = vst [vmem:[#allocation4 + $0xc0] sm:$0xff] %v429
    %589 = vst [vmem:[#allocation4 + $0xc8] sm:$0xff] %v431
    %590 = vst [vmem:[#allocation4 + $0xd0] sm:$0xff] %v534
    %591 = vst [vmem:[#allocation4 + $0xd8] sm:$0xff] %v433
    %592 = vst [vmem:[#allocation4 + $0xe0] sm:$0xff] %v435
    %593 = vst [vmem:[#allocation4 + $0xe8] sm:$0xff] %v537
    %594 = vst [vmem:[#allocation4 + $0xf0] sm:$0xff] %v439
    %595 = vst [vmem:[#allocation4 + $0xf8] sm:$0xff] %v441
    %596 = vst [vmem:[#allocation4 + $0x100] sm:$0xff] %v542
    %597 = vst [vmem:[#allocation4 + $0x108] sm:$0xff] %v443
    %598 = vst [vmem:[#allocation4 + $0x110] sm:$0xff] %v445
    %599 = vst [vmem:[#allocation4 + $0x118] sm:$0xff] %v545
    %600 = vst [vmem:[#allocation4 + $0x120] sm:$0xff] %v449
    %601 = vst [vmem:[#allocation4 + $0x128] sm:$0xff] %v451
    %602 = vst [vmem:[#allocation4 + $0x130] sm:$0xff] %v550
    %603 = vst [vmem:[#allocation4 + $0x138] sm:$0xff] %v453
    %604 = vst [vmem:[#allocation4 + $0x140] sm:$0xff] %v455
    %605 = vst [vmem:[#allocation4 + $0x148] sm:$0xff] %v553
    %606 = vst [vmem:[#allocation4 + $0x150] sm:$0xff] %v459
    %607 = vst [vmem:[#allocation4 + $0x158] sm:$0xff] %v461
    %608 = vst [vmem:[#allocation4 + $0x160] sm:$0xff] %v558
    %609 = vst [vmem:[#allocation4 + $0x168] sm:$0xff] %v463
    %610 = vst [vmem:[#allocation4 + $0x170] sm:$0xff] %v465
    %611 = vst [vmem:[#allocation4 + $0x178] sm:$0xff] %v561
    %v612 = vld [vmem:[#allocation10] sm:$0xff]
    %v613 = vld [vmem:[#allocation10 + $0x8] sm:$0xf]
    %v614 = vld [vmem:[#allocation10 + $0xc] sm:$0xff]
    %v615 = vld [vmem:[#allocation10 + $0x14] sm:$0xf]
    %v616 = vld [vmem:[#allocation10 + $0x18] sm:$0xff]
    %v617 = vld [vmem:[#allocation10 + $0x20] sm:$0xf]
    %v618 = vld [vmem:[#allocation10 + $0x24] sm:$0xff]
    %v619 = vld [vmem:[#allocation10 + $0x2c] sm:$0xf]
    %v620 = vld [vmem:[#allocation10 + $0x30] sm:$0xff]
    %v621 = vld [vmem:[#allocation10 + $0x38] sm:$0xf]
    %v622 = vld [vmem:[#allocation10 + $0x3c] sm:$0xff]
    %v623 = vld [vmem:[#allocation10 + $0x44] sm:$0xf]
    %v624 = vld [vmem:[#allocation10 + $0x48] sm:$0xff]
    %v625 = vld [vmem:[#allocation10 + $0x50] sm:$0xf]
    %v626 = vld [vmem:[#allocation10 + $0x54] sm:$0xff]
    %v627 = vld [vmem:[#allocation10 + $0x5c] sm:$0xf]
    %v628 = vld [vmem:[#allocation10 + $0x60] sm:$0xff]
    %v629 = vld [vmem:[#allocation10 + $0x68] sm:$0xf]
    %v630 = vld [vmem:[#allocation10 + $0x6c] sm:$0xff]
    %v631 = vld [vmem:[#allocation10 + $0x74] sm:$0xf]
    %v632 = vld [vmem:[#allocation10 + $0x78] sm:$0xff]
    %v633 = vld [vmem:[#allocation10 + $0x80] sm:$0xf]
    %v634 = vld [vmem:[#allocation10 + $0x84] sm:$0xff]
    %v635 = vld [vmem:[#allocation10 + $0x8c] sm:$0xf]
    %v636 = vld [vmem:[#allocation10 + $0x90] sm:$0xff]
    %v637 = vld [vmem:[#allocation10 + $0x98] sm:$0xf]
    %v638 = vld [vmem:[#allocation10 + $0x9c] sm:$0xff]
    %v639 = vld [vmem:[#allocation10 + $0xa4] sm:$0xf]
    %v640 = vld [vmem:[#allocation10 + $0xa8] sm:$0xff]
    %v641 = vld [vmem:[#allocation10 + $0xb0] sm:$0xf]
    %v642 = vld [vmem:[#allocation10 + $0xb4] sm:$0xff]
    %v643 = vld [vmem:[#allocation10 + $0xbc] sm:$0xf]
    %v644 = vld [vmem:[%s3] sm:$0x7]
    %v645 = vld [vmem:[%s4] sm:$0x1]
    %v646 = vld [vmem:[#allocation2] sm:$0xff]
    %v647 = vld [vmem:[#allocation2 + $0x8] sm:$0xff]
    %s648 = smul.u32 0, 3
    %s649 = smul.addr %s648, 8
    %s650 = scalar_lea.vmem [#allocation4], %s649
    %v651 = vld [vmem:[%s650] sm:$0xff]
    %v652 = vld [vmem:[%s650 + $0x8] sm:$0xff]
    %v653 = vld [vmem:[%s650 + $0x10] sm:$0xff]
    %v654 = vld [vmem:[%s650 + $0x18] sm:$0xff]
    %v655 = vld [vmem:[%s650 + $0x20] sm:$0xff]
    %v656 = vld [vmem:[%s650 + $0x28] sm:$0xff]
    %v657 = vpack.c.bf16 %v647, %v646
    %v659 = vlaneseq
    %v660 = vshrl.u32 %v659, 7
    %v661 = vsub.s32 0, %v660
    %v662 = vrot.slane %v644, %v661
    %v663 = vlaneseq
    %v664 = vshrl.u32 %v663, 7
    %v665 = vsub.s32 1, %v664
    %v666 = vrot.slane %v644, %v665
    %v667 = vlaneseq
    %v668 = vshrl.u32 %v667, 7
    %v669 = vsub.s32 2, %v668
    %v670 = vrot.slane %v644, %v669
    %v706 = vunpack.c.l.b16 %v612
    %v707 = vunpack.c.h.b16 %v612
    %v708 = vunpack.c.l.b16 %v613
    %v709 = vunpack.c.l.b16 %v614
    %v710 = vunpack.c.h.b16 %v614
    %v711 = vunpack.c.l.b16 %v615
    %v712 = vunpack.c.l.b16 %v616
    %v713 = vunpack.c.h.b16 %v616
    %v714 = vunpack.c.l.b16 %v617
    %v715 = vunpack.c.l.b16 %v618
    %v716 = vunpack.c.h.b16 %v618
    %v717 = vunpack.c.l.b16 %v619
    %v718 = vunpack.c.l.b16 %v620
    %v719 = vunpack.c.h.b16 %v620
    %v720 = vunpack.c.l.b16 %v621
    %v721 = vunpack.c.l.b16 %v622
    %v722 = vunpack.c.h.b16 %v622
    %v723 = vunpack.c.l.b16 %v623
    %v724 = vunpack.c.l.b16 %v624
    %v725 = vunpack.c.h.b16 %v624
    %v726 = vunpack.c.l.b16 %v625
    %v727 = vunpack.c.l.b16 %v626
    %v728 = vunpack.c.h.b16 %v626
    %v729 = vunpack.c.l.b16 %v627
    %v730 = vunpack.c.l.b16 %v628
    %v731 = vunpack.c.h.b16 %v628
    %v732 = vunpack.c.l.b16 %v629
    %v733 = vunpack.c.l.b16 %v630
    %v734 = vunpack.c.h.b16 %v630
    %v735 = vunpack.c.l.b16 %v631
    %v736 = vunpack.c.l.b16 %v632
    %v737 = vunpack.c.h.b16 %v632
    %v738 = vunpack.c.l.b16 %v633
    %v739 = vunpack.c.l.b16 %v634
    %v740 = vunpack.c.h.b16 %v634
    %v741 = vunpack.c.l.b16 %v635
    %v742 = vunpack.c.l.b16 %v636
    %v743 = vunpack.c.h.b16 %v636
    %v744 = vunpack.c.l.b16 %v637
    %v745 = vunpack.c.l.b16 %v638
    %v746 = vunpack.c.h.b16 %v638
    %v747 = vunpack.c.l.b16 %v639
    %v748 = vunpack.c.l.b16 %v640
    %v749 = vunpack.c.h.b16 %v640
    %v750 = vunpack.c.l.b16 %v641
    %v751 = vunpack.c.l.b16 %v642
    %v752 = vunpack.c.h.b16 %v642
    %v753 = vunpack.c.l.b16 %v643
    %v754 = vpack.c.b16 %v709, %v706
    %v755 = vpack.c.b16 %v710, %v707
    %v756 = vpack.c.b16 %v711, %v708
    %v757 = vpack.c.b16 %v715, %v712
    %v758 = vpack.c.b16 %v716, %v713
    %v759 = vpack.c.b16 %v717, %v714
    %v760 = vpack.c.b16 %v721, %v718
    %v761 = vpack.c.b16 %v722, %v719
    %v762 = vpack.c.b16 %v723, %v720
    %v763 = vpack.c.b16 %v727, %v724
    %v764 = vpack.c.b16 %v728, %v725
    %v765 = vpack.c.b16 %v729, %v726
    %v766 = vpack.c.b16 %v733, %v730
    %v767 = vpack.c.b16 %v734, %v731
    %v768 = vpack.c.b16 %v735, %v732
    %v769 = vpack.c.b16 %v739, %v736
    %v770 = vpack.c.b16 %v740, %v737
    %v771 = vpack.c.b16 %v741, %v738
    %v772 = vpack.c.b16 %v745, %v742
    %v773 = vpack.c.b16 %v746, %v743
    %v774 = vpack.c.b16 %v747, %v744
    %v775 = vpack.c.b16 %v751, %v748
    %v776 = vpack.c.b16 %v752, %v749
    %v777 = vpack.c.b16 %v753, %v750
    %802 = vmatprep.subr.bf16.mxu0 %v755
    %803 = vmatpush1.bf16.msra.mxu0 %v754
    %804 = vmatprep.subr.bf16.mxu0 %v758
    %805 = vmatpush1.bf16.msra.mxu0 %v757
    %806 = vmatprep.subr.bf16.mxu0 %v761
    %807 = vmatpush1.bf16.msra.mxu0 %v760
    %808 = vmatprep.subr.bf16.mxu0 %v764
    %809 = vmatpush1.bf16.msra.mxu0 %v763
    %810 = vmatprep.subr.bf16.mxu0 %v767
    %811 = vmatpush1.bf16.msra.mxu0 %v766
    %812 = vmatprep.subr.bf16.mxu0 %v770
    %813 = vmatpush1.bf16.msra.mxu0 %v769
    %814 = vmatprep.subr.bf16.mxu0 %v773
    %815 = vmatpush1.bf16.msra.mxu0 %v772
    %816 = vmatprep.subr.bf16.mxu0 %v776
    %817 = vmatpush1.bf16.msra.mxu0 %v775
    %818 = vmatprep.subr.bf16.mxu0 0
    %819 = vmatpush1.bf16.msra.mxu0 0
    %820 = vmatprep.subr.bf16.mxu0 0
    %821 = vmatpush1.bf16.msra.mxu0 0
    %822 = vmatprep.subr.bf16.mxu0 0
    %823 = vmatpush1.bf16.msra.mxu0 0
    %824 = vmatprep.subr.bf16.mxu0 0
    %825 = vmatpush1.bf16.msra.mxu0 0
    %826 = vmatprep.subr.bf16.mxu0 0
    %827 = vmatpush1.bf16.msra.mxu0 0
    %828 = vmatprep.subr.bf16.mxu0 0
    %829 = vmatpush1.bf16.msra.mxu0 0
    %830 = vmatprep.subr.bf16.mxu0 0
    %831 = vmatpush1.bf16.msra.mxu0 0
    %832 = vmatprep.subr.bf16.mxu0 0
    %833 = vmatpush1.bf16.msra.mxu0 0
    %834 = vmatprep.mubr.bf16.mxu0 0
    %835 = vmatmul.mubr.bf16.gmra.mrb[0].mxu0 %v657
    %v836 = vpop.f32.mrb[0].mxu0
    %v837 = vadd.f32 %v662, %v836
    %v838 = vpop.f32.mrb[0].mxu0
    %v839 = vadd.f32 %v666, %v838
    %v840 = vpop.f32.mrb[0].mxu0
    %v841 = vadd.f32 %v662, %v840
    %v842 = vpop.f32.mrb[0].mxu0
    %v843 = vadd.f32 %v666, %v842
    %844 = vdwg.mxu0
    %845 = vmatprep.subr.bf16.mxu0 0
    %846 = vmatpush1.bf16.msra.mxu0 %v756
    %847 = vmatprep.subr.bf16.mxu0 0
    %848 = vmatpush1.bf16.msra.mxu0 %v759
    %849 = vmatprep.subr.bf16.mxu0 0
    %850 = vmatpush1.bf16.msra.mxu0 %v762
    %851 = vmatprep.subr.bf16.mxu0 0
    %852 = vmatpush1.bf16.msra.mxu0 %v765
    %853 = vmatprep.subr.bf16.mxu0 0
    %854 = vmatpush1.bf16.msra.mxu0 %v768
    %855 = vmatprep.subr.bf16.mxu0 0
    %856 = vmatpush1.bf16.msra.mxu0 %v771
    %857 = vmatprep.subr.bf16.mxu0 0
    %858 = vmatpush1.bf16.msra.mxu0 %v774
    %859 = vmatprep.subr.bf16.mxu0 0
    %860 = vmatpush1.bf16.msra.mxu0 %v777
    %861 = vmatprep.subr.bf16.mxu0 0
    %862 = vmatpush1.bf16.msra.mxu0 0
    %863 = vmatprep.subr.bf16.mxu0 0
    %864 = vmatpush1.bf16.msra.mxu0 0
    %865 = vmatprep.subr.bf16.mxu0 0
    %866 = vmatpush1.bf16.msra.mxu0 0
    %867 = vmatprep.subr.bf16.mxu0 0
    %868 = vmatpush1.bf16.msra.mxu0 0
    %869 = vmatprep.subr.bf16.mxu0 0
    %870 = vmatpush1.bf16.msra.mxu0 0
    %871 = vmatprep.subr.bf16.mxu0 0
    %872 = vmatpush1.bf16.msra.mxu0 0
    %873 = vmatprep.subr.bf16.mxu0 0
    %874 = vmatpush1.bf16.msra.mxu0 0
    %875 = vmatprep.subr.bf16.mxu0 0
    %876 = vmatpush1.bf16.msra.mxu0 0
    %877 = vmatprep.mubr.bf16.mxu0 0
    %878 = vmatmul.mubr.bf16.gmra.mrb[0].mxu0 %v657
    %v879 = vpop.f32.mrb[0].mxu0
    %v880 = vadd.f32 %v670, %v879
    %v881 = vpop.f32.mrb[0].mxu0
    %v882 = vpop.f32.mrb[0].mxu0
    %v883 = vadd.f32 %v670, %v882
    %v884 = vpop.f32.mrb[0].mxu0
    %885 = vdwg.mxu0
    %v886 = vadd.f32 %v651, %v837
    %v887 = vadd.f32 %v654, %v841
    %v888 = vxor.u32 %v886, 2147483648
    %v889 = vxor.u32 %v887, 2147483648
    %v890 = vmul.f32 %v888, 1.442695
    %v891 = vpow.pop %v890
    %v892 = vmul.f32 %v889, 1.442695
    %v893 = vpow.pop %v892
    %v894 = vadd.f32 %v891, 1.0
    %v895 = vadd.f32 %v893, 1.0
    %v896 = vrcp.pop %v894
    %v897 = vmul.f32 1.0, %v896
    %v898 = vrcp.pop %v895
    %v899 = vmul.f32 1.0, %v898
    %v900 = vadd.f32 %v652, %v839
    %v901 = vadd.f32 %v655, %v843
    %v902 = vxor.u32 %v900, 2147483648
    %v903 = vxor.u32 %v901, 2147483648
    %v904 = vmul.f32 %v902, 1.442695
    %v905 = vpow.pop %v904
    %v906 = vmul.f32 %v903, 1.442695
    %v907 = vpow.pop %v906
    %v908 = vadd.f32 %v905, 1.0
    %v909 = vadd.f32 %v907, 1.0
    %v910 = vrcp.pop %v908
    %v911 = vmul.f32 1.0, %v910
    %v912 = vrcp.pop %v909
    %v913 = vmul.f32 1.0, %v912
    %v915 = vlaneseq
    %v916 = vshrl.u32 %v915, 7
    %v917 = vsub.s32 0, %v916
    %v918 = vrot.slane %v645, %v917
    %v920 = vadd.f32 %v653, %v918
    %v921 = vadd.f32 %v656, %v918
    %v922 = vmul.f32 %v897, %v880
    %v923 = vmul.f32 %v899, %v883
    %v924 = vadd.f32 %v920, %v922
    %v925 = vadd.f32 %v921, %v923
    %v926 = vtanh.pop %v924
    %v927 = vtanh.pop %v925
    %v928 = vsub.f32 1.0, %v911
    %v929 = vsub.f32 1.0, %v913
    %v930 = vmul.f32 %v928, %v926
    %v931 = vmul.f32 %v929, %v927
    %v932 = vmul.f32 %v911, %v646
    %v933 = vmul.f32 %v913, %v647
    %v934 = vadd.f32 %v930, %v932
    %v935 = vadd.f32 %v931, %v933
    %v936 = vpack.c.bf16 %v935, %v934
    %937 = vst [vmem:[#allocation3] sm:$0xff] %v936
    %s938 = smul.u32 2, 3
    %s939 = smul.addr %s938, 8
    %s940 = scalar_lea.vmem [#allocation4], %s939
    %v941 = vld [vmem:[%s940] sm:$0xff]
    %v942 = vld [vmem:[%s940 + $0x8] sm:$0xff]
    %v943 = vld [vmem:[%s940 + $0x10] sm:$0xff]
    %v944 = vld [vmem:[%s940 + $0x18] sm:$0xff]
    %v945 = vld [vmem:[%s940 + $0x20] sm:$0xff]
    %v946 = vld [vmem:[%s940 + $0x28] sm:$0xff]
    %947 = vmatprep.subr.bf16.mxu0 %v755
    %948 = vmatpush1.bf16.msra.mxu0 %v754
    %949 = vmatprep.subr.bf16.mxu0 %v758
    %950 = vmatpush1.bf16.msra.mxu0 %v757
    %951 = vmatprep.subr.bf16.mxu0 %v761
    %952 = vmatpush1.bf16.msra.mxu0 %v760
    %953 = vmatprep.subr.bf16.mxu0 %v764
    %954 = vmatpush1.bf16.msra.mxu0 %v763
    %955 = vmatprep.subr.bf16.mxu0 %v767
    %956 = vmatpush1.bf16.msra.mxu0 %v766
    %957 = vmatprep.subr.bf16.mxu0 %v770
    %958 = vmatpush1.bf16.msra.mxu0 %v769
    %959 = vmatprep.subr.bf16.mxu0 %v773
    %960 = vmatpush1.bf16.msra.mxu0 %v772
    %961 = vmatprep.subr.bf16.mxu0 %v776
    %962 = vmatpush1.bf16.msra.mxu0 %v775
    %963 = vmatprep.subr.bf16.mxu0 0
    %964 = vmatpush1.bf16.msra.mxu0 0
    %965 = vmatprep.subr.bf16.mxu0 0
    %966 = vmatpush1.bf16.msra.mxu0 0
    %967 = vmatprep.subr.bf16.mxu0 0
    %968 = vmatpush1.bf16.msra.mxu0 0
    %969 = vmatprep.subr.bf16.mxu0 0
    %970 = vmatpush1.bf16.msra.mxu0 0
    %971 = vmatprep.subr.bf16.mxu0 0
    %972 = vmatpush1.bf16.msra.mxu0 0
    %973 = vmatprep.subr.bf16.mxu0 0
    %974 = vmatpush1.bf16.msra.mxu0 0
    %975 = vmatprep.subr.bf16.mxu0 0
    %976 = vmatpush1.bf16.msra.mxu0 0
    %977 = vmatprep.subr.bf16.mxu0 0
    %978 = vmatpush1.bf16.msra.mxu0 0
    %979 = vmatprep.mubr.bf16.mxu0 0
    %980 = vmatmul.mubr.bf16.gmra.mrb[0].mxu0 %v936
    %v981 = vpop.f32.mrb[0].mxu0
    %v982 = vadd.f32 %v662, %v981
    %v983 = vpop.f32.mrb[0].mxu0
    %v984 = vadd.f32 %v666, %v983
    %v985 = vpop.f32.mrb[0].mxu0
    %v986 = vadd.f32 %v662, %v985
    %v987 = vpop.f32.mrb[0].mxu0
    %v988 = vadd.f32 %v666, %v987
    %989 = vdwg.mxu0
    %990 = vmatprep.subr.bf16.mxu0 0
    %991 = vmatpush1.bf16.msra.mxu0 %v756
    %992 = vmatprep.subr.bf16.mxu0 0
    %993 = vmatpush1.bf16.msra.mxu0 %v759
    %994 = vmatprep.subr.bf16.mxu0 0
    %995 = vmatpush1.bf16.msra.mxu0 %v762
    %996 = vmatprep.subr.bf16.mxu0 0
    %997 = vmatpush1.bf16.msra.mxu0 %v765
    %998 = vmatprep.subr.bf16.mxu0 0
    %999 = vmatpush1.bf16.msra.mxu0 %v768
    %1000 = vmatprep.subr.bf16.mxu0 0
    %1001 = vmatpush1.bf16.msra.mxu0 %v771
    %1002 = vmatprep.subr.bf16.mxu0 0
    %1003 = vmatpush1.bf16.msra.mxu0 %v774
    %1004 = vmatprep.subr.bf16.mxu0 0
    %1005 = vmatpush1.bf16.msra.mxu0 %v777
    %1006 = vmatprep.subr.bf16.mxu0 0
    %1007 = vmatpush1.bf16.msra.mxu0 0
    %1008 = vmatprep.subr.bf16.mxu0 0
    %1009 = vmatpush1.bf16.msra.mxu0 0
    %1010 = vmatprep.subr.bf16.mxu0 0
    %1011 = vmatpush1.bf16.msra.mxu0 0
    %1012 = vmatprep.subr.bf16.mxu0 0
    %1013 = vmatpush1.bf16.msra.mxu0 0
    %1014 = vmatprep.subr.bf16.mxu0 0
    %1015 = vmatpush1.bf16.msra.mxu0 0
    %1016 = vmatprep.subr.bf16.mxu0 0
    %1017 = vmatpush1.bf16.msra.mxu0 0
    %1018 = vmatprep.subr.bf16.mxu0 0
    %1019 = vmatpush1.bf16.msra.mxu0 0
    %1020 = vmatprep.subr.bf16.mxu0 0
    %1021 = vmatpush1.bf16.msra.mxu0 0
    %1022 = vmatprep.mubr.bf16.mxu0 0
    %1023 = vmatmul.mubr.bf16.gmra.mrb[0].mxu0 %v936
    %v1024 = vpop.f32.mrb[0].mxu0
    %v1025 = vadd.f32 %v670, %v1024
    %v1026 = vpop.f32.mrb[0].mxu0
    %v1027 = vpop.f32.mrb[0].mxu0
    %v1028 = vadd.f32 %v670, %v1027
    %v1029 = vpop.f32.mrb[0].mxu0
    %1030 = vdwg.mxu0
    %v1031 = vadd.f32 %v941, %v982
    %v1032 = vadd.f32 %v944, %v986
    %v1033 = vxor.u32 %v1031, 2147483648
    %v1034 = vxor.u32 %v1032, 2147483648
    %v1035 = vmul.f32 %v1033, 1.442695
    %v1036 = vpow.pop %v1035
    %v1037 = vmul.f32 %v1034, 1.442695
    %v1038 = vpow.pop %v1037
    %v1039 = vadd.f32 %v1036, 1.0
    %v1040 = vadd.f32 %v1038, 1.0
    %v1041 = vrcp.pop %v1039
    %v1042 = vmul.f32 1.0, %v1041
    %v1043 = vrcp.pop %v1040
    %v1044 = vmul.f32 1.0, %v1043
    %v1045 = vadd.f32 %v942, %v984
    %v1046 = vadd.f32 %v945, %v988
    %v1047 = vxor.u32 %v1045, 2147483648
    %v1048 = vxor.u32 %v1046, 2147483648
    %v1049 = vmul.f32 %v1047, 1.442695
    %v1050 = vpow.pop %v1049
    %v1051 = vmul.f32 %v1048, 1.442695
    %v1052 = vpow.pop %v1051
    %v1053 = vadd.f32 %v1050, 1.0
    %v1054 = vadd.f32 %v1052, 1.0
    %v1055 = vrcp.pop %v1053
    %v1056 = vmul.f32 1.0, %v1055
    %v1057 = vrcp.pop %v1054
    %v1058 = vmul.f32 1.0, %v1057
    %v1059 = vadd.f32 %v943, %v918
    %v1060 = vadd.f32 %v946, %v918
    %v1061 = vmul.f32 %v1042, %v1025
    %v1062 = vmul.f32 %v1044, %v1028
    %v1063 = vadd.f32 %v1059, %v1061
    %v1064 = vadd.f32 %v1060, %v1062
    %v1065 = vtanh.pop %v1063
    %v1066 = vtanh.pop %v1064
    %v1067 = vsub.f32 1.0, %v1056
    %v1068 = vsub.f32 1.0, %v1058
    %v1069 = vmul.f32 %v1067, %v1065
    %v1070 = vmul.f32 %v1068, %v1066
    %v1071 = vmul.f32 %v1056, %v934
    %v1072 = vmul.f32 %v1058, %v935
    %v1073 = vadd.f32 %v1069, %v1071
    %v1074 = vadd.f32 %v1070, %v1072
    %v1075 = vpack.c.bf16 %v1074, %v1073
    %s1076 = scalar_lea.vmem [#allocation3], 8
    %1077 = vst [vmem:[%s1076] sm:$0xff] %v1075
    %s1078 = smul.u32 4, 3
    %s1079 = smul.addr %s1078, 8
    %s1080 = scalar_lea.vmem [#allocation4], %s1079
    %v1081 = vld [vmem:[%s1080] sm:$0xff]
    %v1082 = vld [vmem:[%s1080 + $0x8] sm:$0xff]
    %v1083 = vld [vmem:[%s1080 + $0x10] sm:$0xff]
    %v1084 = vld [vmem:[%s1080 + $0x18] sm:$0xff]
    %v1085 = vld [vmem:[%s1080 + $0x20] sm:$0xff]
    %v1086 = vld [vmem:[%s1080 + $0x28] sm:$0xff]
    %1087 = vmatprep.subr.bf16.mxu0 %v755
    %1088 = vmatpush1.bf16.msra.mxu0 %v754
    %1089 = vmatprep.subr.bf16.mxu0 %v758
    %1090 = vmatpush1.bf16.msra.mxu0 %v757
    %1091 = vmatprep.subr.bf16.mxu0 %v761
    %1092 = vmatpush1.bf16.msra.mxu0 %v760
    %1093 = vmatprep.subr.bf16.mxu0 %v764
    %1094 = vmatpush1.bf16.msra.mxu0 %v763
    %1095 = vmatprep.subr.bf16.mxu0 %v767
    %1096 = vmatpush1.bf16.msra.mxu0 %v766
    %1097 = vmatprep.subr.bf16.mxu0 %v770
    %1098 = vmatpush1.bf16.msra.mxu0 %v769
    %1099 = vmatprep.subr.bf16.mxu0 %v773
    %1100 = vmatpush1.bf16.msra.mxu0 %v772
    %1101 = vmatprep.subr.bf16.mxu0 %v776
    %1102 = vmatpush1.bf16.msra.mxu0 %v775
    %1103 = vmatprep.subr.bf16.mxu0 0
    %1104 = vmatpush1.bf16.msra.mxu0 0
    %1105 = vmatprep.subr.bf16.mxu0 0
    %1106 = vmatpush1.bf16.msra.mxu0 0
    %1107 = vmatprep.subr.bf16.mxu0 0
    %1108 = vmatpush1.bf16.msra.mxu0 0
    %1109 = vmatprep.subr.bf16.mxu0 0
    %1110 = vmatpush1.bf16.msra.mxu0 0
    %1111 = vmatprep.subr.bf16.mxu0 0
    %1112 = vmatpush1.bf16.msra.mxu0 0
    %1113 = vmatprep.subr.bf16.mxu0 0
    %1114 = vmatpush1.bf16.msra.mxu0 0
    %1115 = vmatprep.subr.bf16.mxu0 0
    %1116 = vmatpush1.bf16.msra.mxu0 0
    %1117 = vmatprep.subr.bf16.mxu0 0
    %1118 = vmatpush1.bf16.msra.mxu0 0
    %1119 = vmatprep.mubr.bf16.mxu0 0
    %1120 = vmatmul.mubr.bf16.gmra.mrb[0].mxu0 %v1075
    %v1121 = vpop.f32.mrb[0].mxu0
    %v1122 = vadd.f32 %v662, %v1121
    %v1123 = vpop.f32.mrb[0].mxu0
    %v1124 = vadd.f32 %v666, %v1123
    %v1125 = vpop.f32.mrb[0].mxu0
    %v1126 = vadd.f32 %v662, %v1125
    %v1127 = vpop.f32.mrb[0].mxu0
    %v1128 = vadd.f32 %v666, %v1127
    %1129 = vdwg.mxu0
    %1130 = vmatprep.subr.bf16.mxu0 0
    %1131 = vmatpush1.bf16.msra.mxu0 %v756
    %1132 = vmatprep.subr.bf16.mxu0 0
    %1133 = vmatpush1.bf16.msra.mxu0 %v759
    %1134 = vmatprep.subr.bf16.mxu0 0
    %1135 = vmatpush1.bf16.msra.mxu0 %v762
    %1136 = vmatprep.subr.bf16.mxu0 0
    %1137 = vmatpush1.bf16.msra.mxu0 %v765
    %1138 = vmatprep.subr.bf16.mxu0 0
    %1139 = vmatpush1.bf16.msra.mxu0 %v768
    %1140 = vmatprep.subr.bf16.mxu0 0
    %1141 = vmatpush1.bf16.msra.mxu0 %v771
    %1142 = vmatprep.subr.bf16.mxu0 0
    %1143 = vmatpush1.bf16.msra.mxu0 %v774
    %1144 = vmatprep.subr.bf16.mxu0 0
    %1145 = vmatpush1.bf16.msra.mxu0 %v777
    %1146 = vmatprep.subr.bf16.mxu0 0
    %1147 = vmatpush1.bf16.msra.mxu0 0
    %1148 = vmatprep.subr.bf16.mxu0 0
    %1149 = vmatpush1.bf16.msra.mxu0 0
    %1150 = vmatprep.subr.bf16.mxu0 0
    %1151 = vmatpush1.bf16.msra.mxu0 0
    %1152 = vmatprep.subr.bf16.mxu0 0
    %1153 = vmatpush1.bf16.msra.mxu0 0
    %1154 = vmatprep.subr.bf16.mxu0 0
    %1155 = vmatpush1.bf16.msra.mxu0 0
    %1156 = vmatprep.subr.bf16.mxu0 0
    %1157 = vmatpush1.bf16.msra.mxu0 0
    %1158 = vmatprep.subr.bf16.mxu0 0
    %1159 = vmatpush1.bf16.msra.mxu0 0
    %1160 = vmatprep.subr.bf16.mxu0 0
    %1161 = vmatpush1.bf16.msra.mxu0 0
    %1162 = vmatprep.mubr.bf16.mxu0 0
    %1163 = vmatmul.mubr.bf16.gmra.mrb[0].mxu0 %v1075
    %v1164 = vpop.f32.mrb[0].mxu0
    %v1165 = vadd.f32 %v670, %v1164
    %v1166 = vpop.f32.mrb[0].mxu0
    %v1167 = vpop.f32.mrb[0].mxu0
    %v1168 = vadd.f32 %v670, %v1167
    %v1169 = vpop.f32.mrb[0].mxu0
    %1170 = vdwg.mxu0
    %v1171 = vadd.f32 %v1081, %v1122
    %v1172 = vadd.f32 %v1084, %v1126
    %v1173 = vxor.u32 %v1171, 2147483648
    %v1174 = vxor.u32 %v1172, 2147483648
    %v1175 = vmul.f32 %v1173, 1.442695
    %v1176 = vpow.pop %v1175
    %v1177 = vmul.f32 %v1174, 1.442695
    %v1178 = vpow.pop %v1177
    %v1179 = vadd.f32 %v1176, 1.0
    %v1180 = vadd.f32 %v1178, 1.0
    %v1181 = vrcp.pop %v1179
    %v1182 = vmul.f32 1.0, %v1181
    %v1183 = vrcp.pop %v1180
    %v1184 = vmul.f32 1.0, %v1183
    %v1185 = vadd.f32 %v1082, %v1124
    %v1186 = vadd.f32 %v1085, %v1128
    %v1187 = vxor.u32 %v1185, 2147483648
    %v1188 = vxor.u32 %v1186, 2147483648
    %v1189 = vmul.f32 %v1187, 1.442695
    %v1190 = vpow.pop %v1189
    %v1191 = vmul.f32 %v1188, 1.442695
    %v1192 = vpow.pop %v1191
    %v1193 = vadd.f32 %v1190, 1.0
    %v1194 = vadd.f32 %v1192, 1.0
    %v1195 = vrcp.pop %v1193
    %v1196 = vmul.f32 1.0, %v1195
    %v1197 = vrcp.pop %v1194
    %v1198 = vmul.f32 1.0, %v1197
    %v1199 = vadd.f32 %v1083, %v918
    %v1200 = vadd.f32 %v1086, %v918
    %v1201 = vmul.f32 %v1182, %v1165
    %v1202 = vmul.f32 %v1184, %v1168
    %v1203 = vadd.f32 %v1199, %v1201
    %v1204 = vadd.f32 %v1200, %v1202
    %v1205 = vtanh.pop %v1203
    %v1206 = vtanh.pop %v1204
    %v1207 = vsub.f32 1.0, %v1196
    %v1208 = vsub.f32 1.0, %v1198
    %v1209 = vmul.f32 %v1207, %v1205
    %v1210 = vmul.f32 %v1208, %v1206
    %v1211 = vmul.f32 %v1196, %v1073
    %v1212 = vmul.f32 %v1198, %v1074
    %v1213 = vadd.f32 %v1209, %v1211
    %v1214 = vadd.f32 %v1210, %v1212
    %v1215 = vpack.c.bf16 %v1214, %v1213
    %s1216 = scalar_lea.vmem [#allocation3], 16
    %1217 = vst [vmem:[%s1216] sm:$0xff] %v1215
    %s1218 = smul.u32 6, 3
    %s1219 = smul.addr %s1218, 8
    %s1220 = scalar_lea.vmem [#allocation4], %s1219
    %v1221 = vld [vmem:[%s1220] sm:$0xff]
    %v1222 = vld [vmem:[%s1220 + $0x8] sm:$0xff]
    %v1223 = vld [vmem:[%s1220 + $0x10] sm:$0xff]
    %v1224 = vld [vmem:[%s1220 + $0x18] sm:$0xff]
    %v1225 = vld [vmem:[%s1220 + $0x20] sm:$0xff]
    %v1226 = vld [vmem:[%s1220 + $0x28] sm:$0xff]
    %1227 = vmatprep.subr.bf16.mxu0 %v755
    %1228 = vmatpush1.bf16.msra.mxu0 %v754
    %1229 = vmatprep.subr.bf16.mxu0 %v758
    %1230 = vmatpush1.bf16.msra.mxu0 %v757
    %1231 = vmatprep.subr.bf16.mxu0 %v761
    %1232 = vmatpush1.bf16.msra.mxu0 %v760
    %1233 = vmatprep.subr.bf16.mxu0 %v764
    %1234 = vmatpush1.bf16.msra.mxu0 %v763
    %1235 = vmatprep.subr.bf16.mxu0 %v767
    %1236 = vmatpush1.bf16.msra.mxu0 %v766
    %1237 = vmatprep.subr.bf16.mxu0 %v770
    %1238 = vmatpush1.bf16.msra.mxu0 %v769
    %1239 = vmatprep.subr.bf16.mxu0 %v773
    %1240 = vmatpush1.bf16.msra.mxu0 %v772
    %1241 = vmatprep.subr.bf16.mxu0 %v776
    %1242 = vmatpush1.bf16.msra.mxu0 %v775
    %1243 = vmatprep.subr.bf16.mxu0 0
    %1244 = vmatpush1.bf16.msra.mxu0 0
    %1245 = vmatprep.subr.bf16.mxu0 0
    %1246 = vmatpush1.bf16.msra.mxu0 0
    %1247 = vmatprep.subr.bf16.mxu0 0
    %1248 = vmatpush1.bf16.msra.mxu0 0
    %1249 = vmatprep.subr.bf16.mxu0 0
    %1250 = vmatpush1.bf16.msra.mxu0 0
    %1251 = vmatprep.subr.bf16.mxu0 0
    %1252 = vmatpush1.bf16.msra.mxu0 0
    %1253 = vmatprep.subr.bf16.mxu0 0
    %1254 = vmatpush1.bf16.msra.mxu0 0
    %1255 = vmatprep.subr.bf16.mxu0 0
    %1256 = vmatpush1.bf16.msra.mxu0 0
    %1257 = vmatprep.subr.bf16.mxu0 0
    %1258 = vmatpush1.bf16.msra.mxu0 0
    %1259 = vmatprep.mubr.bf16.mxu0 0
    %1260 = vmatmul.mubr.bf16.gmra.mrb[0].mxu0 %v1215
    %v1261 = vpop.f32.mrb[0].mxu0
    %v1262 = vadd.f32 %v662, %v1261
    %v1263 = vpop.f32.mrb[0].mxu0
    %v1264 = vadd.f32 %v666, %v1263
    %v1265 = vpop.f32.mrb[0].mxu0
    %v1266 = vadd.f32 %v662, %v1265
    %v1267 = vpop.f32.mrb[0].mxu0
    %v1268 = vadd.f32 %v666, %v1267
    %1269 = vdwg.mxu0
    %1270 = vmatprep.subr.bf16.mxu0 0
    %1271 = vmatpush1.bf16.msra.mxu0 %v756
    %1272 = vmatprep.subr.bf16.mxu0 0
    %1273 = vmatpush1.bf16.msra.mxu0 %v759
    %1274 = vmatprep.subr.bf16.mxu0 0
    %1275 = vmatpush1.bf16.msra.mxu0 %v762
    %1276 = vmatprep.subr.bf16.mxu0 0
    %1277 = vmatpush1.bf16.msra.mxu0 %v765
    %1278 = vmatprep.subr.bf16.mxu0 0
    %1279 = vmatpush1.bf16.msra.mxu0 %v768
    %1280 = vmatprep.subr.bf16.mxu0 0
    %1281 = vmatpush1.bf16.msra.mxu0 %v771
    %1282 = vmatprep.subr.bf16.mxu0 0
    %1283 = vmatpush1.bf16.msra.mxu0 %v774
    %1284 = vmatprep.subr.bf16.mxu0 0
    %1285 = vmatpush1.bf16.msra.mxu0 %v777
    %1286 = vmatprep.subr.bf16.mxu0 0
    %1287 = vmatpush1.bf16.msra.mxu0 0
    %1288 = vmatprep.subr.bf16.mxu0 0
    %1289 = vmatpush1.bf16.msra.mxu0 0
    %1290 = vmatprep.subr.bf16.mxu0 0
    %1291 = vmatpush1.bf16.msra.mxu0 0
    %1292 = vmatprep.subr.bf16.mxu0 0
    %1293 = vmatpush1.bf16.msra.mxu0 0
    %1294 = vmatprep.subr.bf16.mxu0 0
    %1295 = vmatpush1.bf16.msra.mxu0 0
    %1296 = vmatprep.subr.bf16.mxu0 0
    %1297 = vmatpush1.bf16.msra.mxu0 0
    %1298 = vmatprep.subr.bf16.mxu0 0
    %1299 = vmatpush1.bf16.msra.mxu0 0
    %1300 = vmatprep.subr.bf16.mxu0 0
    %1301 = vmatpush1.bf16.msra.mxu0 0
    %1302 = vmatprep.mubr.bf16.mxu0 0
    %1303 = vmatmul.mubr.bf16.gmra.mrb[0].mxu0 %v1215
    %v1304 = vpop.f32.mrb[0].mxu0
    %v1305 = vadd.f32 %v670, %v1304
    %v1306 = vpop.f32.mrb[0].mxu0
    %v1307 = vpop.f32.mrb[0].mxu0
    %v1308 = vadd.f32 %v670, %v1307
    %v1309 = vpop.f32.mrb[0].mxu0
    %1310 = vdwg.mxu0
    %v1311 = vadd.f32 %v1221, %v1262
    %v1312 = vadd.f32 %v1224, %v1266
    %v1313 = vxor.u32 %v1311, 2147483648
    %v1314 = vxor.u32 %v1312, 2147483648
    %v1315 = vmul.f32 %v1313, 1.442695
    %v1316 = vpow.pop %v1315
    %v1317 = vmul.f32 %v1314, 1.442695
    %v1318 = vpow.pop %v1317
    %v1319 = vadd.f32 %v1316, 1.0
    %v1320 = vadd.f32 %v1318, 1.0
    %v1321 = vrcp.pop %v1319
    %v1322 = vmul.f32 1.0, %v1321
    %v1323 = vrcp.pop %v1320
    %v1324 = vmul.f32 1.0, %v1323
    %v1325 = vadd.f32 %v1222, %v1264
    %v1326 = vadd.f32 %v1225, %v1268
    %v1327 = vxor.u32 %v1325, 2147483648
    %v1328 = vxor.u32 %v1326, 2147483648
    %v1329 = vmul.f32 %v1327, 1.442695
    %v1330 = vpow.pop %v1329
    %v1331 = vmul.f32 %v1328, 1.442695
    %v1332 = vpow.pop %v1331
    %v1333 = vadd.f32 %v1330, 1.0
    %v1334 = vadd.f32 %v1332, 1.0
    %v1335 = vrcp.pop %v1333
    %v1336 = vmul.f32 1.0, %v1335
    %v1337 = vrcp.pop %v1334
    %v1338 = vmul.f32 1.0, %v1337
    %v1339 = vadd.f32 %v1223, %v918
    %v1340 = vadd.f32 %v1226, %v918
    %v1341 = vmul.f32 %v1322, %v1305
    %v1342 = vmul.f32 %v1324, %v1308
    %v1343 = vadd.f32 %v1339, %v1341
    %v1344 = vadd.f32 %v1340, %v1342
    %v1345 = vtanh.pop %v1343
    %v1346 = vtanh.pop %v1344
    %v1347 = vsub.f32 1.0, %v1336
    %v1348 = vsub.f32 1.0, %v1338
    %v1349 = vmul.f32 %v1347, %v1345
    %v1350 = vmul.f32 %v1348, %v1346
    %v1351 = vmul.f32 %v1336, %v1213
    %v1352 = vmul.f32 %v1338, %v1214
    %v1353 = vadd.f32 %v1349, %v1351
    %v1354 = vadd.f32 %v1350, %v1352
    %v1355 = vpack.c.bf16 %v1354, %v1353
    %s1356 = scalar_lea.vmem [#allocation3], 24
    %1357 = vst [vmem:[%s1356] sm:$0xff] %v1355
    %s1358 = smul.u32 8, 3
    %s1359 = smul.addr %s1358, 8
    %s1360 = scalar_lea.vmem [#allocation4], %s1359
    %v1361 = vld [vmem:[%s1360] sm:$0xff]
    %v1362 = vld [vmem:[%s1360 + $0x8] sm:$0xff]
    %v1363 = vld [vmem:[%s1360 + $0x10] sm:$0xff]
    %v1364 = vld [vmem:[%s1360 + $0x18] sm:$0xff]
    %v1365 = vld [vmem:[%s1360 + $0x20] sm:$0xff]
    %v1366 = vld [vmem:[%s1360 + $0x28] sm:$0xff]
    %1367 = vmatprep.subr.bf16.mxu0 %v755
    %1368 = vmatpush1.bf16.msra.mxu0 %v754
    %1369 = vmatprep.subr.bf16.mxu0 %v758
    %1370 = vmatpush1.bf16.msra.mxu0 %v757
    %1371 = vmatprep.subr.bf16.mxu0 %v761
    %1372 = vmatpush1.bf16.msra.mxu0 %v760
    %1373 = vmatprep.subr.bf16.mxu0 %v764
    %1374 = vmatpush1.bf16.msra.mxu0 %v763
    %1375 = vmatprep.subr.bf16.mxu0 %v767
    %1376 = vmatpush1.bf16.msra.mxu0 %v766
    %1377 = vmatprep.subr.bf16.mxu0 %v770
    %1378 = vmatpush1.bf16.msra.mxu0 %v769
    %1379 = vmatprep.subr.bf16.mxu0 %v773
    %1380 = vmatpush1.bf16.msra.mxu0 %v772
    %1381 = vmatprep.subr.bf16.mxu0 %v776
    %1382 = vmatpush1.bf16.msra.mxu0 %v775
    %1383 = vmatprep.subr.bf16.mxu0 0
    %1384 = vmatpush1.bf16.msra.mxu0 0
    %1385 = vmatprep.subr.bf16.mxu0 0
    %1386 = vmatpush1.bf16.msra.mxu0 0
    %1387 = vmatprep.subr.bf16.mxu0 0
    %1388 = vmatpush1.bf16.msra.mxu0 0
    %1389 = vmatprep.subr.bf16.mxu0 0
    %1390 = vmatpush1.bf16.msra.mxu0 0
    %1391 = vmatprep.subr.bf16.mxu0 0
    %1392 = vmatpush1.bf16.msra.mxu0 0
    %1393 = vmatprep.subr.bf16.mxu0 0
    %1394 = vmatpush1.bf16.msra.mxu0 0
    %1395 = vmatprep.subr.bf16.mxu0 0
    %1396 = vmatpush1.bf16.msra.mxu0 0
    %1397 = vmatprep.subr.bf16.mxu0 0
    %1398 = vmatpush1.bf16.msra.mxu0 0
    %1399 = vmatprep.mubr.bf16.mxu0 0
    %1400 = vmatmul.mubr.bf16.gmra.mrb[0].mxu0 %v1355
    %v1401 = vpop.f32.mrb[0].mxu0
    %v1402 = vadd.f32 %v662, %v1401
    %v1403 = vpop.f32.mrb[0].mxu0
    %v1404 = vadd.f32 %v666, %v1403
    %v1405 = vpop.f32.mrb[0].mxu0
    %v1406 = vadd.f32 %v662, %v1405
    %v1407 = vpop.f32.mrb[0].mxu0
    %v1408 = vadd.f32 %v666, %v1407
    %1409 = vdwg.mxu0
    %1410 = vmatprep.subr.bf16.mxu0 0
    %1411 = vmatpush1.bf16.msra.mxu0 %v756
    %1412 = vmatprep.subr.bf16.mxu0 0
    %1413 = vmatpush1.bf16.msra.mxu0 %v759
    %1414 = vmatprep.subr.bf16.mxu0 0
    %1415 = vmatpush1.bf16.msra.mxu0 %v762
    %1416 = vmatprep.subr.bf16.mxu0 0
    %1417 = vmatpush1.bf16.msra.mxu0 %v765
    %1418 = vmatprep.subr.bf16.mxu0 0
    %1419 = vmatpush1.bf16.msra.mxu0 %v768
    %1420 = vmatprep.subr.bf16.mxu0 0
    %1421 = vmatpush1.bf16.msra.mxu0 %v771
    %1422 = vmatprep.subr.bf16.mxu0 0
    %1423 = vmatpush1.bf16.msra.mxu0 %v774
    %1424 = vmatprep.subr.bf16.mxu0 0
    %1425 = vmatpush1.bf16.msra.mxu0 %v777
    %1426 = vmatprep.subr.bf16.mxu0 0
    %1427 = vmatpush1.bf16.msra.mxu0 0
    %1428 = vmatprep.subr.bf16.mxu0 0
    %1429 = vmatpush1.bf16.msra.mxu0 0
    %1430 = vmatprep.subr.bf16.mxu0 0
    %1431 = vmatpush1.bf16.msra.mxu0 0
    %1432 = vmatprep.subr.bf16.mxu0 0
    %1433 = vmatpush1.bf16.msra.mxu0 0
    %1434 = vmatprep.subr.bf16.mxu0 0
    %1435 = vmatpush1.bf16.msra.mxu0 0
    %1436 = vmatprep.subr.bf16.mxu0 0
    %1437 = vmatpush1.bf16.msra.mxu0 0
    %1438 = vmatprep.subr.bf16.mxu0 0
    %1439 = vmatpush1.bf16.msra.mxu0 0
    %1440 = vmatprep.subr.bf16.mxu0 0
    %1441 = vmatpush1.bf16.msra.mxu0 0
    %1442 = vmatprep.mubr.bf16.mxu0 0
    %1443 = vmatmul.mubr.bf16.gmra.mrb[0].mxu0 %v1355
    %v1444 = vpop.f32.mrb[0].mxu0
    %v1445 = vadd.f32 %v670, %v1444
    %v1446 = vpop.f32.mrb[0].mxu0
    %v1447 = vpop.f32.mrb[0].mxu0
    %v1448 = vadd.f32 %v670, %v1447
    %v1449 = vpop.f32.mrb[0].mxu0
    %1450 = vdwg.mxu0
    %v1451 = vadd.f32 %v1361, %v1402
    %v1452 = vadd.f32 %v1364, %v1406
    %v1453 = vxor.u32 %v1451, 2147483648
    %v1454 = vxor.u32 %v1452, 2147483648
    %v1455 = vmul.f32 %v1453, 1.442695
    %v1456 = vpow.pop %v1455
    %v1457 = vmul.f32 %v1454, 1.442695
    %v1458 = vpow.pop %v1457
    %v1459 = vadd.f32 %v1456, 1.0
    %v1460 = vadd.f32 %v1458, 1.0
    %v1461 = vrcp.pop %v1459
    %v1462 = vmul.f32 1.0, %v1461
    %v1463 = vrcp.pop %v1460
    %v1464 = vmul.f32 1.0, %v1463
    %v1465 = vadd.f32 %v1362, %v1404
    %v1466 = vadd.f32 %v1365, %v1408
    %v1467 = vxor.u32 %v1465, 2147483648
    %v1468 = vxor.u32 %v1466, 2147483648
    %v1469 = vmul.f32 %v1467, 1.442695
    %v1470 = vpow.pop %v1469
    %v1471 = vmul.f32 %v1468, 1.442695
    %v1472 = vpow.pop %v1471
    %v1473 = vadd.f32 %v1470, 1.0
    %v1474 = vadd.f32 %v1472, 1.0
    %v1475 = vrcp.pop %v1473
    %v1476 = vmul.f32 1.0, %v1475
    %v1477 = vrcp.pop %v1474
    %v1478 = vmul.f32 1.0, %v1477
    %v1479 = vadd.f32 %v1363, %v918
    %v1480 = vadd.f32 %v1366, %v918
    %v1481 = vmul.f32 %v1462, %v1445
    %v1482 = vmul.f32 %v1464, %v1448
    %v1483 = vadd.f32 %v1479, %v1481
    %v1484 = vadd.f32 %v1480, %v1482
    %v1485 = vtanh.pop %v1483
    %v1486 = vtanh.pop %v1484
    %v1487 = vsub.f32 1.0, %v1476
    %v1488 = vsub.f32 1.0, %v1478
    %v1489 = vmul.f32 %v1487, %v1485
    %v1490 = vmul.f32 %v1488, %v1486
    %v1491 = vmul.f32 %v1476, %v1353
    %v1492 = vmul.f32 %v1478, %v1354
    %v1493 = vadd.f32 %v1489, %v1491
    %v1494 = vadd.f32 %v1490, %v1492
    %v1495 = vpack.c.bf16 %v1494, %v1493
    %s1496 = scalar_lea.vmem [#allocation3], 32
    %1497 = vst [vmem:[%s1496] sm:$0xff] %v1495
    %s1498 = smul.u32 10, 3
    %s1499 = smul.addr %s1498, 8
    %s1500 = scalar_lea.vmem [#allocation4], %s1499
    %v1501 = vld [vmem:[%s1500] sm:$0xff]
    %v1502 = vld [vmem:[%s1500 + $0x8] sm:$0xff]
    %v1503 = vld [vmem:[%s1500 + $0x10] sm:$0xff]
    %v1504 = vld [vmem:[%s1500 + $0x18] sm:$0xff]
    %v1505 = vld [vmem:[%s1500 + $0x20] sm:$0xff]
    %v1506 = vld [vmem:[%s1500 + $0x28] sm:$0xff]
    %1507 = vmatprep.subr.bf16.mxu0 %v755
    %1508 = vmatpush1.bf16.msra.mxu0 %v754
    %1509 = vmatprep.subr.bf16.mxu0 %v758
    %1510 = vmatpush1.bf16.msra.mxu0 %v757
    %1511 = vmatprep.subr.bf16.mxu0 %v761
    %1512 = vmatpush1.bf16.msra.mxu0 %v760
    %1513 = vmatprep.subr.bf16.mxu0 %v764
    %1514 = vmatpush1.bf16.msra.mxu0 %v763
    %1515 = vmatprep.subr.bf16.mxu0 %v767
    %1516 = vmatpush1.bf16.msra.mxu0 %v766
    %1517 = vmatprep.subr.bf16.mxu0 %v770
    %1518 = vmatpush1.bf16.msra.mxu0 %v769
    %1519 = vmatprep.subr.bf16.mxu0 %v773
    %1520 = vmatpush1.bf16.msra.mxu0 %v772
    %1521 = vmatprep.subr.bf16.mxu0 %v776
    %1522 = vmatpush1.bf16.msra.mxu0 %v775
    %1523 = vmatprep.subr.bf16.mxu0 0
    %1524 = vmatpush1.bf16.msra.mxu0 0
    %1525 = vmatprep.subr.bf16.mxu0 0
    %1526 = vmatpush1.bf16.msra.mxu0 0
    %1527 = vmatprep.subr.bf16.mxu0 0
    %1528 = vmatpush1.bf16.msra.mxu0 0
    %1529 = vmatprep.subr.bf16.mxu0 0
    %1530 = vmatpush1.bf16.msra.mxu0 0
    %1531 = vmatprep.subr.bf16.mxu0 0
    %1532 = vmatpush1.bf16.msra.mxu0 0
    %1533 = vmatprep.subr.bf16.mxu0 0
    %1534 = vmatpush1.bf16.msra.mxu0 0
    %1535 = vmatprep.subr.bf16.mxu0 0
    %1536 = vmatpush1.bf16.msra.mxu0 0
    %1537 = vmatprep.subr.bf16.mxu0 0
    %1538 = vmatpush1.bf16.msra.mxu0 0
    %1539 = vmatprep.mubr.bf16.mxu0 0
    %1540 = vmatmul.mubr.bf16.gmra.mrb[0].mxu0 %v1495
    %v1541 = vpop.f32.mrb[0].mxu0
    %v1542 = vadd.f32 %v662, %v1541
    %v1543 = vpop.f32.mrb[0].mxu0
    %v1544 = vadd.f32 %v666, %v1543
    %v1545 = vpop.f32.mrb[0].mxu0
    %v1546 = vadd.f32 %v662, %v1545
    %v1547 = vpop.f32.mrb[0].mxu0
    %v1548 = vadd.f32 %v666, %v1547
    %1549 = vdwg.mxu0
    %1550 = vmatprep.subr.bf16.mxu0 0
    %1551 = vmatpush1.bf16.msra.mxu0 %v756
    %1552 = vmatprep.subr.bf16.mxu0 0
    %1553 = vmatpush1.bf16.msra.mxu0 %v759
    %1554 = vmatprep.subr.bf16.mxu0 0
    %1555 = vmatpush1.bf16.msra.mxu0 %v762
    %1556 = vmatprep.subr.bf16.mxu0 0
    %1557 = vmatpush1.bf16.msra.mxu0 %v765
    %1558 = vmatprep.subr.bf16.mxu0 0
    %1559 = vmatpush1.bf16.msra.mxu0 %v768
    %1560 = vmatprep.subr.bf16.mxu0 0
    %1561 = vmatpush1.bf16.msra.mxu0 %v771
    %1562 = vmatprep.subr.bf16.mxu0 0
    %1563 = vmatpush1.bf16.msra.mxu0 %v774
    %1564 = vmatprep.subr.bf16.mxu0 0
    %1565 = vmatpush1.bf16.msra.mxu0 %v777
    %1566 = vmatprep.subr.bf16.mxu0 0
    %1567 = vmatpush1.bf16.msra.mxu0 0
    %1568 = vmatprep.subr.bf16.mxu0 0
    %1569 = vmatpush1.bf16.msra.mxu0 0
    %1570 = vmatprep.subr.bf16.mxu0 0
    %1571 = vmatpush1.bf16.msra.mxu0 0
    %1572 = vmatprep.subr.bf16.mxu0 0
    %1573 = vmatpush1.bf16.msra.mxu0 0
    %1574 = vmatprep.subr.bf16.mxu0 0
    %1575 = vmatpush1.bf16.msra.mxu0 0
    %1576 = vmatprep.subr.bf16.mxu0 0
    %1577 = vmatpush1.bf16.msra.mxu0 0
    %1578 = vmatprep.subr.bf16.mxu0 0
    %1579 = vmatpush1.bf16.msra.mxu0 0
    %1580 = vmatprep.subr.bf16.mxu0 0
    %1581 = vmatpush1.bf16.msra.mxu0 0
    %1582 = vmatprep.mubr.bf16.mxu0 0
    %1583 = vmatmul.mubr.bf16.gmra.mrb[0].mxu0 %v1495
    %v1584 = vpop.f32.mrb[0].mxu0
    %v1585 = vadd.f32 %v670, %v1584
    %v1586 = vpop.f32.mrb[0].mxu0
    %v1587 = vpop.f32.mrb[0].mxu0
    %v1588 = vadd.f32 %v670, %v1587
    %v1589 = vpop.f32.mrb[0].mxu0
    %1590 = vdwg.mxu0
    %v1591 = vadd.f32 %v1501, %v1542
    %v1592 = vadd.f32 %v1504, %v1546
    %v1593 = vxor.u32 %v1591, 2147483648
    %v1594 = vxor.u32 %v1592, 2147483648
    %v1595 = vmul.f32 %v1593, 1.442695
    %v1596 = vpow.pop %v1595
    %v1597 = vmul.f32 %v1594, 1.442695
    %v1598 = vpow.pop %v1597
    %v1599 = vadd.f32 %v1596, 1.0
    %v1600 = vadd.f32 %v1598, 1.0
    %v1601 = vrcp.pop %v1599
    %v1602 = vmul.f32 1.0, %v1601
    %v1603 = vrcp.pop %v1600
    %v1604 = vmul.f32 1.0, %v1603
    %v1605 = vadd.f32 %v1502, %v1544
    %v1606 = vadd.f32 %v1505, %v1548
    %v1607 = vxor.u32 %v1605, 2147483648
    %v1608 = vxor.u32 %v1606, 2147483648
    %v1609 = vmul.f32 %v1607, 1.442695
    %v1610 = vpow.pop %v1609
    %v1611 = vmul.f32 %v1608, 1.442695
    %v1612 = vpow.pop %v1611
    %v1613 = vadd.f32 %v1610, 1.0
    %v1614 = vadd.f32 %v1612, 1.0
    %v1615 = vrcp.pop %v1613
    %v1616 = vmul.f32 1.0, %v1615
    %v1617 = vrcp.pop %v1614
    %v1618 = vmul.f32 1.0, %v1617
    %v1619 = vadd.f32 %v1503, %v918
    %v1620 = vadd.f32 %v1506, %v918
    %v1621 = vmul.f32 %v1602, %v1585
    %v1622 = vmul.f32 %v1604, %v1588
    %v1623 = vadd.f32 %v1619, %v1621
    %v1624 = vadd.f32 %v1620, %v1622
    %v1625 = vtanh.pop %v1623
    %v1626 = vtanh.pop %v1624
    %v1627 = vsub.f32 1.0, %v1616
    %v1628 = vsub.f32 1.0, %v1618
    %v1629 = vmul.f32 %v1627, %v1625
    %v1630 = vmul.f32 %v1628, %v1626
    %v1631 = vmul.f32 %v1616, %v1493
    %v1632 = vmul.f32 %v1618, %v1494
    %v1633 = vadd.f32 %v1629, %v1631
    %v1634 = vadd.f32 %v1630, %v1632
    %v1635 = vpack.c.bf16 %v1634, %v1633
    %s1636 = scalar_lea.vmem [#allocation3], 40
    %1637 = vst [vmem:[%s1636] sm:$0xff] %v1635
    %s1638 = smul.u32 12, 3
    %s1639 = smul.addr %s1638, 8
    %s1640 = scalar_lea.vmem [#allocation4], %s1639
    %v1641 = vld [vmem:[%s1640] sm:$0xff]
    %v1642 = vld [vmem:[%s1640 + $0x8] sm:$0xff]
    %v1643 = vld [vmem:[%s1640 + $0x10] sm:$0xff]
    %v1644 = vld [vmem:[%s1640 + $0x18] sm:$0xff]
    %v1645 = vld [vmem:[%s1640 + $0x20] sm:$0xff]
    %v1646 = vld [vmem:[%s1640 + $0x28] sm:$0xff]
    %1647 = vmatprep.subr.bf16.mxu0 %v755
    %1648 = vmatpush1.bf16.msra.mxu0 %v754
    %1649 = vmatprep.subr.bf16.mxu0 %v758
    %1650 = vmatpush1.bf16.msra.mxu0 %v757
    %1651 = vmatprep.subr.bf16.mxu0 %v761
    %1652 = vmatpush1.bf16.msra.mxu0 %v760
    %1653 = vmatprep.subr.bf16.mxu0 %v764
    %1654 = vmatpush1.bf16.msra.mxu0 %v763
    %1655 = vmatprep.subr.bf16.mxu0 %v767
    %1656 = vmatpush1.bf16.msra.mxu0 %v766
    %1657 = vmatprep.subr.bf16.mxu0 %v770
    %1658 = vmatpush1.bf16.msra.mxu0 %v769
    %1659 = vmatprep.subr.bf16.mxu0 %v773
    %1660 = vmatpush1.bf16.msra.mxu0 %v772
    %1661 = vmatprep.subr.bf16.mxu0 %v776
    %1662 = vmatpush1.bf16.msra.mxu0 %v775
    %1663 = vmatprep.subr.bf16.mxu0 0
    %1664 = vmatpush1.bf16.msra.mxu0 0
    %1665 = vmatprep.subr.bf16.mxu0 0
    %1666 = vmatpush1.bf16.msra.mxu0 0
    %1667 = vmatprep.subr.bf16.mxu0 0
    %1668 = vmatpush1.bf16.msra.mxu0 0
    %1669 = vmatprep.subr.bf16.mxu0 0
    %1670 = vmatpush1.bf16.msra.mxu0 0
    %1671 = vmatprep.subr.bf16.mxu0 0
    %1672 = vmatpush1.bf16.msra.mxu0 0
    %1673 = vmatprep.subr.bf16.mxu0 0
    %1674 = vmatpush1.bf16.msra.mxu0 0
    %1675 = vmatprep.subr.bf16.mxu0 0
    %1676 = vmatpush1.bf16.msra.mxu0 0
    %1677 = vmatprep.subr.bf16.mxu0 0
    %1678 = vmatpush1.bf16.msra.mxu0 0
    %1679 = vmatprep.mubr.bf16.mxu0 0
    %1680 = vmatmul.mubr.bf16.gmra.mrb[0].mxu0 %v1635
    %v1681 = vpop.f32.mrb[0].mxu0
    %v1682 = vadd.f32 %v662, %v1681
    %v1683 = vpop.f32.mrb[0].mxu0
    %v1684 = vadd.f32 %v666, %v1683
    %v1685 = vpop.f32.mrb[0].mxu0
    %v1686 = vadd.f32 %v662, %v1685
    %v1687 = vpop.f32.mrb[0].mxu0
    %v1688 = vadd.f32 %v666, %v1687
    %1689 = vdwg.mxu0
    %1690 = vmatprep.subr.bf16.mxu0 0
    %1691 = vmatpush1.bf16.msra.mxu0 %v756
    %1692 = vmatprep.subr.bf16.mxu0 0
    %1693 = vmatpush1.bf16.msra.mxu0 %v759
    %1694 = vmatprep.subr.bf16.mxu0 0
    %1695 = vmatpush1.bf16.msra.mxu0 %v762
    %1696 = vmatprep.subr.bf16.mxu0 0
    %1697 = vmatpush1.bf16.msra.mxu0 %v765
    %1698 = vmatprep.subr.bf16.mxu0 0
    %1699 = vmatpush1.bf16.msra.mxu0 %v768
    %1700 = vmatprep.subr.bf16.mxu0 0
    %1701 = vmatpush1.bf16.msra.mxu0 %v771
    %1702 = vmatprep.subr.bf16.mxu0 0
    %1703 = vmatpush1.bf16.msra.mxu0 %v774
    %1704 = vmatprep.subr.bf16.mxu0 0
    %1705 = vmatpush1.bf16.msra.mxu0 %v777
    %1706 = vmatprep.subr.bf16.mxu0 0
    %1707 = vmatpush1.bf16.msra.mxu0 0
    %1708 = vmatprep.subr.bf16.mxu0 0
    %1709 = vmatpush1.bf16.msra.mxu0 0
    %1710 = vmatprep.subr.bf16.mxu0 0
    %1711 = vmatpush1.bf16.msra.mxu0 0
    %1712 = vmatprep.subr.bf16.mxu0 0
    %1713 = vmatpush1.bf16.msra.mxu0 0
    %1714 = vmatprep.subr.bf16.mxu0 0
    %1715 = vmatpush1.bf16.msra.mxu0 0
    %1716 = vmatprep.subr.bf16.mxu0 0
    %1717 = vmatpush1.bf16.msra.mxu0 0
    %1718 = vmatprep.subr.bf16.mxu0 0
    %1719 = vmatpush1.bf16.msra.mxu0 0
    %1720 = vmatprep.subr.bf16.mxu0 0
    %1721 = vmatpush1.bf16.msra.mxu0 0
    %1722 = vmatprep.mubr.bf16.mxu0 0
    %1723 = vmatmul.mubr.bf16.gmra.mrb[0].mxu0 %v1635
    %v1724 = vpop.f32.mrb[0].mxu0
    %v1725 = vadd.f32 %v670, %v1724
    %v1726 = vpop.f32.mrb[0].mxu0
    %v1727 = vpop.f32.mrb[0].mxu0
    %v1728 = vadd.f32 %v670, %v1727
    %v1729 = vpop.f32.mrb[0].mxu0
    %1730 = vdwg.mxu0
    %v1731 = vadd.f32 %v1641, %v1682
    %v1732 = vadd.f32 %v1644, %v1686
    %v1733 = vxor.u32 %v1731, 2147483648
    %v1734 = vxor.u32 %v1732, 2147483648
    %v1735 = vmul.f32 %v1733, 1.442695
    %v1736 = vpow.pop %v1735
    %v1737 = vmul.f32 %v1734, 1.442695
    %v1738 = vpow.pop %v1737
    %v1739 = vadd.f32 %v1736, 1.0
    %v1740 = vadd.f32 %v1738, 1.0
    %v1741 = vrcp.pop %v1739
    %v1742 = vmul.f32 1.0, %v1741
    %v1743 = vrcp.pop %v1740
    %v1744 = vmul.f32 1.0, %v1743
    %v1745 = vadd.f32 %v1642, %v1684
    %v1746 = vadd.f32 %v1645, %v1688
    %v1747 = vxor.u32 %v1745, 2147483648
    %v1748 = vxor.u32 %v1746, 2147483648
    %v1749 = vmul.f32 %v1747, 1.442695
    %v1750 = vpow.pop %v1749
    %v1751 = vmul.f32 %v1748, 1.442695
    %v1752 = vpow.pop %v1751
    %v1753 = vadd.f32 %v1750, 1.0
    %v1754 = vadd.f32 %v1752, 1.0
    %v1755 = vrcp.pop %v1753
    %v1756 = vmul.f32 1.0, %v1755
    %v1757 = vrcp.pop %v1754
    %v1758 = vmul.f32 1.0, %v1757
    %v1759 = vadd.f32 %v1643, %v918
    %v1760 = vadd.f32 %v1646, %v918
    %v1761 = vmul.f32 %v1742, %v1725
    %v1762 = vmul.f32 %v1744, %v1728
    %v1763 = vadd.f32 %v1759, %v1761
    %v1764 = vadd.f32 %v1760, %v1762
    %v1765 = vtanh.pop %v1763
    %v1766 = vtanh.pop %v1764
    %v1767 = vsub.f32 1.0, %v1756
    %v1768 = vsub.f32 1.0, %v1758
    %v1769 = vmul.f32 %v1767, %v1765
    %v1770 = vmul.f32 %v1768, %v1766
    %v1771 = vmul.f32 %v1756, %v1633
    %v1772 = vmul.f32 %v1758, %v1634
    %v1773 = vadd.f32 %v1769, %v1771
    %v1774 = vadd.f32 %v1770, %v1772
    %v1775 = vpack.c.bf16 %v1774, %v1773
    %s1776 = scalar_lea.vmem [#allocation3], 48
    %1777 = vst [vmem:[%s1776] sm:$0xff] %v1775
    %s1778 = smul.u32 14, 3
    %s1779 = smul.addr %s1778, 8
    %s1780 = scalar_lea.vmem [#allocation4], %s1779
    %v1781 = vld [vmem:[%s1780] sm:$0xff]
    %v1782 = vld [vmem:[%s1780 + $0x8] sm:$0xff]
    %v1783 = vld [vmem:[%s1780 + $0x10] sm:$0xff]
    %v1784 = vld [vmem:[%s1780 + $0x18] sm:$0xff]
    %v1785 = vld [vmem:[%s1780 + $0x20] sm:$0xff]
    %v1786 = vld [vmem:[%s1780 + $0x28] sm:$0xff]
    %1787 = vmatprep.subr.bf16.mxu0 %v755
    %1788 = vmatpush1.bf16.msra.mxu0 %v754
    %1789 = vmatprep.subr.bf16.mxu0 %v758
    %1790 = vmatpush1.bf16.msra.mxu0 %v757
    %1791 = vmatprep.subr.bf16.mxu0 %v761
    %1792 = vmatpush1.bf16.msra.mxu0 %v760
    %1793 = vmatprep.subr.bf16.mxu0 %v764
    %1794 = vmatpush1.bf16.msra.mxu0 %v763
    %1795 = vmatprep.subr.bf16.mxu0 %v767
    %1796 = vmatpush1.bf16.msra.mxu0 %v766
    %1797 = vmatprep.subr.bf16.mxu0 %v770
    %1798 = vmatpush1.bf16.msra.mxu0 %v769
    %1799 = vmatprep.subr.bf16.mxu0 %v773
    %1800 = vmatpush1.bf16.msra.mxu0 %v772
    %1801 = vmatprep.subr.bf16.mxu0 %v776
    %1802 = vmatpush1.bf16.msra.mxu0 %v775
    %1803 = vmatprep.subr.bf16.mxu0 0
    %1804 = vmatpush1.bf16.msra.mxu0 0
    %1805 = vmatprep.subr.bf16.mxu0 0
    %1806 = vmatpush1.bf16.msra.mxu0 0
    %1807 = vmatprep.subr.bf16.mxu0 0
    %1808 = vmatpush1.bf16.msra.mxu0 0
    %1809 = vmatprep.subr.bf16.mxu0 0
    %1810 = vmatpush1.bf16.msra.mxu0 0
    %1811 = vmatprep.subr.bf16.mxu0 0
    %1812 = vmatpush1.bf16.msra.mxu0 0
    %1813 = vmatprep.subr.bf16.mxu0 0
    %1814 = vmatpush1.bf16.msra.mxu0 0
    %1815 = vmatprep.subr.bf16.mxu0 0
    %1816 = vmatpush1.bf16.msra.mxu0 0
    %1817 = vmatprep.subr.bf16.mxu0 0
    %1818 = vmatpush1.bf16.msra.mxu0 0
    %1819 = vmatprep.mubr.bf16.mxu0 0
    %1820 = vmatmul.mubr.bf16.gmra.mrb[0].mxu0 %v1775
    %v1821 = vpop.f32.mrb[0].mxu0
    %v1822 = vadd.f32 %v662, %v1821
    %v1823 = vpop.f32.mrb[0].mxu0
    %v1824 = vadd.f32 %v666, %v1823
    %v1825 = vpop.f32.mrb[0].mxu0
    %v1826 = vadd.f32 %v662, %v1825
    %v1827 = vpop.f32.mrb[0].mxu0
    %v1828 = vadd.f32 %v666, %v1827
    %1829 = vdwg.mxu0
    %1830 = vmatprep.subr.bf16.mxu0 0
    %1831 = vmatpush1.bf16.msra.mxu0 %v756
    %1832 = vmatprep.subr.bf16.mxu0 0
    %1833 = vmatpush1.bf16.msra.mxu0 %v759
    %1834 = vmatprep.subr.bf16.mxu0 0
    %1835 = vmatpush1.bf16.msra.mxu0 %v762
    %1836 = vmatprep.subr.bf16.mxu0 0
    %1837 = vmatpush1.bf16.msra.mxu0 %v765
    %1838 = vmatprep.subr.bf16.mxu0 0
    %1839 = vmatpush1.bf16.msra.mxu0 %v768
    %1840 = vmatprep.subr.bf16.mxu0 0
    %1841 = vmatpush1.bf16.msra.mxu0 %v771
    %1842 = vmatprep.subr.bf16.mxu0 0
    %1843 = vmatpush1.bf16.msra.mxu0 %v774
    %1844 = vmatprep.subr.bf16.mxu0 0
    %1845 = vmatpush1.bf16.msra.mxu0 %v777
    %1846 = vmatprep.subr.bf16.mxu0 0
    %1847 = vmatpush1.bf16.msra.mxu0 0
    %1848 = vmatprep.subr.bf16.mxu0 0
    %1849 = vmatpush1.bf16.msra.mxu0 0
    %1850 = vmatprep.subr.bf16.mxu0 0
    %1851 = vmatpush1.bf16.msra.mxu0 0
    %1852 = vmatprep.subr.bf16.mxu0 0
    %1853 = vmatpush1.bf16.msra.mxu0 0
    %1854 = vmatprep.subr.bf16.mxu0 0
    %1855 = vmatpush1.bf16.msra.mxu0 0
    %1856 = vmatprep.subr.bf16.mxu0 0
    %1857 = vmatpush1.bf16.msra.mxu0 0
    %1858 = vmatprep.subr.bf16.mxu0 0
    %1859 = vmatpush1.bf16.msra.mxu0 0
    %1860 = vmatprep.subr.bf16.mxu0 0
    %1861 = vmatpush1.bf16.msra.mxu0 0
    %1862 = vmatprep.mubr.bf16.mxu0 0
    %1863 = vmatmul.mubr.bf16.gmra.mrb[0].mxu0 %v1775
    %v1864 = vpop.f32.mrb[0].mxu0
    %v1865 = vadd.f32 %v670, %v1864
    %v1866 = vpop.f32.mrb[0].mxu0
    %v1867 = vpop.f32.mrb[0].mxu0
    %v1868 = vadd.f32 %v670, %v1867
    %v1869 = vpop.f32.mrb[0].mxu0
    %1870 = vdwg.mxu0
    %v1871 = vadd.f32 %v1781, %v1822
    %v1872 = vadd.f32 %v1784, %v1826
    %v1873 = vxor.u32 %v1871, 2147483648
    %v1874 = vxor.u32 %v1872, 2147483648
    %v1875 = vmul.f32 %v1873, 1.442695
    %v1876 = vpow.pop %v1875
    %v1877 = vmul.f32 %v1874, 1.442695
    %v1878 = vpow.pop %v1877
    %v1879 = vadd.f32 %v1876, 1.0
    %v1880 = vadd.f32 %v1878, 1.0
    %v1881 = vrcp.pop %v1879
    %v1882 = vmul.f32 1.0, %v1881
    %v1883 = vrcp.pop %v1880
    %v1884 = vmul.f32 1.0, %v1883
    %v1885 = vadd.f32 %v1782, %v1824
    %v1886 = vadd.f32 %v1785, %v1828
    %v1887 = vxor.u32 %v1885, 2147483648
    %v1888 = vxor.u32 %v1886, 2147483648
    %v1889 = vmul.f32 %v1887, 1.442695
    %v1890 = vpow.pop %v1889
    %v1891 = vmul.f32 %v1888, 1.442695
    %v1892 = vpow.pop %v1891
    %v1893 = vadd.f32 %v1890, 1.0
    %v1894 = vadd.f32 %v1892, 1.0
    %v1895 = vrcp.pop %v1893
    %v1896 = vmul.f32 1.0, %v1895
    %v1897 = vrcp.pop %v1894
    %v1898 = vmul.f32 1.0, %v1897
    %v1899 = vadd.f32 %v1783, %v918
    %v1900 = vadd.f32 %v1786, %v918
    %v1901 = vmul.f32 %v1882, %v1865
    %v1902 = vmul.f32 %v1884, %v1868
    %v1903 = vadd.f32 %v1899, %v1901
    %v1904 = vadd.f32 %v1900, %v1902
    %v1905 = vtanh.pop %v1903
    %v1906 = vtanh.pop %v1904
    %v1907 = vsub.f32 1.0, %v1896
    %v1908 = vsub.f32 1.0, %v1898
    %v1909 = vmul.f32 %v1907, %v1905
    %v1910 = vmul.f32 %v1908, %v1906
    %v1911 = vmul.f32 %v1896, %v1773
    %v1912 = vmul.f32 %v1898, %v1774
    %v1913 = vadd.f32 %v1909, %v1911
    %v1914 = vadd.f32 %v1910, %v1912
    %v1915 = vpack.c.bf16 %v1914, %v1913
    %s1916 = scalar_lea.vmem [#allocation3], 56
    %1917 = vst [vmem:[%s1916] sm:$0xff] %v1915
    %1918 = vst [vmem:[#allocation2] sm:$0xff] %v1913
    %1919 = vst [vmem:[#allocation2 + $0x8] sm:$0xff] %v1914
    %v1920 = vld [vmem:[#allocation3] sm:$0xff]
    %v1921 = vld [vmem:[#allocation3 + $0x8] sm:$0xff]
    %v1922 = vld [vmem:[#allocation3 + $0x10] sm:$0xff]
    %v1923 = vld [vmem:[#allocation3 + $0x18] sm:$0xff]
    %v1924 = vld [vmem:[#allocation3 + $0x20] sm:$0xff]
    %v1925 = vld [vmem:[#allocation3 + $0x28] sm:$0xff]
    %v1926 = vld [vmem:[#allocation3 + $0x30] sm:$0xff]
    %v1927 = vld [vmem:[#allocation3 + $0x38] sm:$0xff]
    %v1928 = vld [vmem:[#allocation11] sm:$0xff]
    %v1929 = vld [vmem:[#allocation11 + $0x8] sm:$0xf]
    %v1930 = vld [vmem:[#allocation11 + $0xc] sm:$0xff]
    %v1931 = vld [vmem:[#allocation11 + $0x14] sm:$0xf]
    %v1932 = vld [vmem:[#allocation11 + $0x18] sm:$0xff]
    %v1933 = vld [vmem:[#allocation11 + $0x20] sm:$0xf]
    %v1934 = vld [vmem:[#allocation11 + $0x24] sm:$0xff]
    %v1935 = vld [vmem:[#allocation11 + $0x2c] sm:$0xf]
    %v1936 = vld [vmem:[#allocation11 + $0x30] sm:$0xff]
    %v1937 = vld [vmem:[#allocation11 + $0x38] sm:$0xf]
    %v1938 = vld [vmem:[#allocation11 + $0x3c] sm:$0xff]
    %v1939 = vld [vmem:[#allocation11 + $0x44] sm:$0xf]
    %v1940 = vld [vmem:[#allocation11 + $0x48] sm:$0xff]
    %v1941 = vld [vmem:[#allocation11 + $0x50] sm:$0xf]
    %v1942 = vld [vmem:[#allocation11 + $0x54] sm:$0xff]
    %v1943 = vld [vmem:[#allocation11 + $0x5c] sm:$0xf]
    %v1944 = vld [vmem:[#allocation11 + $0x60] sm:$0xff]
    %v1945 = vld [vmem:[#allocation11 + $0x68] sm:$0xf]
    %v1946 = vld [vmem:[#allocation11 + $0x6c] sm:$0xff]
    %v1947 = vld [vmem:[#allocation11 + $0x74] sm:$0xf]
    %v1948 = vld [vmem:[#allocation11 + $0x78] sm:$0xff]
    %v1949 = vld [vmem:[#allocation11 + $0x80] sm:$0xf]
    %v1950 = vld [vmem:[#allocation11 + $0x84] sm:$0xff]
    %v1951 = vld [vmem:[#allocation11 + $0x8c] sm:$0xf]
    %v1952 = vld [vmem:[#allocation11 + $0x90] sm:$0xff]
    %v1953 = vld [vmem:[#allocation11 + $0x98] sm:$0xf]
    %v1954 = vld [vmem:[#allocation11 + $0x9c] sm:$0xff]
    %v1955 = vld [vmem:[#allocation11 + $0xa4] sm:$0xf]
    %v1956 = vld [vmem:[#allocation11 + $0xa8] sm:$0xff]
    %v1957 = vld [vmem:[#allocation11 + $0xb0] sm:$0xf]
    %v1958 = vld [vmem:[#allocation11 + $0xb4] sm:$0xff]
    %v1959 = vld [vmem:[#allocation11 + $0xbc] sm:$0xf]
    %v1992 = vunpack.c.l.b16 %v1928
    %v1993 = vunpack.c.h.b16 %v1928
    %v1994 = vunpack.c.l.b16 %v1929
    %v1995 = vunpack.c.l.b16 %v1930
    %v1996 = vunpack.c.h.b16 %v1930
    %v1997 = vunpack.c.l.b16 %v1931
    %v1998 = vunpack.c.l.b16 %v1932
    %v1999 = vunpack.c.h.b16 %v1932
    %v2000 = vunpack.c.l.b16 %v1933
    %v2001 = vunpack.c.l.b16 %v1934
    %v2002 = vunpack.c.h.b16 %v1934
    %v2003 = vunpack.c.l.b16 %v1935
    %v2004 = vunpack.c.l.b16 %v1936
    %v2005 = vunpack.c.h.b16 %v1936
    %v2006 = vunpack.c.l.b16 %v1937
    %v2007 = vunpack.c.l.b16 %v1938
    %v2008 = vunpack.c.h.b16 %v1938
    %v2009 = vunpack.c.l.b16 %v1939
    %v2010 = vunpack.c.l.b16 %v1940
    %v2011 = vunpack.c.h.b16 %v1940
    %v2012 = vunpack.c.l.b16 %v1941
    %v2013 = vunpack.c.l.b16 %v1942
    %v2014 = vunpack.c.h.b16 %v1942
    %v2015 = vunpack.c.l.b16 %v1943
    %v2016 = vunpack.c.l.b16 %v1944
    %v2017 = vunpack.c.h.b16 %v1944
    %v2018 = vunpack.c.l.b16 %v1945
    %v2019 = vunpack.c.l.b16 %v1946
    %v2020 = vunpack.c.h.b16 %v1946
    %v2021 = vunpack.c.l.b16 %v1947
    %v2022 = vunpack.c.l.b16 %v1948
    %v2023 = vunpack.c.h.b16 %v1948
    %v2024 = vunpack.c.l.b16 %v1949
    %v2025 = vunpack.c.l.b16 %v1950
    %v2026 = vunpack.c.h.b16 %v1950
    %v2027 = vunpack.c.l.b16 %v1951
    %v2028 = vunpack.c.l.b16 %v1952
    %v2029 = vunpack.c.h.b16 %v1952
    %v2030 = vunpack.c.l.b16 %v1953
    %v2031 = vunpack.c.l.b16 %v1954
    %v2032 = vunpack.c.h.b16 %v1954
    %v2033 = vunpack.c.l.b16 %v1955
    %v2034 = vunpack.c.l.b16 %v1956
    %v2035 = vunpack.c.h.b16 %v1956
    %v2036 = vunpack.c.l.b16 %v1957
    %v2037 = vunpack.c.l.b16 %v1958
    %v2038 = vunpack.c.h.b16 %v1958
    %v2039 = vunpack.c.l.b16 %v1959
    %v2040 = vpack.c.b16 %v1995, %v1992
    %v2041 = vpack.c.b16 %v1996, %v1993
    %v2042 = vpack.c.b16 %v1997, %v1994
    %v2043 = vpack.c.b16 %v2001, %v1998
    %v2044 = vpack.c.b16 %v2002, %v1999
    %v2045 = vpack.c.b16 %v2003, %v2000
    %v2046 = vpack.c.b16 %v2007, %v2004
    %v2047 = vpack.c.b16 %v2008, %v2005
    %v2048 = vpack.c.b16 %v2009, %v2006
    %v2049 = vpack.c.b16 %v2013, %v2010
    %v2050 = vpack.c.b16 %v2014, %v2011
    %v2051 = vpack.c.b16 %v2015, %v2012
    %v2052 = vpack.c.b16 %v2019, %v2016
    %v2053 = vpack.c.b16 %v2020, %v2017
    %v2054 = vpack.c.b16 %v2021, %v2018
    %v2055 = vpack.c.b16 %v2025, %v2022
    %v2056 = vpack.c.b16 %v2026, %v2023
    %v2057 = vpack.c.b16 %v2027, %v2024
    %v2058 = vpack.c.b16 %v2031, %v2028
    %v2059 = vpack.c.b16 %v2032, %v2029
    %v2060 = vpack.c.b16 %v2033, %v2030
    %v2061 = vpack.c.b16 %v2037, %v2034
    %v2062 = vpack.c.b16 %v2038, %v2035
    %v2063 = vpack.c.b16 %v2039, %v2036
    %2088 = vmatprep.subr.bf16.mxu0 %v2041
    %2089 = vmatpush1.bf16.msra.mxu0 %v2040
    %2090 = vmatprep.subr.bf16.mxu0 %v2044
    %2091 = vmatpush1.bf16.msra.mxu0 %v2043
    %2092 = vmatprep.subr.bf16.mxu0 %v2047
    %2093 = vmatpush1.bf16.msra.mxu0 %v2046
    %2094 = vmatprep.subr.bf16.mxu0 %v2050
    %2095 = vmatpush1.bf16.msra.mxu0 %v2049
    %2096 = vmatprep.subr.bf16.mxu0 %v2053
    %2097 = vmatpush1.bf16.msra.mxu0 %v2052
    %2098 = vmatprep.subr.bf16.mxu0 %v2056
    %2099 = vmatpush1.bf16.msra.mxu0 %v2055
    %2100 = vmatprep.subr.bf16.mxu0 %v2059
    %2101 = vmatpush1.bf16.msra.mxu0 %v2058
    %2102 = vmatprep.subr.bf16.mxu0 %v2062
    %2103 = vmatpush1.bf16.msra.mxu0 %v2061
    %2104 = vmatprep.subr.bf16.mxu0 0
    %2105 = vmatpush1.bf16.msra.mxu0 0
    %2106 = vmatprep.subr.bf16.mxu0 0
    %2107 = vmatpush1.bf16.msra.mxu0 0
    %2108 = vmatprep.subr.bf16.mxu0 0
    %2109 = vmatpush1.bf16.msra.mxu0 0
    %2110 = vmatprep.subr.bf16.mxu0 0
    %2111 = vmatpush1.bf16.msra.mxu0 0
    %2112 = vmatprep.subr.bf16.mxu0 0
    %2113 = vmatpush1.bf16.msra.mxu0 0
    %2114 = vmatprep.subr.bf16.mxu0 0
    %2115 = vmatpush1.bf16.msra.mxu0 0
    %2116 = vmatprep.subr.bf16.mxu0 0
    %2117 = vmatpush1.bf16.msra.mxu0 0
    %2118 = vmatprep.subr.bf16.mxu0 0
    %2119 = vmatpush1.bf16.msra.mxu0 0
    %2120 = vmatprep.mubr.bf16.mxu0 0
    %2121 = vmatmul.mubr.bf16.gmra.mrb[0].mxu0 %v1920
    %v2122 = vpop.f32.mrb[0].mxu0
    %v2123 = vadd.f32 0.0, %v2122
    %v2124 = vpop.f32.mrb[0].mxu0
    %v2125 = vadd.f32 0.0, %v2124
    %v2126 = vpop.f32.mrb[0].mxu0
    %v2127 = vadd.f32 0.0, %v2126
    %v2128 = vpop.f32.mrb[0].mxu0
    %v2129 = vadd.f32 0.0, %v2128
    %2130 = vmatprep.mubr.bf16.mxu0 0
    %2131 = vmatmul.mubr.bf16.gmra.mrb[0].mxu0 %v1921
    %v2132 = vpop.f32.mrb[0].mxu0
    %v2133 = vadd.f32 0.0, %v2132
    %v2134 = vpop.f32.mrb[0].mxu0
    %v2135 = vadd.f32 0.0, %v2134
    %v2136 = vpop.f32.mrb[0].mxu0
    %v2137 = vadd.f32 0.0, %v2136
    %v2138 = vpop.f32.mrb[0].mxu0
    %v2139 = vadd.f32 0.0, %v2138
    %2140 = vmatprep.mubr.bf16.mxu0 0
    %2141 = vmatmul.mubr.bf16.gmra.mrb[0].mxu0 %v1922
    %v2142 = vpop.f32.mrb[0].mxu0
    %v2143 = vadd.f32 0.0, %v2142
    %v2144 = vpop.f32.mrb[0].mxu0
    %v2145 = vadd.f32 0.0, %v2144
    %v2146 = vpop.f32.mrb[0].mxu0
    %v2147 = vadd.f32 0.0, %v2146
    %v2148 = vpop.f32.mrb[0].mxu0
    %v2149 = vadd.f32 0.0, %v2148
    %2150 = vmatprep.mubr.bf16.mxu0 0
    %2151 = vmatmul.mubr.bf16.gmra.mrb[0].mxu0 %v1923
    %v2152 = vpop.f32.mrb[0].mxu0
    %v2153 = vadd.f32 0.0, %v2152
    %v2154 = vpop.f32.mrb[0].mxu0
    %v2155 = vadd.f32 0.0, %v2154
    %v2156 = vpop.f32.mrb[0].mxu0
    %v2157 = vadd.f32 0.0, %v2156
    %v2158 = vpop.f32.mrb[0].mxu0
    %v2159 = vadd.f32 0.0, %v2158
    %2160 = vmatprep.mubr.bf16.mxu0 0
    %2161 = vmatmul.mubr.bf16.gmra.mrb[0].mxu0 %v1924
    %v2162 = vpop.f32.mrb[0].mxu0
    %v2163 = vadd.f32 0.0, %v2162
    %v2164 = vpop.f32.mrb[0].mxu0
    %v2165 = vadd.f32 0.0, %v2164
    %v2166 = vpop.f32.mrb[0].mxu0
    %v2167 = vadd.f32 0.0, %v2166
    %v2168 = vpop.f32.mrb[0].mxu0
    %v2169 = vadd.f32 0.0, %v2168
    %2170 = vmatprep.mubr.bf16.mxu0 0
    %2171 = vmatmul.mubr.bf16.gmra.mrb[0].mxu0 %v1925
    %v2172 = vpop.f32.mrb[0].mxu0
    %v2173 = vadd.f32 0.0, %v2172
    %v2174 = vpop.f32.mrb[0].mxu0
    %v2175 = vadd.f32 0.0, %v2174
    %v2176 = vpop.f32.mrb[0].mxu0
    %v2177 = vadd.f32 0.0, %v2176
    %v2178 = vpop.f32.mrb[0].mxu0
    %v2179 = vadd.f32 0.0, %v2178
    %2180 = vmatprep.mubr.bf16.mxu0 0
    %2181 = vmatmul.mubr.bf16.gmra.mrb[0].mxu0 %v1926
    %v2182 = vpop.f32.mrb[0].mxu0
    %v2183 = vadd.f32 0.0, %v2182
    %v2184 = vpop.f32.mrb[0].mxu0
    %v2185 = vadd.f32 0.0, %v2184
    %v2186 = vpop.f32.mrb[0].mxu0
    %v2187 = vadd.f32 0.0, %v2186
    %v2188 = vpop.f32.mrb[0].mxu0
    %v2189 = vadd.f32 0.0, %v2188
    %2190 = vmatprep.mubr.bf16.mxu0 0
    %2191 = vmatmul.mubr.bf16.gmra.mrb[0].mxu0 %v1927
    %v2192 = vpop.f32.mrb[0].mxu0
    %v2193 = vadd.f32 0.0, %v2192
    %v2194 = vpop.f32.mrb[0].mxu0
    %v2195 = vadd.f32 0.0, %v2194
    %v2196 = vpop.f32.mrb[0].mxu0
    %v2197 = vadd.f32 0.0, %v2196
    %v2198 = vpop.f32.mrb[0].mxu0
    %v2199 = vadd.f32 0.0, %v2198
    %2200 = vdwg.mxu0
    %2201 = vmatprep.subr.bf16.mxu0 0
    %2202 = vmatpush1.bf16.msra.mxu0 %v2042
    %2203 = vmatprep.subr.bf16.mxu0 0
    %2204 = vmatpush1.bf16.msra.mxu0 %v2045
    %2205 = vmatprep.subr.bf16.mxu0 0
    %2206 = vmatpush1.bf16.msra.mxu0 %v2048
    %2207 = vmatprep.subr.bf16.mxu0 0
    %2208 = vmatpush1.bf16.msra.mxu0 %v2051
    %2209 = vmatprep.subr.bf16.mxu0 0
    %2210 = vmatpush1.bf16.msra.mxu0 %v2054
    %2211 = vmatprep.subr.bf16.mxu0 0
    %2212 = vmatpush1.bf16.msra.mxu0 %v2057
    %2213 = vmatprep.subr.bf16.mxu0 0
    %2214 = vmatpush1.bf16.msra.mxu0 %v2060
    %2215 = vmatprep.subr.bf16.mxu0 0
    %2216 = vmatpush1.bf16.msra.mxu0 %v2063
    %2217 = vmatprep.subr.bf16.mxu0 0
    %2218 = vmatpush1.bf16.msra.mxu0 0
    %2219 = vmatprep.subr.bf16.mxu0 0
    %2220 = vmatpush1.bf16.msra.mxu0 0
    %2221 = vmatprep.subr.bf16.mxu0 0
    %2222 = vmatpush1.bf16.msra.mxu0 0
    %2223 = vmatprep.subr.bf16.mxu0 0
    %2224 = vmatpush1.bf16.msra.mxu0 0
    %2225 = vmatprep.subr.bf16.mxu0 0
    %2226 = vmatpush1.bf16.msra.mxu0 0
    %2227 = vmatprep.subr.bf16.mxu0 0
    %2228 = vmatpush1.bf16.msra.mxu0 0
    %2229 = vmatprep.subr.bf16.mxu0 0
    %2230 = vmatpush1.bf16.msra.mxu0 0
    %2231 = vmatprep.subr.bf16.mxu0 0
    %2232 = vmatpush1.bf16.msra.mxu0 0
    %2233 = vmatprep.mubr.bf16.mxu0 0
    %2234 = vmatmul.mubr.bf16.gmra.mrb[0].mxu0 %v1920
    %v2235 = vpop.f32.mrb[0].mxu0
    %v2236 = vadd.f32 0.0, %v2235
    %v2237 = vpop.f32.mrb[0].mxu0
    %v2238 = vpop.f32.mrb[0].mxu0
    %v2239 = vadd.f32 0.0, %v2238
    %v2240 = vpop.f32.mrb[0].mxu0
    %2241 = vmatprep.mubr.bf16.mxu0 0
    %2242 = vmatmul.mubr.bf16.gmra.mrb[0].mxu0 %v1921
    %v2243 = vpop.f32.mrb[0].mxu0
    %v2244 = vadd.f32 0.0, %v2243
    %v2245 = vpop.f32.mrb[0].mxu0
    %v2246 = vpop.f32.mrb[0].mxu0
    %v2247 = vadd.f32 0.0, %v2246
    %v2248 = vpop.f32.mrb[0].mxu0
    %2249 = vmatprep.mubr.bf16.mxu0 0
    %2250 = vmatmul.mubr.bf16.gmra.mrb[0].mxu0 %v1922
    %v2251 = vpop.f32.mrb[0].mxu0
    %v2252 = vadd.f32 0.0, %v2251
    %v2253 = vpop.f32.mrb[0].mxu0
    %v2254 = vpop.f32.mrb[0].mxu0
    %v2255 = vadd.f32 0.0, %v2254
    %v2256 = vpop.f32.mrb[0].mxu0
    %2257 = vmatprep.mubr.bf16.mxu0 0
    %2258 = vmatmul.mubr.bf16.gmra.mrb[0].mxu0 %v1923
    %v2259 = vpop.f32.mrb[0].mxu0
    %v2260 = vadd.f32 0.0, %v2259
    %v2261 = vpop.f32.mrb[0].mxu0
    %v2262 = vpop.f32.mrb[0].mxu0
    %v2263 = vadd.f32 0.0, %v2262
    %v2264 = vpop.f32.mrb[0].mxu0
    %2265 = vmatprep.mubr.bf16.mxu0 0
    %2266 = vmatmul.mubr.bf16.gmra.mrb[0].mxu0 %v1924
    %v2267 = vpop.f32.mrb[0].mxu0
    %v2268 = vadd.f32 0.0, %v2267
    %v2269 = vpop.f32.mrb[0].mxu0
    %v2270 = vpop.f32.mrb[0].mxu0
    %v2271 = vadd.f32 0.0, %v2270
    %v2272 = vpop.f32.mrb[0].mxu0
    %2273 = vmatprep.mubr.bf16.mxu0 0
    %2274 = vmatmul.mubr.bf16.gmra.mrb[0].mxu0 %v1925
    %v2275 = vpop.f32.mrb[0].mxu0
    %v2276 = vadd.f32 0.0, %v2275
    %v2277 = vpop.f32.mrb[0].mxu0
    %v2278 = vpop.f32.mrb[0].mxu0
    %v2279 = vadd.f32 0.0, %v2278
    %v2280 = vpop.f32.mrb[0].mxu0
    %2281 = vmatprep.mubr.bf16.mxu0 0
    %2282 = vmatmul.mubr.bf16.gmra.mrb[0].mxu0 %v1926
    %v2283 = vpop.f32.mrb[0].mxu0
    %v2284 = vadd.f32 0.0, %v2283
    %v2285 = vpop.f32.mrb[0].mxu0
    %v2286 = vpop.f32.mrb[0].mxu0
    %v2287 = vadd.f32 0.0, %v2286
    %v2288 = vpop.f32.mrb[0].mxu0
    %2289 = vmatprep.mubr.bf16.mxu0 0
    %2290 = vmatmul.mubr.bf16.gmra.mrb[0].mxu0 %v1927
    %v2291 = vpop.f32.mrb[0].mxu0
    %v2292 = vadd.f32 0.0, %v2291
    %v2293 = vpop.f32.mrb[0].mxu0
    %v2294 = vpop.f32.mrb[0].mxu0
    %v2295 = vadd.f32 0.0, %v2294
    %v2296 = vpop.f32.mrb[0].mxu0
    %2297 = vdwg.mxu0
    %2298 = vst [vmem:[#allocation4] sm:$0xff] %v2123
    %2299 = vst [vmem:[#allocation4 + $0x8] sm:$0xff] %v2125
    %2300 = vst [vmem:[#allocation4 + $0x10] sm:$0xff] %v2236
    %2301 = vst [vmem:[#allocation4 + $0x18] sm:$0xff] %v2127
    %2302 = vst [vmem:[#allocation4 + $0x20] sm:$0xff] %v2129
    %2303 = vst [vmem:[#allocation4 + $0x28] sm:$0xff] %v2239
    %2304 = vst [vmem:[#allocation4 + $0x30] sm:$0xff] %v2133
    %2305 = vst [vmem:[#allocation4 + $0x38] sm:$0xff] %v2135
    %2306 = vst [vmem:[#allocation4 + $0x40] sm:$0xff] %v2244
    %2307 = vst [vmem:[#allocation4 + $0x48] sm:$0xff] %v2137
    %2308 = vst [vmem:[#allocation4 + $0x50] sm:$0xff] %v2139
    %2309 = vst [vmem:[#allocation4 + $0x58] sm:$0xff] %v2247
    %2310 = vst [vmem:[#allocation4 + $0x60] sm:$0xff] %v2143
    %2311 = vst [vmem:[#allocation4 + $0x68] sm:$0xff] %v2145
    %2312 = vst [vmem:[#allocation4 + $0x70] sm:$0xff] %v2252
    %2313 = vst [vmem:[#allocation4 + $0x78] sm:$0xff] %v2147
    %2314 = vst [vmem:[#allocation4 + $0x80] sm:$0xff] %v2149
    %2315 = vst [vmem:[#allocation4 + $0x88] sm:$0xff] %v2255
    %2316 = vst [vmem:[#allocation4 + $0x90] sm:$0xff] %v2153
    %2317 = vst [vmem:[#allocation4 + $0x98] sm:$0xff] %v2155
    %2318 = vst [vmem:[#allocation4 + $0xa0] sm:$0xff] %v2260
    %2319 = vst [vmem:[#allocation4 + $0xa8] sm:$0xff] %v2157
    %2320 = vst [vmem:[#allocation4 + $0xb0] sm:$0xff] %v2159
    %2321 = vst [vmem:[#allocation4 + $0xb8] sm:$0xff] %v2263
    %2322 = vst [vmem:[#allocation4 + $0xc0] sm:$0xff] %v2163
    %2323 = vst [vmem:[#allocation4 + $0xc8] sm:$0xff] %v2165
    %2324 = vst [vmem:[#allocation4 + $0xd0] sm:$0xff] %v2268
    %2325 = vst [vmem:[#allocation4 + $0xd8] sm:$0xff] %v2167
    %2326 = vst [vmem:[#allocation4 + $0xe0] sm:$0xff] %v2169
    %2327 = vst [vmem:[#allocation4 + $0xe8] sm:$0xff] %v2271
    %2328 = vst [vmem:[#allocation4 + $0xf0] sm:$0xff] %v2173
    %2329 = vst [vmem:[#allocation4 + $0xf8] sm:$0xff] %v2175
    %2330 = vst [vmem:[#allocation4 + $0x100] sm:$0xff] %v2276
    %2331 = vst [vmem:[#allocation4 + $0x108] sm:$0xff] %v2177
    %2332 = vst [vmem:[#allocation4 + $0x110] sm:$0xff] %v2179
    %2333 = vst [vmem:[#allocation4 + $0x118] sm:$0xff] %v2279
    %2334 = vst [vmem:[#allocation4 + $0x120] sm:$0xff] %v2183
    %2335 = vst [vmem:[#allocation4 + $0x128] sm:$0xff] %v2185
    %2336 = vst [vmem:[#allocation4 + $0x130] sm:$0xff] %v2284
    %2337 = vst [vmem:[#allocation4 + $0x138] sm:$0xff] %v2187
    %2338 = vst [vmem:[#allocation4 + $0x140] sm:$0xff] %v2189
    %2339 = vst [vmem:[#allocation4 + $0x148] sm:$0xff] %v2287
    %2340 = vst [vmem:[#allocation4 + $0x150] sm:$0xff] %v2193
    %2341 = vst [vmem:[#allocation4 + $0x158] sm:$0xff] %v2195
    %2342 = vst [vmem:[#allocation4 + $0x160] sm:$0xff] %v2292
    %2343 = vst [vmem:[#allocation4 + $0x168] sm:$0xff] %v2197
    %2344 = vst [vmem:[#allocation4 + $0x170] sm:$0xff] %v2199
    %2345 = vst [vmem:[#allocation4 + $0x178] sm:$0xff] %v2295
    %v2346 = vld [vmem:[#allocation13] sm:$0xff]
    %v2347 = vld [vmem:[#allocation13 + $0x8] sm:$0xf]
    %v2348 = vld [vmem:[#allocation13 + $0xc] sm:$0xff]
    %v2349 = vld [vmem:[#allocation13 + $0x14] sm:$0xf]
    %v2350 = vld [vmem:[#allocation13 + $0x18] sm:$0xff]
    %v2351 = vld [vmem:[#allocation13 + $0x20] sm:$0xf]
    %v2352 = vld [vmem:[#allocation13 + $0x24] sm:$0xff]
    %v2353 = vld [vmem:[#allocation13 + $0x2c] sm:$0xf]
    %v2354 = vld [vmem:[#allocation13 + $0x30] sm:$0xff]
    %v2355 = vld [vmem:[#allocation13 + $0x38] sm:$0xf]
    %v2356 = vld [vmem:[#allocation13 + $0x3c] sm:$0xff]
    %v2357 = vld [vmem:[#allocation13 + $0x44] sm:$0xf]
    %v2358 = vld [vmem:[#allocation13 + $0x48] sm:$0xff]
    %v2359 = vld [vmem:[#allocation13 + $0x50] sm:$0xf]
    %v2360 = vld [vmem:[#allocation13 + $0x54] sm:$0xff]
    %v2361 = vld [vmem:[#allocation13 + $0x5c] sm:$0xf]
    %v2362 = vld [vmem:[#allocation13 + $0x60] sm:$0xff]
    %v2363 = vld [vmem:[#allocation13 + $0x68] sm:$0xf]
    %v2364 = vld [vmem:[#allocation13 + $0x6c] sm:$0xff]
    %v2365 = vld [vmem:[#allocation13 + $0x74] sm:$0xf]
    %v2366 = vld [vmem:[#allocation13 + $0x78] sm:$0xff]
    %v2367 = vld [vmem:[#allocation13 + $0x80] sm:$0xf]
    %v2368 = vld [vmem:[#allocation13 + $0x84] sm:$0xff]
    %v2369 = vld [vmem:[#allocation13 + $0x8c] sm:$0xf]
    %v2370 = vld [vmem:[#allocation13 + $0x90] sm:$0xff]
    %v2371 = vld [vmem:[#allocation13 + $0x98] sm:$0xf]
    %v2372 = vld [vmem:[#allocation13 + $0x9c] sm:$0xff]
    %v2373 = vld [vmem:[#allocation13 + $0xa4] sm:$0xf]
    %v2374 = vld [vmem:[#allocation13 + $0xa8] sm:$0xff]
    %v2375 = vld [vmem:[#allocation13 + $0xb0] sm:$0xf]
    %v2376 = vld [vmem:[#allocation13 + $0xb4] sm:$0xff]
    %v2377 = vld [vmem:[#allocation13 + $0xbc] sm:$0xf]
    %v2378 = vld [vmem:[%s7] sm:$0x7]
    %v2379 = vld [vmem:[%s8] sm:$0x1]
    %s2380 = scalar_lea.vmem [#allocation2], 16
    %v2381 = vld [vmem:[%s2380] sm:$0xff]
    %v2382 = vld [vmem:[%s2380 + $0x8] sm:$0xff]
    %v2383 = vld [vmem:[%s650] sm:$0xff]
    %v2384 = vld [vmem:[%s650 + $0x8] sm:$0xff]
    %v2385 = vld [vmem:[%s650 + $0x10] sm:$0xff]
    %v2386 = vld [vmem:[%s650 + $0x18] sm:$0xff]
    %v2387 = vld [vmem:[%s650 + $0x20] sm:$0xff]
    %v2388 = vld [vmem:[%s650 + $0x28] sm:$0xff]
    %v2389 = vpack.c.bf16 %v2382, %v2381
    %v2391 = vlaneseq
    %v2392 = vshrl.u32 %v2391, 7
    %v2393 = vsub.s32 0, %v2392
    %v2394 = vrot.slane %v2378, %v2393
    %v2395 = vlaneseq
    %v2396 = vshrl.u32 %v2395, 7
    %v2397 = vsub.s32 1, %v2396
    %v2398 = vrot.slane %v2378, %v2397
    %v2399 = vlaneseq
    %v2400 = vshrl.u32 %v2399, 7
    %v2401 = vsub.s32 2, %v2400
    %v2402 = vrot.slane %v2378, %v2401
    %v2438 = vunpack.c.l.b16 %v2346
    %v2439 = vunpack.c.h.b16 %v2346
    %v2440 = vunpack.c.l.b16 %v2347
    %v2441 = vunpack.c.l.b16 %v2348
    %v2442 = vunpack.c.h.b16 %v2348
    %v2443 = vunpack.c.l.b16 %v2349
    %v2444 = vunpack.c.l.b16 %v2350
    %v2445 = vunpack.c.h.b16 %v2350
    %v2446 = vunpack.c.l.b16 %v2351
    %v2447 = vunpack.c.l.b16 %v2352
    %v2448 = vunpack.c.h.b16 %v2352
    %v2449 = vunpack.c.l.b16 %v2353
    %v2450 = vunpack.c.l.b16 %v2354
    %v2451 = vunpack.c.h.b16 %v2354
    %v2452 = vunpack.c.l.b16 %v2355
    %v2453 = vunpack.c.l.b16 %v2356
    %v2454 = vunpack.c.h.b16 %v2356
    %v2455 = vunpack.c.l.b16 %v2357
    %v2456 = vunpack.c.l.b16 %v2358
    %v2457 = vunpack.c.h.b16 %v2358
    %v2458 = vunpack.c.l.b16 %v2359
    %v2459 = vunpack.c.l.b16 %v2360
    %v2460 = vunpack.c.h.b16 %v2360
    %v2461 = vunpack.c.l.b16 %v2361
    %v2462 = vunpack.c.l.b16 %v2362
    %v2463 = vunpack.c.h.b16 %v2362
    %v2464 = vunpack.c.l.b16 %v2363
    %v2465 = vunpack.c.l.b16 %v2364
    %v2466 = vunpack.c.h.b16 %v2364
    %v2467 = vunpack.c.l.b16 %v2365
    %v2468 = vunpack.c.l.b16 %v2366
    %v2469 = vunpack.c.h.b16 %v2366
    %v2470 = vunpack.c.l.b16 %v2367
    %v2471 = vunpack.c.l.b16 %v2368
    %v2472 = vunpack.c.h.b16 %v2368
    %v2473 = vunpack.c.l.b16 %v2369
    %v2474 = vunpack.c.l.b16 %v2370
    %v2475 = vunpack.c.h.b16 %v2370
    %v2476 = vunpack.c.l.b16 %v2371
    %v2477 = vunpack.c.l.b16 %v2372
    %v2478 = vunpack.c.h.b16 %v2372
    %v2479 = vunpack.c.l.b16 %v2373
    %v2480 = vunpack.c.l.b16 %v2374
    %v2481 = vunpack.c.h.b16 %v2374
    %v2482 = vunpack.c.l.b16 %v2375
    %v2483 = vunpack.c.l.b16 %v2376
    %v2484 = vunpack.c.h.b16 %v2376
    %v2485 = vunpack.c.l.b16 %v2377
    %v2486 = vpack.c.b16 %v2441, %v2438
    %v2487 = vpack.c.b16 %v2442, %v2439
    %v2488 = vpack.c.b16 %v2443, %v2440
    %v2489 = vpack.c.b16 %v2447, %v2444
    %v2490 = vpack.c.b16 %v2448, %v2445
    %v2491 = vpack.c.b16 %v2449, %v2446
    %v2492 = vpack.c.b16 %v2453, %v2450
    %v2493 = vpack.c.b16 %v2454, %v2451
    %v2494 = vpack.c.b16 %v2455, %v2452
    %v2495 = vpack.c.b16 %v2459, %v2456
    %v2496 = vpack.c.b16 %v2460, %v2457
    %v2497 = vpack.c.b16 %v2461, %v2458
    %v2498 = vpack.c.b16 %v2465, %v2462
    %v2499 = vpack.c.b16 %v2466, %v2463
    %v2500 = vpack.c.b16 %v2467, %v2464
    %v2501 = vpack.c.b16 %v2471, %v2468
    %v2502 = vpack.c.b16 %v2472, %v2469
    %v2503 = vpack.c.b16 %v2473, %v2470
    %v2504 = vpack.c.b16 %v2477, %v2474
    %v2505 = vpack.c.b16 %v2478, %v2475
    %v2506 = vpack.c.b16 %v2479, %v2476
    %v2507 = vpack.c.b16 %v2483, %v2480
    %v2508 = vpack.c.b16 %v2484, %v2481
    %v2509 = vpack.c.b16 %v2485, %v2482
    %2534 = vmatprep.subr.bf16.mxu0 %v2487
    %2535 = vmatpush1.bf16.msra.mxu0 %v2486
    %2536 = vmatprep.subr.bf16.mxu0 %v2490
    %2537 = vmatpush1.bf16.msra.mxu0 %v2489
    %2538 = vmatprep.subr.bf16.mxu0 %v2493
    %2539 = vmatpush1.bf16.msra.mxu0 %v2492
    %2540 = vmatprep.subr.bf16.mxu0 %v2496
    %2541 = vmatpush1.bf16.msra.mxu0 %v2495
    %2542 = vmatprep.subr.bf16.mxu0 %v2499
    %2543 = vmatpush1.bf16.msra.mxu0 %v2498
    %2544 = vmatprep.subr.bf16.mxu0 %v2502
    %2545 = vmatpush1.bf16.msra.mxu0 %v2501
    %2546 = vmatprep.subr.bf16.mxu0 %v2505
    %2547 = vmatpush1.bf16.msra.mxu0 %v2504
    %2548 = vmatprep.subr.bf16.mxu0 %v2508
    %2549 = vmatpush1.bf16.msra.mxu0 %v2507
    %2550 = vmatprep.subr.bf16.mxu0 0
    %2551 = vmatpush1.bf16.msra.mxu0 0
    %2552 = vmatprep.subr.bf16.mxu0 0
    %2553 = vmatpush1.bf16.msra.mxu0 0
    %2554 = vmatprep.subr.bf16.mxu0 0
    %2555 = vmatpush1.bf16.msra.mxu0 0
    %2556 = vmatprep.subr.bf16.mxu0 0
    %2557 = vmatpush1.bf16.msra.mxu0 0
    %2558 = vmatprep.subr.bf16.mxu0 0
    %2559 = vmatpush1.bf16.msra.mxu0 0
    %2560 = vmatprep.subr.bf16.mxu0 0
    %2561 = vmatpush1.bf16.msra.mxu0 0
    %2562 = vmatprep.subr.bf16.mxu0 0
    %2563 = vmatpush1.bf16.msra.mxu0 0
    %2564 = vmatprep.subr.bf16.mxu0 0
    %2565 = vmatpush1.bf16.msra.mxu0 0
    %2566 = vmatprep.mubr.bf16.mxu0 0
    %2567 = vmatmul.mubr.bf16.gmra.mrb[0].mxu0 %v2389
    %v2568 = vpop.f32.mrb[0].mxu0
    %v2569 = vadd.f32 %v2394, %v2568
    %v2570 = vpop.f32.mrb[0].mxu0
    %v2571 = vadd.f32 %v2398, %v2570
    %v2572 = vpop.f32.mrb[0].mxu0
    %v2573 = vadd.f32 %v2394, %v2572
    %v2574 = vpop.f32.mrb[0].mxu0
    %v2575 = vadd.f32 %v2398, %v2574
    %2576 = vdwg.mxu0
    %2577 = vmatprep.subr.bf16.mxu0 0
    %2578 = vmatpush1.bf16.msra.mxu0 %v2488
    %2579 = vmatprep.subr.bf16.mxu0 0
    %2580 = vmatpush1.bf16.msra.mxu0 %v2491
    %2581 = vmatprep.subr.bf16.mxu0 0
    %2582 = vmatpush1.bf16.msra.mxu0 %v2494
    %2583 = vmatprep.subr.bf16.mxu0 0
    %2584 = vmatpush1.bf16.msra.mxu0 %v2497
    %2585 = vmatprep.subr.bf16.mxu0 0
    %2586 = vmatpush1.bf16.msra.mxu0 %v2500
    %2587 = vmatprep.subr.bf16.mxu0 0
    %2588 = vmatpush1.bf16.msra.mxu0 %v2503
    %2589 = vmatprep.subr.bf16.mxu0 0
    %2590 = vmatpush1.bf16.msra.mxu0 %v2506
    %2591 = vmatprep.subr.bf16.mxu0 0
    %2592 = vmatpush1.bf16.msra.mxu0 %v2509
    %2593 = vmatprep.subr.bf16.mxu0 0
    %2594 = vmatpush1.bf16.msra.mxu0 0
    %2595 = vmatprep.subr.bf16.mxu0 0
    %2596 = vmatpush1.bf16.msra.mxu0 0
    %2597 = vmatprep.subr.bf16.mxu0 0
    %2598 = vmatpush1.bf16.msra.mxu0 0
    %2599 = vmatprep.subr.bf16.mxu0 0
    %2600 = vmatpush1.bf16.msra.mxu0 0
    %2601 = vmatprep.subr.bf16.mxu0 0
    %2602 = vmatpush1.bf16.msra.mxu0 0
    %2603 = vmatprep.subr.bf16.mxu0 0
    %2604 = vmatpush1.bf16.msra.mxu0 0
    %2605 = vmatprep.subr.bf16.mxu0 0
    %2606 = vmatpush1.bf16.msra.mxu0 0
    %2607 = vmatprep.subr.bf16.mxu0 0
    %2608 = vmatpush1.bf16.msra.mxu0 0
    %2609 = vmatprep.mubr.bf16.mxu0 0
    %2610 = vmatmul.mubr.bf16.gmra.mrb[0].mxu0 %v2389
    %v2611 = vpop.f32.mrb[0].mxu0
    %v2612 = vadd.f32 %v2402, %v2611
    %v2613 = vpop.f32.mrb[0].mxu0
    %v2614 = vpop.f32.mrb[0].mxu0
    %v2615 = vadd.f32 %v2402, %v2614
    %v2616 = vpop.f32.mrb[0].mxu0
    %2617 = vdwg.mxu0
    %v2618 = vadd.f32 %v2383, %v2569
    %v2619 = vadd.f32 %v2386, %v2573
    %v2620 = vxor.u32 %v2618, 2147483648
    %v2621 = vxor.u32 %v2619, 2147483648
    %v2622 = vmul.f32 %v2620, 1.442695
    %v2623 = vpow.pop %v2622
    %v2624 = vmul.f32 %v2621, 1.442695
    %v2625 = vpow.pop %v2624
    %v2626 = vadd.f32 %v2623, 1.0
    %v2627 = vadd.f32 %v2625, 1.0
    %v2628 = vrcp.pop %v2626
    %v2629 = vmul.f32 1.0, %v2628
    %v2630 = vrcp.pop %v2627
    %v2631 = vmul.f32 1.0, %v2630
    %v2632 = vadd.f32 %v2384, %v2571
    %v2633 = vadd.f32 %v2387, %v2575
    %v2634 = vxor.u32 %v2632, 2147483648
    %v2635 = vxor.u32 %v2633, 2147483648
    %v2636 = vmul.f32 %v2634, 1.442695
    %v2637 = vpow.pop %v2636
    %v2638 = vmul.f32 %v2635, 1.442695
    %v2639 = vpow.pop %v2638
    %v2640 = vadd.f32 %v2637, 1.0
    %v2641 = vadd.f32 %v2639, 1.0
    %v2642 = vrcp.pop %v2640
    %v2643 = vmul.f32 1.0, %v2642
    %v2644 = vrcp.pop %v2641
    %v2645 = vmul.f32 1.0, %v2644
    %v2647 = vlaneseq
    %v2648 = vshrl.u32 %v2647, 7
    %v2649 = vsub.s32 0, %v2648
    %v2650 = vrot.slane %v2379, %v2649
    %v2652 = vadd.f32 %v2385, %v2650
    %v2653 = vadd.f32 %v2388, %v2650
    %v2654 = vmul.f32 %v2629, %v2612
    %v2655 = vmul.f32 %v2631, %v2615
    %v2656 = vadd.f32 %v2652, %v2654
    %v2657 = vadd.f32 %v2653, %v2655
    %v2658 = vtanh.pop %v2656
    %v2659 = vtanh.pop %v2657
    %v2660 = vsub.f32 1.0, %v2643
    %v2661 = vsub.f32 1.0, %v2645
    %v2662 = vmul.f32 %v2660, %v2658
    %v2663 = vmul.f32 %v2661, %v2659
    %v2664 = vmul.f32 %v2643, %v2381
    %v2665 = vmul.f32 %v2645, %v2382
    %v2666 = vadd.f32 %v2662, %v2664
    %v2667 = vadd.f32 %v2663, %v2665
    %v2668 = vtanh.pop %v2666
    %v2669 = vtanh.pop %v2667
    %v2670 = vpack.c.bf16 %v2669, %v2668
    %2671 = vst [vmem:[#allocation3] sm:$0xff] %v2670
    %v2672 = vld [vmem:[%s940] sm:$0xff]
    %v2673 = vld [vmem:[%s940 + $0x8] sm:$0xff]
    %v2674 = vld [vmem:[%s940 + $0x10] sm:$0xff]
    %v2675 = vld [vmem:[%s940 + $0x18] sm:$0xff]
    %v2676 = vld [vmem:[%s940 + $0x20] sm:$0xff]
    %v2677 = vld [vmem:[%s940 + $0x28] sm:$0xff]
    %v2678 = vpack.c.bf16 %v2667, %v2666
    %2679 = vmatprep.subr.bf16.mxu0 %v2487
    %2680 = vmatpush1.bf16.msra.mxu0 %v2486
    %2681 = vmatprep.subr.bf16.mxu0 %v2490
    %2682 = vmatpush1.bf16.msra.mxu0 %v2489
    %2683 = vmatprep.subr.bf16.mxu0 %v2493
    %2684 = vmatpush1.bf16.msra.mxu0 %v2492
    %2685 = vmatprep.subr.bf16.mxu0 %v2496
    %2686 = vmatpush1.bf16.msra.mxu0 %v2495
    %2687 = vmatprep.subr.bf16.mxu0 %v2499
    %2688 = vmatpush1.bf16.msra.mxu0 %v2498
    %2689 = vmatprep.subr.bf16.mxu0 %v2502
    %2690 = vmatpush1.bf16.msra.mxu0 %v2501
    %2691 = vmatprep.subr.bf16.mxu0 %v2505
    %2692 = vmatpush1.bf16.msra.mxu0 %v2504
    %2693 = vmatprep.subr.bf16.mxu0 %v2508
    %2694 = vmatpush1.bf16.msra.mxu0 %v2507
    %2695 = vmatprep.subr.bf16.mxu0 0
    %2696 = vmatpush1.bf16.msra.mxu0 0
    %2697 = vmatprep.subr.bf16.mxu0 0
    %2698 = vmatpush1.bf16.msra.mxu0 0
    %2699 = vmatprep.subr.bf16.mxu0 0
    %2700 = vmatpush1.bf16.msra.mxu0 0
    %2701 = vmatprep.subr.bf16.mxu0 0
    %2702 = vmatpush1.bf16.msra.mxu0 0
    %2703 = vmatprep.subr.bf16.mxu0 0
    %2704 = vmatpush1.bf16.msra.mxu0 0
    %2705 = vmatprep.subr.bf16.mxu0 0
    %2706 = vmatpush1.bf16.msra.mxu0 0
    %2707 = vmatprep.subr.bf16.mxu0 0
    %2708 = vmatpush1.bf16.msra.mxu0 0
    %2709 = vmatprep.subr.bf16.mxu0 0
    %2710 = vmatpush1.bf16.msra.mxu0 0
    %2711 = vmatprep.mubr.bf16.mxu0 0
    %2712 = vmatmul.mubr.bf16.gmra.mrb[0].mxu0 %v2678
    %v2713 = vpop.f32.mrb[0].mxu0
    %v2714 = vadd.f32 %v2394, %v2713
    %v2715 = vpop.f32.mrb[0].mxu0
    %v2716 = vadd.f32 %v2398, %v2715
    %v2717 = vpop.f32.mrb[0].mxu0
    %v2718 = vadd.f32 %v2394, %v2717
    %v2719 = vpop.f32.mrb[0].mxu0
    %v2720 = vadd.f32 %v2398, %v2719
    %2721 = vdwg.mxu0
    %2722 = vmatprep.subr.bf16.mxu0 0
    %2723 = vmatpush1.bf16.msra.mxu0 %v2488
    %2724 = vmatprep.subr.bf16.mxu0 0
    %2725 = vmatpush1.bf16.msra.mxu0 %v2491
    %2726 = vmatprep.subr.bf16.mxu0 0
    %2727 = vmatpush1.bf16.msra.mxu0 %v2494
    %2728 = vmatprep.subr.bf16.mxu0 0
    %2729 = vmatpush1.bf16.msra.mxu0 %v2497
    %2730 = vmatprep.subr.bf16.mxu0 0
    %2731 = vmatpush1.bf16.msra.mxu0 %v2500
    %2732 = vmatprep.subr.bf16.mxu0 0
    %2733 = vmatpush1.bf16.msra.mxu0 %v2503
    %2734 = vmatprep.subr.bf16.mxu0 0
    %2735 = vmatpush1.bf16.msra.mxu0 %v2506
    %2736 = vmatprep.subr.bf16.mxu0 0
    %2737 = vmatpush1.bf16.msra.mxu0 %v2509
    %2738 = vmatprep.subr.bf16.mxu0 0
    %2739 = vmatpush1.bf16.msra.mxu0 0
    %2740 = vmatprep.subr.bf16.mxu0 0
    %2741 = vmatpush1.bf16.msra.mxu0 0
    %2742 = vmatprep.subr.bf16.mxu0 0
    %2743 = vmatpush1.bf16.msra.mxu0 0
    %2744 = vmatprep.subr.bf16.mxu0 0
    %2745 = vmatpush1.bf16.msra.mxu0 0
    %2746 = vmatprep.subr.bf16.mxu0 0
    %2747 = vmatpush1.bf16.msra.mxu0 0
    %2748 = vmatprep.subr.bf16.mxu0 0
    %2749 = vmatpush1.bf16.msra.mxu0 0
    %2750 = vmatprep.subr.bf16.mxu0 0
    %2751 = vmatpush1.bf16.msra.mxu0 0
    %2752 = vmatprep.subr.bf16.mxu0 0
    %2753 = vmatpush1.bf16.msra.mxu0 0
    %2754 = vmatprep.mubr.bf16.mxu0 0
    %2755 = vmatmul.mubr.bf16.gmra.mrb[0].mxu0 %v2678
    %v2756 = vpop.f32.mrb[0].mxu0
    %v2757 = vadd.f32 %v2402, %v2756
    %v2758 = vpop.f32.mrb[0].mxu0
    %v2759 = vpop.f32.mrb[0].mxu0
    %v2760 = vadd.f32 %v2402, %v2759
    %v2761 = vpop.f32.mrb[0].mxu0
    %2762 = vdwg.mxu0
    %v2763 = vadd.f32 %v2672, %v2714
    %v2764 = vadd.f32 %v2675, %v2718
    %v2765 = vxor.u32 %v2763, 2147483648
    %v2766 = vxor.u32 %v2764, 2147483648
    %v2767 = vmul.f32 %v2765, 1.442695
    %v2768 = vpow.pop %v2767
    %v2769 = vmul.f32 %v2766, 1.442695
    %v2770 = vpow.pop %v2769
    %v2771 = vadd.f32 %v2768, 1.0
    %v2772 = vadd.f32 %v2770, 1.0
    %v2773 = vrcp.pop %v2771
    %v2774 = vmul.f32 1.0, %v2773
    %v2775 = vrcp.pop %v2772
    %v2776 = vmul.f32 1.0, %v2775
    %v2777 = vadd.f32 %v2673, %v2716
    %v2778 = vadd.f32 %v2676, %v2720
    %v2779 = vxor.u32 %v2777, 2147483648
    %v2780 = vxor.u32 %v2778, 2147483648
    %v2781 = vmul.f32 %v2779, 1.442695
    %v2782 = vpow.pop %v2781
    %v2783 = vmul.f32 %v2780, 1.442695
    %v2784 = vpow.pop %v2783
    %v2785 = vadd.f32 %v2782, 1.0
    %v2786 = vadd.f32 %v2784, 1.0
    %v2787 = vrcp.pop %v2785
    %v2788 = vmul.f32 1.0, %v2787
    %v2789 = vrcp.pop %v2786
    %v2790 = vmul.f32 1.0, %v2789
    %v2791 = vadd.f32 %v2674, %v2650
    %v2792 = vadd.f32 %v2677, %v2650
    %v2793 = vmul.f32 %v2774, %v2757
    %v2794 = vmul.f32 %v2776, %v2760
    %v2795 = vadd.f32 %v2791, %v2793
    %v2796 = vadd.f32 %v2792, %v2794
    %v2797 = vtanh.pop %v2795
    %v2798 = vtanh.pop %v2796
    %v2799 = vsub.f32 1.0, %v2788
    %v2800 = vsub.f32 1.0, %v2790
    %v2801 = vmul.f32 %v2799, %v2797
    %v2802 = vmul.f32 %v2800, %v2798
    %v2803 = vmul.f32 %v2788, %v2666
    %v2804 = vmul.f32 %v2790, %v2667
    %v2805 = vadd.f32 %v2801, %v2803
    %v2806 = vadd.f32 %v2802, %v2804
    %v2807 = vtanh.pop %v2805
    %v2808 = vtanh.pop %v2806
    %v2809 = vpack.c.bf16 %v2808, %v2807
    %2810 = vst [vmem:[%s1076] sm:$0xff] %v2809
    %v2811 = vld [vmem:[%s1080] sm:$0xff]
    %v2812 = vld [vmem:[%s1080 + $0x8] sm:$0xff]
    %v2813 = vld [vmem:[%s1080 + $0x10] sm:$0xff]
    %v2814 = vld [vmem:[%s1080 + $0x18] sm:$0xff]
    %v2815 = vld [vmem:[%s1080 + $0x20] sm:$0xff]
    %v2816 = vld [vmem:[%s1080 + $0x28] sm:$0xff]
    %v2817 = vpack.c.bf16 %v2806, %v2805
    %2818 = vmatprep.subr.bf16.mxu0 %v2487
    %2819 = vmatpush1.bf16.msra.mxu0 %v2486
    %2820 = vmatprep.subr.bf16.mxu0 %v2490
    %2821 = vmatpush1.bf16.msra.mxu0 %v2489
    %2822 = vmatprep.subr.bf16.mxu0 %v2493
    %2823 = vmatpush1.bf16.msra.mxu0 %v2492
    %2824 = vmatprep.subr.bf16.mxu0 %v2496
    %2825 = vmatpush1.bf16.msra.mxu0 %v2495
    %2826 = vmatprep.subr.bf16.mxu0 %v2499
    %2827 = vmatpush1.bf16.msra.mxu0 %v2498
    %2828 = vmatprep.subr.bf16.mxu0 %v2502
    %2829 = vmatpush1.bf16.msra.mxu0 %v2501
    %2830 = vmatprep.subr.bf16.mxu0 %v2505
    %2831 = vmatpush1.bf16.msra.mxu0 %v2504
    %2832 = vmatprep.subr.bf16.mxu0 %v2508
    %2833 = vmatpush1.bf16.msra.mxu0 %v2507
    %2834 = vmatprep.subr.bf16.mxu0 0
    %2835 = vmatpush1.bf16.msra.mxu0 0
    %2836 = vmatprep.subr.bf16.mxu0 0
    %2837 = vmatpush1.bf16.msra.mxu0 0
    %2838 = vmatprep.subr.bf16.mxu0 0
    %2839 = vmatpush1.bf16.msra.mxu0 0
    %2840 = vmatprep.subr.bf16.mxu0 0
    %2841 = vmatpush1.bf16.msra.mxu0 0
    %2842 = vmatprep.subr.bf16.mxu0 0
    %2843 = vmatpush1.bf16.msra.mxu0 0
    %2844 = vmatprep.subr.bf16.mxu0 0
    %2845 = vmatpush1.bf16.msra.mxu0 0
    %2846 = vmatprep.subr.bf16.mxu0 0
    %2847 = vmatpush1.bf16.msra.mxu0 0
    %2848 = vmatprep.subr.bf16.mxu0 0
    %2849 = vmatpush1.bf16.msra.mxu0 0
    %2850 = vmatprep.mubr.bf16.mxu0 0
    %2851 = vmatmul.mubr.bf16.gmra.mrb[0].mxu0 %v2817
    %v2852 = vpop.f32.mrb[0].mxu0
    %v2853 = vadd.f32 %v2394, %v2852
    %v2854 = vpop.f32.mrb[0].mxu0
    %v2855 = vadd.f32 %v2398, %v2854
    %v2856 = vpop.f32.mrb[0].mxu0
    %v2857 = vadd.f32 %v2394, %v2856
    %v2858 = vpop.f32.mrb[0].mxu0
    %v2859 = vadd.f32 %v2398, %v2858
    %2860 = vdwg.mxu0
    %2861 = vmatprep.subr.bf16.mxu0 0
    %2862 = vmatpush1.bf16.msra.mxu0 %v2488
    %2863 = vmatprep.subr.bf16.mxu0 0
    %2864 = vmatpush1.bf16.msra.mxu0 %v2491
    %2865 = vmatprep.subr.bf16.mxu0 0
    %2866 = vmatpush1.bf16.msra.mxu0 %v2494
    %2867 = vmatprep.subr.bf16.mxu0 0
    %2868 = vmatpush1.bf16.msra.mxu0 %v2497
    %2869 = vmatprep.subr.bf16.mxu0 0
    %2870 = vmatpush1.bf16.msra.mxu0 %v2500
    %2871 = vmatprep.subr.bf16.mxu0 0
    %2872 = vmatpush1.bf16.msra.mxu0 %v2503
    %2873 = vmatprep.subr.bf16.mxu0 0
    %2874 = vmatpush1.bf16.msra.mxu0 %v2506
    %2875 = vmatprep.subr.bf16.mxu0 0
    %2876 = vmatpush1.bf16.msra.mxu0 %v2509
    %2877 = vmatprep.subr.bf16.mxu0 0
    %2878 = vmatpush1.bf16.msra.mxu0 0
    %2879 = vmatprep.subr.bf16.mxu0 0
    %2880 = vmatpush1.bf16.msra.mxu0 0
    %2881 = vmatprep.subr.bf16.mxu0 0
    %2882 = vmatpush1.bf16.msra.mxu0 0
    %2883 = vmatprep.subr.bf16.mxu0 0
    %2884 = vmatpush1.bf16.msra.mxu0 0
    %2885 = vmatprep.subr.bf16.mxu0 0
    %2886 = vmatpush1.bf16.msra.mxu0 0
    %2887 = vmatprep.subr.bf16.mxu0 0
    %2888 = vmatpush1.bf16.msra.mxu0 0
    %2889 = vmatprep.subr.bf16.mxu0 0
    %2890 = vmatpush1.bf16.msra.mxu0 0
    %2891 = vmatprep.subr.bf16.mxu0 0
    %2892 = vmatpush1.bf16.msra.mxu0 0
    %2893 = vmatprep.mubr.bf16.mxu0 0
    %2894 = vmatmul.mubr.bf16.gmra.mrb[0].mxu0 %v2817
    %v2895 = vpop.f32.mrb[0].mxu0
    %v2896 = vadd.f32 %v2402, %v2895
    %v2897 = vpop.f32.mrb[0].mxu0
    %v2898 = vpop.f32.mrb[0].mxu0
    %v2899 = vadd.f32 %v2402, %v2898
    %v2900 = vpop.f32.mrb[0].mxu0
    %2901 = vdwg.mxu0
    %v2902 = vadd.f32 %v2811, %v2853
    %v2903 = vadd.f32 %v2814, %v2857
    %v2904 = vxor.u32 %v2902, 2147483648
    %v2905 = vxor.u32 %v2903, 2147483648
    %v2906 = vmul.f32 %v2904, 1.442695
    %v2907 = vpow.pop %v2906
    %v2908 = vmul.f32 %v2905, 1.442695
    %v2909 = vpow.pop %v2908
    %v2910 = vadd.f32 %v2907, 1.0
    %v2911 = vadd.f32 %v2909, 1.0
    %v2912 = vrcp.pop %v2910
    %v2913 = vmul.f32 1.0, %v2912
    %v2914 = vrcp.pop %v2911
    %v2915 = vmul.f32 1.0, %v2914
    %v2916 = vadd.f32 %v2812, %v2855
    %v2917 = vadd.f32 %v2815, %v2859
    %v2918 = vxor.u32 %v2916, 2147483648
    %v2919 = vxor.u32 %v2917, 2147483648
    %v2920 = vmul.f32 %v2918, 1.442695
    %v2921 = vpow.pop %v2920
    %v2922 = vmul.f32 %v2919, 1.442695
    %v2923 = vpow.pop %v2922
    %v2924 = vadd.f32 %v2921, 1.0
    %v2925 = vadd.f32 %v2923, 1.0
    %v2926 = vrcp.pop %v2924
    %v2927 = vmul.f32 1.0, %v2926
    %v2928 = vrcp.pop %v2925
    %v2929 = vmul.f32 1.0, %v2928
    %v2930 = vadd.f32 %v2813, %v2650
    %v2931 = vadd.f32 %v2816, %v2650
    %v2932 = vmul.f32 %v2913, %v2896
    %v2933 = vmul.f32 %v2915, %v2899
    %v2934 = vadd.f32 %v2930, %v2932
    %v2935 = vadd.f32 %v2931, %v2933
    %v2936 = vtanh.pop %v2934
    %v2937 = vtanh.pop %v2935
    %v2938 = vsub.f32 1.0, %v2927
    %v2939 = vsub.f32 1.0, %v2929
    %v2940 = vmul.f32 %v2938, %v2936
    %v2941 = vmul.f32 %v2939, %v2937
    %v2942 = vmul.f32 %v2927, %v2805
    %v2943 = vmul.f32 %v2929, %v2806
    %v2944 = vadd.f32 %v2940, %v2942
    %v2945 = vadd.f32 %v2941, %v2943
    %v2946 = vtanh.pop %v2944
    %v2947 = vtanh.pop %v2945
    %v2948 = vpack.c.bf16 %v2947, %v2946
    %2949 = vst [vmem:[%s1216] sm:$0xff] %v2948
    %v2950 = vld [vmem:[%s1220] sm:$0xff]
    %v2951 = vld [vmem:[%s1220 + $0x8] sm:$0xff]
    %v2952 = vld [vmem:[%s1220 + $0x10] sm:$0xff]
    %v2953 = vld [vmem:[%s1220 + $0x18] sm:$0xff]
    %v2954 = vld [vmem:[%s1220 + $0x20] sm:$0xff]
    %v2955 = vld [vmem:[%s1220 + $0x28] sm:$0xff]
    %v2956 = vpack.c.bf16 %v2945, %v2944
    %2957 = vmatprep.subr.bf16.mxu0 %v2487
    %2958 = vmatpush1.bf16.msra.mxu0 %v2486
    %2959 = vmatprep.subr.bf16.mxu0 %v2490
    %2960 = vmatpush1.bf16.msra.mxu0 %v2489
    %2961 = vmatprep.subr.bf16.mxu0 %v2493
    %2962 = vmatpush1.bf16.msra.mxu0 %v2492
    %2963 = vmatprep.subr.bf16.mxu0 %v2496
    %2964 = vmatpush1.bf16.msra.mxu0 %v2495
    %2965 = vmatprep.subr.bf16.mxu0 %v2499
    %2966 = vmatpush1.bf16.msra.mxu0 %v2498
    %2967 = vmatprep.subr.bf16.mxu0 %v2502
    %2968 = vmatpush1.bf16.msra.mxu0 %v2501
    %2969 = vmatprep.subr.bf16.mxu0 %v2505
    %2970 = vmatpush1.bf16.msra.mxu0 %v2504
    %2971 = vmatprep.subr.bf16.mxu0 %v2508
    %2972 = vmatpush1.bf16.msra.mxu0 %v2507
    %2973 = vmatprep.subr.bf16.mxu0 0
    %2974 = vmatpush1.bf16.msra.mxu0 0
    %2975 = vmatprep.subr.bf16.mxu0 0
    %2976 = vmatpush1.bf16.msra.mxu0 0
    %2977 = vmatprep.subr.bf16.mxu0 0
    %2978 = vmatpush1.bf16.msra.mxu0 0
    %2979 = vmatprep.subr.bf16.mxu0 0
    %2980 = vmatpush1.bf16.msra.mxu0 0
    %2981 = vmatprep.subr.bf16.mxu0 0
    %2982 = vmatpush1.bf16.msra.mxu0 0
    %2983 = vmatprep.subr.bf16.mxu0 0
    %2984 = vmatpush1.bf16.msra.mxu0 0
    %2985 = vmatprep.subr.bf16.mxu0 0
    %2986 = vmatpush1.bf16.msra.mxu0 0
    %2987 = vmatprep.subr.bf16.mxu0 0
    %2988 = vmatpush1.bf16.msra.mxu0 0
    %2989 = vmatprep.mubr.bf16.mxu0 0
    %2990 = vmatmul.mubr.bf16.gmra.mrb[0].mxu0 %v2956
    %v2991 = vpop.f32.mrb[0].mxu0
    %v2992 = vadd.f32 %v2394, %v2991
    %v2993 = vpop.f32.mrb[0].mxu0
    %v2994 = vadd.f32 %v2398, %v2993
    %v2995 = vpop.f32.mrb[0].mxu0
    %v2996 = vadd.f32 %v2394, %v2995
    %v2997 = vpop.f32.mrb[0].mxu0
    %v2998 = vadd.f32 %v2398, %v2997
    %2999 = vdwg.mxu0
    %3000 = vmatprep.subr.bf16.mxu0 0
    %3001 = vmatpush1.bf16.msra.mxu0 %v2488
    %3002 = vmatprep.subr.bf16.mxu0 0
    %3003 = vmatpush1.bf16.msra.mxu0 %v2491
    %3004 = vmatprep.subr.bf16.mxu0 0
    %3005 = vmatpush1.bf16.msra.mxu0 %v2494
    %3006 = vmatprep.subr.bf16.mxu0 0
    %3007 = vmatpush1.bf16.msra.mxu0 %v2497
    %3008 = vmatprep.subr.bf16.mxu0 0
    %3009 = vmatpush1.bf16.msra.mxu0 %v2500
    %3010 = vmatprep.subr.bf16.mxu0 0
    %3011 = vmatpush1.bf16.msra.mxu0 %v2503
    %3012 = vmatprep.subr.bf16.mxu0 0
    %3013 = vmatpush1.bf16.msra.mxu0 %v2506
    %3014 = vmatprep.subr.bf16.mxu0 0
    %3015 = vmatpush1.bf16.msra.mxu0 %v2509
    %3016 = vmatprep.subr.bf16.mxu0 0
    %3017 = vmatpush1.bf16.msra.mxu0 0
    %3018 = vmatprep.subr.bf16.mxu0 0
    %3019 = vmatpush1.bf16.msra.mxu0 0
    %3020 = vmatprep.subr.bf16.mxu0 0
    %3021 = vmatpush1.bf16.msra.mxu0 0
    %3022 = vmatprep.subr.bf16.mxu0 0
    %3023 = vmatpush1.bf16.msra.mxu0 0
    %3024 = vmatprep.subr.bf16.mxu0 0
    %3025 = vmatpush1.bf16.msra.mxu0 0
    %3026 = vmatprep.subr.bf16.mxu0 0
    %3027 = vmatpush1.bf16.msra.mxu0 0
    %3028 = vmatprep.subr.bf16.mxu0 0
    %3029 = vmatpush1.bf16.msra.mxu0 0
    %3030 = vmatprep.subr.bf16.mxu0 0
    %3031 = vmatpush1.bf16.msra.mxu0 0
    %3032 = vmatprep.mubr.bf16.mxu0 0
    %3033 = vmatmul.mubr.bf16.gmra.mrb[0].mxu0 %v2956
    %v3034 = vpop.f32.mrb[0].mxu0
    %v3035 = vadd.f32 %v2402, %v3034
    %v3036 = vpop.f32.mrb[0].mxu0
    %v3037 = vpop.f32.mrb[0].mxu0
    %v3038 = vadd.f32 %v2402, %v3037
    %v3039 = vpop.f32.mrb[0].mxu0
    %3040 = vdwg.mxu0
    %v3041 = vadd.f32 %v2950, %v2992
    %v3042 = vadd.f32 %v2953, %v2996
    %v3043 = vxor.u32 %v3041, 2147483648
    %v3044 = vxor.u32 %v3042, 2147483648
    %v3045 = vmul.f32 %v3043, 1.442695
    %v3046 = vpow.pop %v3045
    %v3047 = vmul.f32 %v3044, 1.442695
    %v3048 = vpow.pop %v3047
    %v3049 = vadd.f32 %v3046, 1.0
    %v3050 = vadd.f32 %v3048, 1.0
    %v3051 = vrcp.pop %v3049
    %v3052 = vmul.f32 1.0, %v3051
    %v3053 = vrcp.pop %v3050
    %v3054 = vmul.f32 1.0, %v3053
    %v3055 = vadd.f32 %v2951, %v2994
    %v3056 = vadd.f32 %v2954, %v2998
    %v3057 = vxor.u32 %v3055, 2147483648
    %v3058 = vxor.u32 %v3056, 2147483648
    %v3059 = vmul.f32 %v3057, 1.442695
    %v3060 = vpow.pop %v3059
    %v3061 = vmul.f32 %v3058, 1.442695
    %v3062 = vpow.pop %v3061
    %v3063 = vadd.f32 %v3060, 1.0
    %v3064 = vadd.f32 %v3062, 1.0
    %v3065 = vrcp.pop %v3063
    %v3066 = vmul.f32 1.0, %v3065
    %v3067 = vrcp.pop %v3064
    %v3068 = vmul.f32 1.0, %v3067
    %v3069 = vadd.f32 %v2952, %v2650
    %v3070 = vadd.f32 %v2955, %v2650
    %v3071 = vmul.f32 %v3052, %v3035
    %v3072 = vmul.f32 %v3054, %v3038
    %v3073 = vadd.f32 %v3069, %v3071
    %v3074 = vadd.f32 %v3070, %v3072
    %v3075 = vtanh.pop %v3073
    %v3076 = vtanh.pop %v3074
    %v3077 = vsub.f32 1.0, %v3066
    %v3078 = vsub.f32 1.0, %v3068
    %v3079 = vmul.f32 %v3077, %v3075
    %v3080 = vmul.f32 %v3078, %v3076
    %v3081 = vmul.f32 %v3066, %v2944
    %v3082 = vmul.f32 %v3068, %v2945
    %v3083 = vadd.f32 %v3079, %v3081
    %v3084 = vadd.f32 %v3080, %v3082
    %v3085 = vtanh.pop %v3083
    %v3086 = vtanh.pop %v3084
    %v3087 = vpack.c.bf16 %v3086, %v3085
    %3088 = vst [vmem:[%s1356] sm:$0xff] %v3087
    %v3089 = vld [vmem:[%s1360] sm:$0xff]
    %v3090 = vld [vmem:[%s1360 + $0x8] sm:$0xff]
    %v3091 = vld [vmem:[%s1360 + $0x10] sm:$0xff]
    %v3092 = vld [vmem:[%s1360 + $0x18] sm:$0xff]
    %v3093 = vld [vmem:[%s1360 + $0x20] sm:$0xff]
    %v3094 = vld [vmem:[%s1360 + $0x28] sm:$0xff]
    %v3095 = vpack.c.bf16 %v3084, %v3083
    %3096 = vmatprep.subr.bf16.mxu0 %v2487
    %3097 = vmatpush1.bf16.msra.mxu0 %v2486
    %3098 = vmatprep.subr.bf16.mxu0 %v2490
    %3099 = vmatpush1.bf16.msra.mxu0 %v2489
    %3100 = vmatprep.subr.bf16.mxu0 %v2493
    %3101 = vmatpush1.bf16.msra.mxu0 %v2492
    %3102 = vmatprep.subr.bf16.mxu0 %v2496
    %3103 = vmatpush1.bf16.msra.mxu0 %v2495
    %3104 = vmatprep.subr.bf16.mxu0 %v2499
    %3105 = vmatpush1.bf16.msra.mxu0 %v2498
    %3106 = vmatprep.subr.bf16.mxu0 %v2502
    %3107 = vmatpush1.bf16.msra.mxu0 %v2501
    %3108 = vmatprep.subr.bf16.mxu0 %v2505
    %3109 = vmatpush1.bf16.msra.mxu0 %v2504
    %3110 = vmatprep.subr.bf16.mxu0 %v2508
    %3111 = vmatpush1.bf16.msra.mxu0 %v2507
    %3112 = vmatprep.subr.bf16.mxu0 0
    %3113 = vmatpush1.bf16.msra.mxu0 0
    %3114 = vmatprep.subr.bf16.mxu0 0
    %3115 = vmatpush1.bf16.msra.mxu0 0
    %3116 = vmatprep.subr.bf16.mxu0 0
    %3117 = vmatpush1.bf16.msra.mxu0 0
    %3118 = vmatprep.subr.bf16.mxu0 0
    %3119 = vmatpush1.bf16.msra.mxu0 0
    %3120 = vmatprep.subr.bf16.mxu0 0
    %3121 = vmatpush1.bf16.msra.mxu0 0
    %3122 = vmatprep.subr.bf16.mxu0 0
    %3123 = vmatpush1.bf16.msra.mxu0 0
    %3124 = vmatprep.subr.bf16.mxu0 0
    %3125 = vmatpush1.bf16.msra.mxu0 0
    %3126 = vmatprep.subr.bf16.mxu0 0
    %3127 = vmatpush1.bf16.msra.mxu0 0
    %3128 = vmatprep.mubr.bf16.mxu0 0
    %3129 = vmatmul.mubr.bf16.gmra.mrb[0].mxu0 %v3095
    %v3130 = vpop.f32.mrb[0].mxu0
    %v3131 = vadd.f32 %v2394, %v3130
    %v3132 = vpop.f32.mrb[0].mxu0
    %v3133 = vadd.f32 %v2398, %v3132
    %v3134 = vpop.f32.mrb[0].mxu0
    %v3135 = vadd.f32 %v2394, %v3134
    %v3136 = vpop.f32.mrb[0].mxu0
    %v3137 = vadd.f32 %v2398, %v3136
    %3138 = vdwg.mxu0
    %3139 = vmatprep.subr.bf16.mxu0 0
    %3140 = vmatpush1.bf16.msra.mxu0 %v2488
    %3141 = vmatprep.subr.bf16.mxu0 0
    %3142 = vmatpush1.bf16.msra.mxu0 %v2491
    %3143 = vmatprep.subr.bf16.mxu0 0
    %3144 = vmatpush1.bf16.msra.mxu0 %v2494
    %3145 = vmatprep.subr.bf16.mxu0 0
    %3146 = vmatpush1.bf16.msra.mxu0 %v2497
    %3147 = vmatprep.subr.bf16.mxu0 0
    %3148 = vmatpush1.bf16.msra.mxu0 %v2500
    %3149 = vmatprep.subr.bf16.mxu0 0
    %3150 = vmatpush1.bf16.msra.mxu0 %v2503
    %3151 = vmatprep.subr.bf16.mxu0 0
    %3152 = vmatpush1.bf16.msra.mxu0 %v2506
    %3153 = vmatprep.subr.bf16.mxu0 0
    %3154 = vmatpush1.bf16.msra.mxu0 %v2509
    %3155 = vmatprep.subr.bf16.mxu0 0
    %3156 = vmatpush1.bf16.msra.mxu0 0
    %3157 = vmatprep.subr.bf16.mxu0 0
    %3158 = vmatpush1.bf16.msra.mxu0 0
    %3159 = vmatprep.subr.bf16.mxu0 0
    %3160 = vmatpush1.bf16.msra.mxu0 0
    %3161 = vmatprep.subr.bf16.mxu0 0
    %3162 = vmatpush1.bf16.msra.mxu0 0
    %3163 = vmatprep.subr.bf16.mxu0 0
    %3164 = vmatpush1.bf16.msra.mxu0 0
    %3165 = vmatprep.subr.bf16.mxu0 0
    %3166 = vmatpush1.bf16.msra.mxu0 0
    %3167 = vmatprep.subr.bf16.mxu0 0
    %3168 = vmatpush1.bf16.msra.mxu0 0
    %3169 = vmatprep.subr.bf16.mxu0 0
    %3170 = vmatpush1.bf16.msra.mxu0 0
    %3171 = vmatprep.mubr.bf16.mxu0 0
    %3172 = vmatmul.mubr.bf16.gmra.mrb[0].mxu0 %v3095
    %v3173 = vpop.f32.mrb[0].mxu0
    %v3174 = vadd.f32 %v2402, %v3173
    %v3175 = vpop.f32.mrb[0].mxu0
    %v3176 = vpop.f32.mrb[0].mxu0
    %v3177 = vadd.f32 %v2402, %v3176
    %v3178 = vpop.f32.mrb[0].mxu0
    %3179 = vdwg.mxu0
    %v3180 = vadd.f32 %v3089, %v3131
    %v3181 = vadd.f32 %v3092, %v3135
    %v3182 = vxor.u32 %v3180, 2147483648
    %v3183 = vxor.u32 %v3181, 2147483648
    %v3184 = vmul.f32 %v3182, 1.442695
    %v3185 = vpow.pop %v3184
    %v3186 = vmul.f32 %v3183, 1.442695
    %v3187 = vpow.pop %v3186
    %v3188 = vadd.f32 %v3185, 1.0
    %v3189 = vadd.f32 %v3187, 1.0
    %v3190 = vrcp.pop %v3188
    %v3191 = vmul.f32 1.0, %v3190
    %v3192 = vrcp.pop %v3189
    %v3193 = vmul.f32 1.0, %v3192
    %v3194 = vadd.f32 %v3090, %v3133
    %v3195 = vadd.f32 %v3093, %v3137
    %v3196 = vxor.u32 %v3194, 2147483648
    %v3197 = vxor.u32 %v3195, 2147483648
    %v3198 = vmul.f32 %v3196, 1.442695
    %v3199 = vpow.pop %v3198
    %v3200 = vmul.f32 %v3197, 1.442695
    %v3201 = vpow.pop %v3200
    %v3202 = vadd.f32 %v3199, 1.0
    %v3203 = vadd.f32 %v3201, 1.0
    %v3204 = vrcp.pop %v3202
    %v3205 = vmul.f32 1.0, %v3204
    %v3206 = vrcp.pop %v3203
    %v3207 = vmul.f32 1.0, %v3206
    %v3208 = vadd.f32 %v3091, %v2650
    %v3209 = vadd.f32 %v3094, %v2650
    %v3210 = vmul.f32 %v3191, %v3174
    %v3211 = vmul.f32 %v3193, %v3177
    %v3212 = vadd.f32 %v3208, %v3210
    %v3213 = vadd.f32 %v3209, %v3211
    %v3214 = vtanh.pop %v3212
    %v3215 = vtanh.pop %v3213
    %v3216 = vsub.f32 1.0, %v3205
    %v3217 = vsub.f32 1.0, %v3207
    %v3218 = vmul.f32 %v3216, %v3214
    %v3219 = vmul.f32 %v3217, %v3215
    %v3220 = vmul.f32 %v3205, %v3083
    %v3221 = vmul.f32 %v3207, %v3084
    %v3222 = vadd.f32 %v3218, %v3220
    %v3223 = vadd.f32 %v3219, %v3221
    %v3224 = vtanh.pop %v3222
    %v3225 = vtanh.pop %v3223
    %v3226 = vpack.c.bf16 %v3225, %v3224
    %3227 = vst [vmem:[%s1496] sm:$0xff] %v3226
    %v3228 = vld [vmem:[%s1500] sm:$0xff]
    %v3229 = vld [vmem:[%s1500 + $0x8] sm:$0xff]
    %v3230 = vld [vmem:[%s1500 + $0x10] sm:$0xff]
    %v3231 = vld [vmem:[%s1500 + $0x18] sm:$0xff]
    %v3232 = vld [vmem:[%s1500 + $0x20] sm:$0xff]
    %v3233 = vld [vmem:[%s1500 + $0x28] sm:$0xff]
    %v3234 = vpack.c.bf16 %v3223, %v3222
    %3235 = vmatprep.subr.bf16.mxu0 %v2487
    %3236 = vmatpush1.bf16.msra.mxu0 %v2486
    %3237 = vmatprep.subr.bf16.mxu0 %v2490
    %3238 = vmatpush1.bf16.msra.mxu0 %v2489
    %3239 = vmatprep.subr.bf16.mxu0 %v2493
    %3240 = vmatpush1.bf16.msra.mxu0 %v2492
    %3241 = vmatprep.subr.bf16.mxu0 %v2496
    %3242 = vmatpush1.bf16.msra.mxu0 %v2495
    %3243 = vmatprep.subr.bf16.mxu0 %v2499
    %3244 = vmatpush1.bf16.msra.mxu0 %v2498
    %3245 = vmatprep.subr.bf16.mxu0 %v2502
    %3246 = vmatpush1.bf16.msra.mxu0 %v2501
    %3247 = vmatprep.subr.bf16.mxu0 %v2505
    %3248 = vmatpush1.bf16.msra.mxu0 %v2504
    %3249 = vmatprep.subr.bf16.mxu0 %v2508
    %3250 = vmatpush1.bf16.msra.mxu0 %v2507
    %3251 = vmatprep.subr.bf16.mxu0 0
    %3252 = vmatpush1.bf16.msra.mxu0 0
    %3253 = vmatprep.subr.bf16.mxu0 0
    %3254 = vmatpush1.bf16.msra.mxu0 0
    %3255 = vmatprep.subr.bf16.mxu0 0
    %3256 = vmatpush1.bf16.msra.mxu0 0
    %3257 = vmatprep.subr.bf16.mxu0 0
    %3258 = vmatpush1.bf16.msra.mxu0 0
    %3259 = vmatprep.subr.bf16.mxu0 0
    %3260 = vmatpush1.bf16.msra.mxu0 0
    %3261 = vmatprep.subr.bf16.mxu0 0
    %3262 = vmatpush1.bf16.msra.mxu0 0
    %3263 = vmatprep.subr.bf16.mxu0 0
    %3264 = vmatpush1.bf16.msra.mxu0 0
    %3265 = vmatprep.subr.bf16.mxu0 0
    %3266 = vmatpush1.bf16.msra.mxu0 0
    %3267 = vmatprep.mubr.bf16.mxu0 0
    %3268 = vmatmul.mubr.bf16.gmra.mrb[0].mxu0 %v3234
    %v3269 = vpop.f32.mrb[0].mxu0
    %v3270 = vadd.f32 %v2394, %v3269
    %v3271 = vpop.f32.mrb[0].mxu0
    %v3272 = vadd.f32 %v2398, %v3271
    %v3273 = vpop.f32.mrb[0].mxu0
    %v3274 = vadd.f32 %v2394, %v3273
    %v3275 = vpop.f32.mrb[0].mxu0
    %v3276 = vadd.f32 %v2398, %v3275
    %3277 = vdwg.mxu0
    %3278 = vmatprep.subr.bf16.mxu0 0
    %3279 = vmatpush1.bf16.msra.mxu0 %v2488
    %3280 = vmatprep.subr.bf16.mxu0 0
    %3281 = vmatpush1.bf16.msra.mxu0 %v2491
    %3282 = vmatprep.subr.bf16.mxu0 0
    %3283 = vmatpush1.bf16.msra.mxu0 %v2494
    %3284 = vmatprep.subr.bf16.mxu0 0
    %3285 = vmatpush1.bf16.msra.mxu0 %v2497
    %3286 = vmatprep.subr.bf16.mxu0 0
    %3287 = vmatpush1.bf16.msra.mxu0 %v2500
    %3288 = vmatprep.subr.bf16.mxu0 0
    %3289 = vmatpush1.bf16.msra.mxu0 %v2503
    %3290 = vmatprep.subr.bf16.mxu0 0
    %3291 = vmatpush1.bf16.msra.mxu0 %v2506
    %3292 = vmatprep.subr.bf16.mxu0 0
    %3293 = vmatpush1.bf16.msra.mxu0 %v2509
    %3294 = vmatprep.subr.bf16.mxu0 0
    %3295 = vmatpush1.bf16.msra.mxu0 0
    %3296 = vmatprep.subr.bf16.mxu0 0
    %3297 = vmatpush1.bf16.msra.mxu0 0
    %3298 = vmatprep.subr.bf16.mxu0 0
    %3299 = vmatpush1.bf16.msra.mxu0 0
    %3300 = vmatprep.subr.bf16.mxu0 0
    %3301 = vmatpush1.bf16.msra.mxu0 0
    %3302 = vmatprep.subr.bf16.mxu0 0
    %3303 = vmatpush1.bf16.msra.mxu0 0
    %3304 = vmatprep.subr.bf16.mxu0 0
    %3305 = vmatpush1.bf16.msra.mxu0 0
    %3306 = vmatprep.subr.bf16.mxu0 0
    %3307 = vmatpush1.bf16.msra.mxu0 0
    %3308 = vmatprep.subr.bf16.mxu0 0
    %3309 = vmatpush1.bf16.msra.mxu0 0
    %3310 = vmatprep.mubr.bf16.mxu0 0
    %3311 = vmatmul.mubr.bf16.gmra.mrb[0].mxu0 %v3234
    %v3312 = vpop.f32.mrb[0].mxu0
    %v3313 = vadd.f32 %v2402, %v3312
    %v3314 = vpop.f32.mrb[0].mxu0
    %v3315 = vpop.f32.mrb[0].mxu0
    %v3316 = vadd.f32 %v2402, %v3315
    %v3317 = vpop.f32.mrb[0].mxu0
    %3318 = vdwg.mxu0
    %v3319 = vadd.f32 %v3228, %v3270
    %v3320 = vadd.f32 %v3231, %v3274
    %v3321 = vxor.u32 %v3319, 2147483648
    %v3322 = vxor.u32 %v3320, 2147483648
    %v3323 = vmul.f32 %v3321, 1.442695
    %v3324 = vpow.pop %v3323
    %v3325 = vmul.f32 %v3322, 1.442695
    %v3326 = vpow.pop %v3325
    %v3327 = vadd.f32 %v3324, 1.0
    %v3328 = vadd.f32 %v3326, 1.0
    %v3329 = vrcp.pop %v3327
    %v3330 = vmul.f32 1.0, %v3329
    %v3331 = vrcp.pop %v3328
    %v3332 = vmul.f32 1.0, %v3331
    %v3333 = vadd.f32 %v3229, %v3272
    %v3334 = vadd.f32 %v3232, %v3276
    %v3335 = vxor.u32 %v3333, 2147483648
    %v3336 = vxor.u32 %v3334, 2147483648
    %v3337 = vmul.f32 %v3335, 1.442695
    %v3338 = vpow.pop %v3337
    %v3339 = vmul.f32 %v3336, 1.442695
    %v3340 = vpow.pop %v3339
    %v3341 = vadd.f32 %v3338, 1.0
    %v3342 = vadd.f32 %v3340, 1.0
    %v3343 = vrcp.pop %v3341
    %v3344 = vmul.f32 1.0, %v3343
    %v3345 = vrcp.pop %v3342
    %v3346 = vmul.f32 1.0, %v3345
    %v3347 = vadd.f32 %v3230, %v2650
    %v3348 = vadd.f32 %v3233, %v2650
    %v3349 = vmul.f32 %v3330, %v3313
    %v3350 = vmul.f32 %v3332, %v3316
    %v3351 = vadd.f32 %v3347, %v3349
    %v3352 = vadd.f32 %v3348, %v3350
    %v3353 = vtanh.pop %v3351
    %v3354 = vtanh.pop %v3352
    %v3355 = vsub.f32 1.0, %v3344
    %v3356 = vsub.f32 1.0, %v3346
    %v3357 = vmul.f32 %v3355, %v3353
    %v3358 = vmul.f32 %v3356, %v3354
    %v3359 = vmul.f32 %v3344, %v3222
    %v3360 = vmul.f32 %v3346, %v3223
    %v3361 = vadd.f32 %v3357, %v3359
    %v3362 = vadd.f32 %v3358, %v3360
    %v3363 = vtanh.pop %v3361
    %v3364 = vtanh.pop %v3362
    %v3365 = vpack.c.bf16 %v3364, %v3363
    %3366 = vst [vmem:[%s1636] sm:$0xff] %v3365
    %v3367 = vld [vmem:[%s1640] sm:$0xff]
    %v3368 = vld [vmem:[%s1640 + $0x8] sm:$0xff]
    %v3369 = vld [vmem:[%s1640 + $0x10] sm:$0xff]
    %v3370 = vld [vmem:[%s1640 + $0x18] sm:$0xff]
    %v3371 = vld [vmem:[%s1640 + $0x20] sm:$0xff]
    %v3372 = vld [vmem:[%s1640 + $0x28] sm:$0xff]
    %v3373 = vpack.c.bf16 %v3362, %v3361
    %3374 = vmatprep.subr.bf16.mxu0 %v2487
    %3375 = vmatpush1.bf16.msra.mxu0 %v2486
    %3376 = vmatprep.subr.bf16.mxu0 %v2490
    %3377 = vmatpush1.bf16.msra.mxu0 %v2489
    %3378 = vmatprep.subr.bf16.mxu0 %v2493
    %3379 = vmatpush1.bf16.msra.mxu0 %v2492
    %3380 = vmatprep.subr.bf16.mxu0 %v2496
    %3381 = vmatpush1.bf16.msra.mxu0 %v2495
    %3382 = vmatprep.subr.bf16.mxu0 %v2499
    %3383 = vmatpush1.bf16.msra.mxu0 %v2498
    %3384 = vmatprep.subr.bf16.mxu0 %v2502
    %3385 = vmatpush1.bf16.msra.mxu0 %v2501
    %3386 = vmatprep.subr.bf16.mxu0 %v2505
    %3387 = vmatpush1.bf16.msra.mxu0 %v2504
    %3388 = vmatprep.subr.bf16.mxu0 %v2508
    %3389 = vmatpush1.bf16.msra.mxu0 %v2507
    %3390 = vmatprep.subr.bf16.mxu0 0
    %3391 = vmatpush1.bf16.msra.mxu0 0
    %3392 = vmatprep.subr.bf16.mxu0 0
    %3393 = vmatpush1.bf16.msra.mxu0 0
    %3394 = vmatprep.subr.bf16.mxu0 0
    %3395 = vmatpush1.bf16.msra.mxu0 0
    %3396 = vmatprep.subr.bf16.mxu0 0
    %3397 = vmatpush1.bf16.msra.mxu0 0
    %3398 = vmatprep.subr.bf16.mxu0 0
    %3399 = vmatpush1.bf16.msra.mxu0 0
    %3400 = vmatprep.subr.bf16.mxu0 0
    %3401 = vmatpush1.bf16.msra.mxu0 0
    %3402 = vmatprep.subr.bf16.mxu0 0
    %3403 = vmatpush1.bf16.msra.mxu0 0
    %3404 = vmatprep.subr.bf16.mxu0 0
    %3405 = vmatpush1.bf16.msra.mxu0 0
    %3406 = vmatprep.mubr.bf16.mxu0 0
    %3407 = vmatmul.mubr.bf16.gmra.mrb[0].mxu0 %v3373
    %v3408 = vpop.f32.mrb[0].mxu0
    %v3409 = vadd.f32 %v2394, %v3408
    %v3410 = vpop.f32.mrb[0].mxu0
    %v3411 = vadd.f32 %v2398, %v3410
    %v3412 = vpop.f32.mrb[0].mxu0
    %v3413 = vadd.f32 %v2394, %v3412
    %v3414 = vpop.f32.mrb[0].mxu0
    %v3415 = vadd.f32 %v2398, %v3414
    %3416 = vdwg.mxu0
    %3417 = vmatprep.subr.bf16.mxu0 0
    %3418 = vmatpush1.bf16.msra.mxu0 %v2488
    %3419 = vmatprep.subr.bf16.mxu0 0
    %3420 = vmatpush1.bf16.msra.mxu0 %v2491
    %3421 = vmatprep.subr.bf16.mxu0 0
    %3422 = vmatpush1.bf16.msra.mxu0 %v2494
    %3423 = vmatprep.subr.bf16.mxu0 0
    %3424 = vmatpush1.bf16.msra.mxu0 %v2497
    %3425 = vmatprep.subr.bf16.mxu0 0
    %3426 = vmatpush1.bf16.msra.mxu0 %v2500
    %3427 = vmatprep.subr.bf16.mxu0 0
    %3428 = vmatpush1.bf16.msra.mxu0 %v2503
    %3429 = vmatprep.subr.bf16.mxu0 0
    %3430 = vmatpush1.bf16.msra.mxu0 %v2506
    %3431 = vmatprep.subr.bf16.mxu0 0
    %3432 = vmatpush1.bf16.msra.mxu0 %v2509
    %3433 = vmatprep.subr.bf16.mxu0 0
    %3434 = vmatpush1.bf16.msra.mxu0 0
    %3435 = vmatprep.subr.bf16.mxu0 0
    %3436 = vmatpush1.bf16.msra.mxu0 0
    %3437 = vmatprep.subr.bf16.mxu0 0
    %3438 = vmatpush1.bf16.msra.mxu0 0
    %3439 = vmatprep.subr.bf16.mxu0 0
    %3440 = vmatpush1.bf16.msra.mxu0 0
    %3441 = vmatprep.subr.bf16.mxu0 0
    %3442 = vmatpush1.bf16.msra.mxu0 0
    %3443 = vmatprep.subr.bf16.mxu0 0
    %3444 = vmatpush1.bf16.msra.mxu0 0
    %3445 = vmatprep.subr.bf16.mxu0 0
    %3446 = vmatpush1.bf16.msra.mxu0 0
    %3447 = vmatprep.subr.bf16.mxu0 0
    %3448 = vmatpush1.bf16.msra.mxu0 0
    %3449 = vmatprep.mubr.bf16.mxu0 0
    %3450 = vmatmul.mubr.bf16.gmra.mrb[0].mxu0 %v3373
    %v3451 = vpop.f32.mrb[0].mxu0
    %v3452 = vadd.f32 %v2402, %v3451
    %v3453 = vpop.f32.mrb[0].mxu0
    %v3454 = vpop.f32.mrb[0].mxu0
    %v3455 = vadd.f32 %v2402, %v3454
    %v3456 = vpop.f32.mrb[0].mxu0
    %3457 = vdwg.mxu0
    %v3458 = vadd.f32 %v3367, %v3409
    %v3459 = vadd.f32 %v3370, %v3413
    %v3460 = vxor.u32 %v3458, 2147483648
    %v3461 = vxor.u32 %v3459, 2147483648
    %v3462 = vmul.f32 %v3460, 1.442695
    %v3463 = vpow.pop %v3462
    %v3464 = vmul.f32 %v3461, 1.442695
    %v3465 = vpow.pop %v3464
    %v3466 = vadd.f32 %v3463, 1.0
    %v3467 = vadd.f32 %v3465, 1.0
    %v3468 = vrcp.pop %v3466
    %v3469 = vmul.f32 1.0, %v3468
    %v3470 = vrcp.pop %v3467
    %v3471 = vmul.f32 1.0, %v3470
    %v3472 = vadd.f32 %v3368, %v3411
    %v3473 = vadd.f32 %v3371, %v3415
    %v3474 = vxor.u32 %v3472, 2147483648
    %v3475 = vxor.u32 %v3473, 2147483648
    %v3476 = vmul.f32 %v3474, 1.442695
    %v3477 = vpow.pop %v3476
    %v3478 = vmul.f32 %v3475, 1.442695
    %v3479 = vpow.pop %v3478
    %v3480 = vadd.f32 %v3477, 1.0
    %v3481 = vadd.f32 %v3479, 1.0
    %v3482 = vrcp.pop %v3480
    %v3483 = vmul.f32 1.0, %v3482
    %v3484 = vrcp.pop %v3481
    %v3485 = vmul.f32 1.0, %v3484
    %v3486 = vadd.f32 %v3369, %v2650
    %v3487 = vadd.f32 %v3372, %v2650
    %v3488 = vmul.f32 %v3469, %v3452
    %v3489 = vmul.f32 %v3471, %v3455
    %v3490 = vadd.f32 %v3486, %v3488
    %v3491 = vadd.f32 %v3487, %v3489
    %v3492 = vtanh.pop %v3490
    %v3493 = vtanh.pop %v3491
    %v3494 = vsub.f32 1.0, %v3483
    %v3495 = vsub.f32 1.0, %v3485
    %v3496 = vmul.f32 %v3494, %v3492
    %v3497 = vmul.f32 %v3495, %v3493
    %v3498 = vmul.f32 %v3483, %v3361
    %v3499 = vmul.f32 %v3485, %v3362
    %v3500 = vadd.f32 %v3496, %v3498
    %v3501 = vadd.f32 %v3497, %v3499
    %v3502 = vtanh.pop %v3500
    %v3503 = vtanh.pop %v3501
    %v3504 = vpack.c.bf16 %v3503, %v3502
    %3505 = vst [vmem:[%s1776] sm:$0xff] %v3504
    %v3506 = vld [vmem:[%s1780] sm:$0xff]
    %v3507 = vld [vmem:[%s1780 + $0x8] sm:$0xff]
    %v3508 = vld [vmem:[%s1780 + $0x10] sm:$0xff]
    %v3509 = vld [vmem:[%s1780 + $0x18] sm:$0xff]
    %v3510 = vld [vmem:[%s1780 + $0x20] sm:$0xff]
    %v3511 = vld [vmem:[%s1780 + $0x28] sm:$0xff]
    %v3512 = vpack.c.bf16 %v3501, %v3500
    %3513 = vmatprep.subr.bf16.mxu0 %v2487
    %3514 = vmatpush1.bf16.msra.mxu0 %v2486
    %3515 = vmatprep.subr.bf16.mxu0 %v2490
    %3516 = vmatpush1.bf16.msra.mxu0 %v2489
    %3517 = vmatprep.subr.bf16.mxu0 %v2493
    %3518 = vmatpush1.bf16.msra.mxu0 %v2492
    %3519 = vmatprep.subr.bf16.mxu0 %v2496
    %3520 = vmatpush1.bf16.msra.mxu0 %v2495
    %3521 = vmatprep.subr.bf16.mxu0 %v2499
    %3522 = vmatpush1.bf16.msra.mxu0 %v2498
    %3523 = vmatprep.subr.bf16.mxu0 %v2502
    %3524 = vmatpush1.bf16.msra.mxu0 %v2501
    %3525 = vmatprep.subr.bf16.mxu0 %v2505
    %3526 = vmatpush1.bf16.msra.mxu0 %v2504
    %3527 = vmatprep.subr.bf16.mxu0 %v2508
    %3528 = vmatpush1.bf16.msra.mxu0 %v2507
    %3529 = vmatprep.subr.bf16.mxu0 0
    %3530 = vmatpush1.bf16.msra.mxu0 0
    %3531 = vmatprep.subr.bf16.mxu0 0
    %3532 = vmatpush1.bf16.msra.mxu0 0
    %3533 = vmatprep.subr.bf16.mxu0 0
    %3534 = vmatpush1.bf16.msra.mxu0 0
    %3535 = vmatprep.subr.bf16.mxu0 0
    %3536 = vmatpush1.bf16.msra.mxu0 0
    %3537 = vmatprep.subr.bf16.mxu0 0
    %3538 = vmatpush1.bf16.msra.mxu0 0
    %3539 = vmatprep.subr.bf16.mxu0 0
    %3540 = vmatpush1.bf16.msra.mxu0 0
    %3541 = vmatprep.subr.bf16.mxu0 0
    %3542 = vmatpush1.bf16.msra.mxu0 0
    %3543 = vmatprep.subr.bf16.mxu0 0
    %3544 = vmatpush1.bf16.msra.mxu0 0
    %3545 = vmatprep.mubr.bf16.mxu0 0
    %3546 = vmatmul.mubr.bf16.gmra.mrb[0].mxu0 %v3512
    %v3547 = vpop.f32.mrb[0].mxu0
    %v3548 = vadd.f32 %v2394, %v3547
    %v3549 = vpop.f32.mrb[0].mxu0
    %v3550 = vadd.f32 %v2398, %v3549
    %v3551 = vpop.f32.mrb[0].mxu0
    %v3552 = vadd.f32 %v2394, %v3551
    %v3553 = vpop.f32.mrb[0].mxu0
    %v3554 = vadd.f32 %v2398, %v3553
    %3555 = vdwg.mxu0
    %3556 = vmatprep.subr.bf16.mxu0 0
    %3557 = vmatpush1.bf16.msra.mxu0 %v2488
    %3558 = vmatprep.subr.bf16.mxu0 0
    %3559 = vmatpush1.bf16.msra.mxu0 %v2491
    %3560 = vmatprep.subr.bf16.mxu0 0
    %3561 = vmatpush1.bf16.msra.mxu0 %v2494
    %3562 = vmatprep.subr.bf16.mxu0 0
    %3563 = vmatpush1.bf16.msra.mxu0 %v2497
    %3564 = vmatprep.subr.bf16.mxu0 0
    %3565 = vmatpush1.bf16.msra.mxu0 %v2500
    %3566 = vmatprep.subr.bf16.mxu0 0
    %3567 = vmatpush1.bf16.msra.mxu0 %v2503
    %3568 = vmatprep.subr.bf16.mxu0 0
    %3569 = vmatpush1.bf16.msra.mxu0 %v2506
    %3570 = vmatprep.subr.bf16.mxu0 0
    %3571 = vmatpush1.bf16.msra.mxu0 %v2509
    %3572 = vmatprep.subr.bf16.mxu0 0
    %3573 = vmatpush1.bf16.msra.mxu0 0
    %3574 = vmatprep.subr.bf16.mxu0 0
    %3575 = vmatpush1.bf16.msra.mxu0 0
    %3576 = vmatprep.subr.bf16.mxu0 0
    %3577 = vmatpush1.bf16.msra.mxu0 0
    %3578 = vmatprep.subr.bf16.mxu0 0
    %3579 = vmatpush1.bf16.msra.mxu0 0
    %3580 = vmatprep.subr.bf16.mxu0 0
    %3581 = vmatpush1.bf16.msra.mxu0 0
    %3582 = vmatprep.subr.bf16.mxu0 0
    %3583 = vmatpush1.bf16.msra.mxu0 0
    %3584 = vmatprep.subr.bf16.mxu0 0
    %3585 = vmatpush1.bf16.msra.mxu0 0
    %3586 = vmatprep.subr.bf16.mxu0 0
    %3587 = vmatpush1.bf16.msra.mxu0 0
    %3588 = vmatprep.mubr.bf16.mxu0 0
    %3589 = vmatmul.mubr.bf16.gmra.mrb[0].mxu0 %v3512
    %v3590 = vpop.f32.mrb[0].mxu0
    %v3591 = vadd.f32 %v2402, %v3590
    %v3592 = vpop.f32.mrb[0].mxu0
    %v3593 = vpop.f32.mrb[0].mxu0
    %v3594 = vadd.f32 %v2402, %v3593
    %v3595 = vpop.f32.mrb[0].mxu0
    %3596 = vdwg.mxu0
    %v3597 = vadd.f32 %v3506, %v3548
    %v3598 = vadd.f32 %v3509, %v3552
    %v3599 = vxor.u32 %v3597, 2147483648
    %v3600 = vxor.u32 %v3598, 2147483648
    %v3601 = vmul.f32 %v3599, 1.442695
    %v3602 = vpow.pop %v3601
    %v3603 = vmul.f32 %v3600, 1.442695
    %v3604 = vpow.pop %v3603
    %v3605 = vadd.f32 %v3602, 1.0
    %v3606 = vadd.f32 %v3604, 1.0
    %v3607 = vrcp.pop %v3605
    %v3608 = vmul.f32 1.0, %v3607
    %v3609 = vrcp.pop %v3606
    %v3610 = vmul.f32 1.0, %v3609
    %v3611 = vadd.f32 %v3507, %v3550
    %v3612 = vadd.f32 %v3510, %v3554
    %v3613 = vxor.u32 %v3611, 2147483648
    %v3614 = vxor.u32 %v3612, 2147483648
    %v3615 = vmul.f32 %v3613, 1.442695
    %v3616 = vpow.pop %v3615
    %v3617 = vmul.f32 %v3614, 1.442695
    %v3618 = vpow.pop %v3617
    %v3619 = vadd.f32 %v3616, 1.0
    %v3620 = vadd.f32 %v3618, 1.0
    %v3621 = vrcp.pop %v3619
    %v3622 = vmul.f32 1.0, %v3621
    %v3623 = vrcp.pop %v3620
    %v3624 = vmul.f32 1.0, %v3623
    %v3625 = vadd.f32 %v3508, %v2650
    %v3626 = vadd.f32 %v3511, %v2650
    %v3627 = vmul.f32 %v3608, %v3591
    %v3628 = vmul.f32 %v3610, %v3594
    %v3629 = vadd.f32 %v3625, %v3627
    %v3630 = vadd.f32 %v3626, %v3628
    %v3631 = vtanh.pop %v3629
    %v3632 = vtanh.pop %v3630
    %v3633 = vsub.f32 1.0, %v3622
    %v3634 = vsub.f32 1.0, %v3624
    %v3635 = vmul.f32 %v3633, %v3631
    %v3636 = vmul.f32 %v3634, %v3632
    %v3637 = vmul.f32 %v3622, %v3500
    %v3638 = vmul.f32 %v3624, %v3501
    %v3639 = vadd.f32 %v3635, %v3637
    %v3640 = vadd.f32 %v3636, %v3638
    %v3641 = vtanh.pop %v3639
    %v3642 = vtanh.pop %v3640
    %v3643 = vpack.c.bf16 %v3642, %v3641
    %3644 = vst [vmem:[%s1916] sm:$0xff] %v3643
    %3645 = vst [vmem:[%s2380] sm:$0xff] %v3639
    %3646 = vst [vmem:[%s2380 + $0x8] sm:$0xff] %v3640
    %v3647 = vld [vmem:[#allocation3] sm:$0xff]
    %v3648 = vld [vmem:[#allocation3 + $0x8] sm:$0xff]
    %v3649 = vld [vmem:[#allocation3 + $0x10] sm:$0xff]
    %v3650 = vld [vmem:[#allocation3 + $0x18] sm:$0xff]
    %v3651 = vld [vmem:[#allocation3 + $0x20] sm:$0xff]
    %v3652 = vld [vmem:[#allocation3 + $0x28] sm:$0xff]
    %v3653 = vld [vmem:[#allocation3 + $0x30] sm:$0xff]
    %v3654 = vld [vmem:[#allocation3 + $0x38] sm:$0xff]
    %v3655 = vld [vmem:[#allocation14] sm:$0xf]
    %v3656 = vld [vmem:[#allocation14 + $0x4] sm:$0xf]
    %v3657 = vld [vmem:[#allocation14 + $0x8] sm:$0xf]
    %v3658 = vld [vmem:[#allocation14 + $0xc] sm:$0xf]
    %v3659 = vld [vmem:[#allocation14 + $0x10] sm:$0xf]
    %v3660 = vld [vmem:[#allocation14 + $0x14] sm:$0xf]
    %v3661 = vld [vmem:[#allocation14 + $0x18] sm:$0xf]
    %v3662 = vld [vmem:[#allocation14 + $0x1c] sm:$0xf]
    %v3663 = vld [vmem:[#allocation14 + $0x20] sm:$0xf]
    %v3664 = vld [vmem:[#allocation14 + $0x24] sm:$0xf]
    %v3665 = vld [vmem:[#allocation14 + $0x28] sm:$0xf]
    %v3666 = vld [vmem:[#allocation14 + $0x2c] sm:$0xf]
    %v3667 = vld [vmem:[#allocation14 + $0x30] sm:$0xf]
    %v3668 = vld [vmem:[#allocation14 + $0x34] sm:$0xf]
    %v3669 = vld [vmem:[#allocation14 + $0x38] sm:$0xf]
    %v3670 = vld [vmem:[#allocation14 + $0x3c] sm:$0xf]
    %v3671 = vld [vmem:[%s10] sm:$0x1]
    %v3673 = vlaneseq
    %v3674 = vshrl.u32 %v3673, 7
    %v3675 = vsub.s32 0, %v3674
    %v3676 = vrot.slane %v3671, %v3675
    %v3694 = vunpack.c.l.b16 %v3655
    %v3695 = vunpack.c.l.b16 %v3656
    %v3696 = vunpack.c.l.b16 %v3657
    %v3697 = vunpack.c.l.b16 %v3658
    %v3698 = vunpack.c.l.b16 %v3659
    %v3699 = vunpack.c.l.b16 %v3660
    %v3700 = vunpack.c.l.b16 %v3661
    %v3701 = vunpack.c.l.b16 %v3662
    %v3702 = vunpack.c.l.b16 %v3663
    %v3703 = vunpack.c.l.b16 %v3664
    %v3704 = vunpack.c.l.b16 %v3665
    %v3705 = vunpack.c.l.b16 %v3666
    %v3706 = vunpack.c.l.b16 %v3667
    %v3707 = vunpack.c.l.b16 %v3668
    %v3708 = vunpack.c.l.b16 %v3669
    %v3709 = vunpack.c.l.b16 %v3670
    %v3710 = vpack.c.b16 %v3695, %v3694
    %v3711 = vpack.c.b16 %v3697, %v3696
    %v3712 = vpack.c.b16 %v3699, %v3698
    %v3713 = vpack.c.b16 %v3701, %v3700
    %v3714 = vpack.c.b16 %v3703, %v3702
    %v3715 = vpack.c.b16 %v3705, %v3704
    %v3716 = vpack.c.b16 %v3707, %v3706
    %v3717 = vpack.c.b16 %v3709, %v3708
    %3726 = vmatprep.subr.bf16.mxu0 0
    %3727 = vmatpush1.bf16.msra.mxu0 %v3710
    %3728 = vmatprep.subr.bf16.mxu0 0
    %3729 = vmatpush1.bf16.msra.mxu0 %v3711
    %3730 = vmatprep.subr.bf16.mxu0 0
    %3731 = vmatpush1.bf16.msra.mxu0 %v3712
    %3732 = vmatprep.subr.bf16.mxu0 0
    %3733 = vmatpush1.bf16.msra.mxu0 %v3713
    %3734 = vmatprep.subr.bf16.mxu0 0
    %3735 = vmatpush1.bf16.msra.mxu0 %v3714
    %3736 = vmatprep.subr.bf16.mxu0 0
    %3737 = vmatpush1.bf16.msra.mxu0 %v3715
    %3738 = vmatprep.subr.bf16.mxu0 0
    %3739 = vmatpush1.bf16.msra.mxu0 %v3716
    %3740 = vmatprep.subr.bf16.mxu0 0
    %3741 = vmatpush1.bf16.msra.mxu0 %v3717
    %3742 = vmatprep.subr.bf16.mxu0 0
    %3743 = vmatpush1.bf16.msra.mxu0 0
    %3744 = vmatprep.subr.bf16.mxu0 0
    %3745 = vmatpush1.bf16.msra.mxu0 0
    %3746 = vmatprep.subr.bf16.mxu0 0
    %3747 = vmatpush1.bf16.msra.mxu0 0
    %3748 = vmatprep.subr.bf16.mxu0 0
    %3749 = vmatpush1.bf16.msra.mxu0 0
    %3750 = vmatprep.subr.bf16.mxu0 0
    %3751 = vmatpush1.bf16.msra.mxu0 0
    %3752 = vmatprep.subr.bf16.mxu0 0
    %3753 = vmatpush1.bf16.msra.mxu0 0
    %3754 = vmatprep.subr.bf16.mxu0 0
    %3755 = vmatpush1.bf16.msra.mxu0 0
    %3756 = vmatprep.subr.bf16.mxu0 0
    %3757 = vmatpush1.bf16.msra.mxu0 0
    %3758 = vmatprep.mubr.bf16.mxu0 0
    %3759 = vmatmul.mubr.bf16.gmra.mrb[0].mxu0 %v3647
    %v3760 = vpop.f32.mrb[0].mxu0
    %v3761 = vadd.f32 %v3676, %v3760
    %v3762 = vpop.f32.mrb[0].mxu0
    %v3763 = vpop.f32.mrb[0].mxu0
    %v3764 = vadd.f32 %v3676, %v3763
    %v3765 = vpop.f32.mrb[0].mxu0
    %3766 = vmatprep.mubr.bf16.mxu0 0
    %3767 = vmatmul.mubr.bf16.gmra.mrb[0].mxu0 %v3648
    %v3768 = vpop.f32.mrb[0].mxu0
    %v3769 = vadd.f32 %v3676, %v3768
    %v3770 = vpop.f32.mrb[0].mxu0
    %v3771 = vpop.f32.mrb[0].mxu0
    %v3772 = vadd.f32 %v3676, %v3771
    %v3773 = vpop.f32.mrb[0].mxu0
    %3774 = vmatprep.mubr.bf16.mxu0 0
    %3775 = vmatmul.mubr.bf16.gmra.mrb[0].mxu0 %v3649
    %v3776 = vpop.f32.mrb[0].mxu0
    %v3777 = vadd.f32 %v3676, %v3776
    %v3778 = vpop.f32.mrb[0].mxu0
    %v3779 = vpop.f32.mrb[0].mxu0
    %v3780 = vadd.f32 %v3676, %v3779
    %v3781 = vpop.f32.mrb[0].mxu0
    %3782 = vmatprep.mubr.bf16.mxu0 0
    %3783 = vmatmul.mubr.bf16.gmra.mrb[0].mxu0 %v3650
    %v3784 = vpop.f32.mrb[0].mxu0
    %v3785 = vadd.f32 %v3676, %v3784
    %v3786 = vpop.f32.mrb[0].mxu0
    %v3787 = vpop.f32.mrb[0].mxu0
    %v3788 = vadd.f32 %v3676, %v3787
    %v3789 = vpop.f32.mrb[0].mxu0
    %3790 = vmatprep.mubr.bf16.mxu0 0
    %3791 = vmatmul.mubr.bf16.gmra.mrb[0].mxu0 %v3651
    %v3792 = vpop.f32.mrb[0].mxu0
    %v3793 = vadd.f32 %v3676, %v3792
    %v3794 = vpop.f32.mrb[0].mxu0
    %v3795 = vpop.f32.mrb[0].mxu0
    %v3796 = vadd.f32 %v3676, %v3795
    %v3797 = vpop.f32.mrb[0].mxu0
    %3798 = vmatprep.mubr.bf16.mxu0 0
    %3799 = vmatmul.mubr.bf16.gmra.mrb[0].mxu0 %v3652
    %v3800 = vpop.f32.mrb[0].mxu0
    %v3801 = vadd.f32 %v3676, %v3800
    %v3802 = vpop.f32.mrb[0].mxu0
    %v3803 = vpop.f32.mrb[0].mxu0
    %v3804 = vadd.f32 %v3676, %v3803
    %v3805 = vpop.f32.mrb[0].mxu0
    %3806 = vmatprep.mubr.bf16.mxu0 0
    %3807 = vmatmul.mubr.bf16.gmra.mrb[0].mxu0 %v3653
    %v3808 = vpop.f32.mrb[0].mxu0
    %v3809 = vadd.f32 %v3676, %v3808
    %v3810 = vpop.f32.mrb[0].mxu0
    %v3811 = vpop.f32.mrb[0].mxu0
    %v3812 = vadd.f32 %v3676, %v3811
    %v3813 = vpop.f32.mrb[0].mxu0
    %3814 = vmatprep.mubr.bf16.mxu0 0
    %3815 = vmatmul.mubr.bf16.gmra.mrb[0].mxu0 %v3654
    %v3816 = vpop.f32.mrb[0].mxu0
    %v3817 = vadd.f32 %v3676, %v3816
    %v3818 = vpop.f32.mrb[0].mxu0
    %v3819 = vpop.f32.mrb[0].mxu0
    %v3820 = vadd.f32 %v3676, %v3819
    %v3821 = vpop.f32.mrb[0].mxu0
    %3822 = vdwg.mxu0
    %3823 = vst [vmem:[#allocation16] sm:$0xff] %v3761
    %3824 = vst [vmem:[#allocation16 + $0x8] sm:$0xff] %v3764
    %3825 = vst [vmem:[#allocation16 + $0x10] sm:$0xff] %v3769
    %3826 = vst [vmem:[#allocation16 + $0x18] sm:$0xff] %v3772
    %3827 = vst [vmem:[#allocation16 + $0x20] sm:$0xff] %v3777
    %3828 = vst [vmem:[#allocation16 + $0x28] sm:$0xff] %v3780
    %3829 = vst [vmem:[#allocation16 + $0x30] sm:$0xff] %v3785
    %3830 = vst [vmem:[#allocation16 + $0x38] sm:$0xff] %v3788
    %3831 = vst [vmem:[#allocation16 + $0x40] sm:$0xff] %v3793
    %3832 = vst [vmem:[#allocation16 + $0x48] sm:$0xff] %v3796
    %3833 = vst [vmem:[#allocation16 + $0x50] sm:$0xff] %v3801
    %3834 = vst [vmem:[#allocation16 + $0x58] sm:$0xff] %v3804
    %3835 = vst [vmem:[#allocation16 + $0x60] sm:$0xff] %v3809
    %3836 = vst [vmem:[#allocation16 + $0x68] sm:$0xff] %v3812
    %3837 = vst [vmem:[#allocation16 + $0x70] sm:$0xff] %v3817
    %3838 = vst [vmem:[#allocation16 + $0x78] sm:$0xff] %v3820
    // Predicated region
    $region74: #{tpu_custom_call.1} parent=1 // pred_check
      _
    $region75: #{tpu_custom_call.1} parent=1 // pred_check_branch
      %3840 = sbr.rel (0) target = $region77
    $region76: #{tpu_custom_call.1} parent=1 // pred_region
      %s3842 = ssub.s32 2048, 2048
      %3843 = vsyncadd [#allocation7], %s3842
      %s3844 = sshll.u32 [#allocation16], 4
      %s3845 = int_to_ptr.vmem [resolvable:$true] %s3844
      %3850 = dma.vmem_to_hbm [thread:$0]  %s3845, 2048, %s11, [#allocation7], 128, 128, 8
    $region77: #{tpu_custom_call.1} parent=1 // pred_fallthru
      _
    // Predicated region
    $region78: #{tpu_custom_call.1} parent=1 // pred_check
      _
    $region79: #{tpu_custom_call.1} parent=1 // pred_check_branch
      %3852 = sbr.rel (0) target = $region81
    $region80: #{tpu_custom_call.1} parent=1 // pred_region
      %3853 = dma.done [#allocation7], 2048
    $region81: #{tpu_custom_call.1} parent=1 // pred_fallthru
      _
    %3854 = vsyncpa [#allocation6], 1
    %3855 = vsyncpa [#allocation9], 1
    %3856 = vsyncpa [#allocation12], 1
    %3857 = vsyncpa [#allocation15], 1
    %3858 = vsyncpa [#allocation7], 1

</llo_original>
